<compile_context>
chip_gen: v6e
topology: v6e:2x2x1
jax: 0.10.0
libtpu: 0.0.40
codegen_flags: <defaults>
</compile_context>

<pallas_src>
import functools

import jax
import jax.numpy as jnp
from jax.experimental import pallas as pl
from jax.experimental.pallas import tpu as pltpu


def bottleneck_kernel(xc_ref, xt_ref, xb_ref, w1_ref, b1_ref, w2_ref, b2_ref,
                      w3_ref, b3_ref, o_ref, hp_ref, *,
                      H, W, TH, C, P, dilation, pad):
    """One (batch, row-tile) per grid step.

    xc_ref: (1, TH,  W, C)   bf16  center rows of the input tile
    xt_ref: (1, pad, W, C)   bf16  top halo rows (clamped at the image border)
    xb_ref: (1, pad, W, C)   bf16  bottom halo rows (clamped at the border)
    w1_ref: (C, P)           bf16  1x1 conv1 weight, bn1 scale folded in
    b1_ref: (1, P)           f32   bn1 bias
    w2_ref: (9, P, P)        bf16  3x3 conv2 weight per tap, bn2 folded in
    b2_ref: (1, P)           f32   bn2 bias
    w3_ref: (P, C)           bf16  1x1 conv3 weight, bn3 scale folded in
    b3_ref: (1, C)           f32   bn3 bias
    o_ref:  (1, TH, W, C)    bf16  output tile
    hp_ref: (TH+2p, W+2p, P) bf16  zero-padded conv2 input slab (scratch)
    """
    t = pl.program_id(1)
    THp = TH + 2 * pad

    # ---- assemble the x row slab (top halo | center | bottom halo) ---------
    x_slab = jnp.concatenate([xt_ref[0], xc_ref[0], xb_ref[0]], axis=0)  # bf16

    # ---- conv1 (1x1, bn1 scale folded) + bias + relu, f32 accumulation -----
    h1 = jnp.dot(x_slab.reshape(THp * W, C), w1_ref[...],
                 preferred_element_type=jnp.float32)
    h1 = jnp.maximum(h1 + b1_ref[...], 0.0).reshape(THp, W, P)

    # Zero slab rows that fall outside the image so conv2 sees true zero
    # padding at the top/bottom borders (halo rows were clamped at fetch).
    row = jax.lax.broadcasted_iota(jnp.int32, (THp, W, 1), 0)
    g = t * TH - pad + row                              # global image row
    valid = jnp.logical_and(g >= 0, g < H)
    h1 = jnp.where(valid, h1, 0.0).astype(jnp.bfloat16)

    # ---- one aligned full-width store of the W-zero-padded slab (bf16) -----
    zcol = jnp.zeros((THp, pad, P), jnp.bfloat16)
    hp_ref[...] = jnp.concatenate([zcol, h1, zcol], axis=1)

    # ---- conv2 (3x3 dilated): nine accumulating matmuls, f32 accumulator ---
    acc = jnp.zeros((TH * W, P), jnp.float32)
    for ky in range(3):
        for kx in range(3):
            win = hp_ref[ky * dilation: ky * dilation + TH,
                         kx * dilation: kx * dilation + W, :]
            acc = acc + jnp.dot(win.reshape(TH * W, P), w2_ref[ky * 3 + kx],
                                preferred_element_type=jnp.float32)
    h2 = jnp.maximum(acc + b2_ref[...], 0.0).astype(jnp.bfloat16)

    # ---- conv3 (1x1, bn3 folded) + bias + residual + relu, bf16 store ------
    h3 = jnp.dot(h2, w3_ref[...], preferred_element_type=jnp.float32)
    h3 = h3 + b3_ref[...] + xc_ref[0].reshape(TH * W, C).astype(jnp.float32)
    o_ref[0] = jnp.maximum(h3, 0.0).reshape(TH, W, C).astype(o_ref.dtype)


def _round_up(v, m):
    return (v + m - 1) // m * m


def bottleneck_forward(x_nchw, params, *, stride=1, dilation=1, multi_grid=1,
                       eps=1e-5, row_tile=None):
    """Wrapper: NCHW -> NHWC, fold BN into conv weights/bias, lane-pad
    channels, cast to bf16, call the Pallas kernel with halo row-tiling.
    Returns bf16 NCHW (downstream Bottlenecks consume bf16 anyway)."""
    N, Cin, H, W = x_nchw.shape
    P = params['w1'].shape[0]            # torch conv1 weight: (planes, Cin, 1, 1)
    d = dilation * multi_grid
    pad = d
    Cout = 4 * P
    assert Cin == Cout and stride == 1, \
        "downsample=None requires identity residual (stride 1, Cin == 4*planes)"
    assert pad <= H, "dilation larger than the image height is unsupported"

    LANE = 128
    P_pad = _round_up(P, LANE)
    C_pad = _round_up(Cin, LANE)

    # ---- row-tile selection (halo row-tiling) -------------------------------
    if row_tile is None:
        row_tile = max(8, -(-512 // W))   # aim for >= ~512 matmul rows / tile
    TH = min(H, _round_up(max(row_tile, pad), pad))
    if H % TH != 0:
        TH = H                            # TODO(synk): ragged row tiles
    nT = H // TH
    R = max(TH // pad, 1)                 # row tile measured in pad-row blocks
    Hb = max(H // pad, 1)                 # pad-row blocks in the image

    # NCHW -> NHWC, zero-pad channels to a lane multiple, cast bf16.
    x = jnp.transpose(x_nchw, (0, 2, 3, 1)).astype(jnp.float32)
    x = jnp.pad(x, ((0, 0), (0, 0), (0, 0), (0, C_pad - Cin))).astype(jnp.bfloat16)

    def fold_bn(gamma, beta, mean, var):
        s = (gamma / jnp.sqrt(var + eps)).astype(jnp.float32)
        b = (beta - mean * s).astype(jnp.float32)
        return s, b

    s1, b1 = fold_bn(*params['bn1'])
    s2, b2 = fold_bn(*params['bn2'])
    s3, b3 = fold_bn(*params['bn3'])

    # conv1: (P, Cin, 1, 1) -> (Cin, P); fold bn1 scale into output channels.
    w1 = params['w1'][:, :, 0, 0].T.astype(jnp.float32) * s1[None, :]
    w1 = jnp.pad(w1, ((0, C_pad - Cin), (0, P_pad - P))).astype(jnp.bfloat16)
    b1p = jnp.pad(b1, (0, P_pad - P)).reshape(1, P_pad)

    # conv2: (P, P, 3, 3) -> (ky, kx, cin, cout); fold bn2; per-tap layout.
    w2 = jnp.transpose(params['w2'], (2, 3, 1, 0)).astype(jnp.float32)
    w2 = w2 * s2[None, None, None, :]
    w2 = jnp.pad(w2, ((0, 0), (0, 0), (0, P_pad - P), (0, P_pad - P)))
    w2 = w2.reshape(9, P_pad, P_pad).astype(jnp.bfloat16)
    b2p = jnp.pad(b2, (0, P_pad - P)).reshape(1, P_pad)

    # conv3: (4P, P, 1, 1) -> (P, 4P); fold bn3 scale into output channels.
    w3 = params['w3'][:, :, 0, 0].T.astype(jnp.float32) * s3[None, :]
    w3 = jnp.pad(w3, ((0, P_pad - P), (0, C_pad - Cout))).astype(jnp.bfloat16)
    b3p = jnp.pad(b3, (0, C_pad - Cout)).reshape(1, C_pad)

    kern = functools.partial(bottleneck_kernel, H=H, W=W, TH=TH, C=C_pad,
                             P=P_pad, dilation=d, pad=pad)

    # Index maps. Center rows tile the image; halo blocks are pad rows tall
    # and their row-block index is clamped at the borders (the kernel masks
    # out-of-image rows to zero, so the clamped content is never used).
    center_map = lambda n, t: (n, t, 0, 0)
    top_map = lambda n, t: (n, jnp.maximum(t * R - 1, 0), 0, 0)
    bot_map = lambda n, t: (n, jnp.minimum(t * R + R, Hb - 1), 0, 0)
    const2 = lambda n, t: (0, 0)
    const3 = lambda n, t: (0, 0, 0)

    # Generation-aware VMEM budget: ~75% of physical, capped at 100 MiB
    # (-> ~48 MiB on v7x, ~96 MiB on v5e/v6e).
    try:
        vmem_cap = pltpu.get_tpu_info().vmem_capacity_bytes
    except Exception:
        vmem_cap = 64 * 1024 * 1024
    vmem_limit = min(int(vmem_cap) * 3 // 4, 100 * 1024 * 1024)

    out = pl.pallas_call(
        kern,
        out_shape=jax.ShapeDtypeStruct((N, H, W, C_pad), jnp.bfloat16),
        grid_spec=pltpu.PrefetchScalarGridSpec(
            num_scalar_prefetch=0,
            grid=(N, nT),
            in_specs=[
                pl.BlockSpec((1, TH, W, C_pad), center_map),    # x center
                pl.BlockSpec((1, pad, W, C_pad), top_map),      # x top halo
                pl.BlockSpec((1, pad, W, C_pad), bot_map),      # x bottom halo
                pl.BlockSpec((C_pad, P_pad), const2),           # w1
                pl.BlockSpec((1, P_pad), const2),               # b1
                pl.BlockSpec((9, P_pad, P_pad), const3),        # w2
                pl.BlockSpec((1, P_pad), const2),               # b2
                pl.BlockSpec((P_pad, C_pad), const2),           # w3
                pl.BlockSpec((1, C_pad), const2),               # b3
            ],
            out_specs=pl.BlockSpec((1, TH, W, C_pad), center_map),
            scratch_shapes=[
                pltpu.VMEM((TH + 2 * pad, W + 2 * pad, P_pad), jnp.bfloat16),
            ],
        ),
        compiler_params=pltpu.CompilerParams(
            dimension_semantics=("parallel", "parallel"),
            vmem_limit_bytes=vmem_limit,
        ),
    )(x, x, x, w1, b1p, w2, b2p, w3, b3p)

    out = out[..., :Cout]                              # drop lane padding
    return jnp.transpose(out, (0, 3, 1, 2))            # back to NCHW (bf16)


def ref_bottleneck(x, params, *, stride=1, dilation=1, multi_grid=1, eps=1e-5):
    """Pure-JAX f32 reference (mirrors the PyTorch forward, eval-mode BN)."""
    dn = ('NCHW', 'OIHW', 'NCHW')
    d = dilation * multi_grid

    def bn(y, g, b, m, v):
        s = (g / jnp.sqrt(v + eps))[None, :, None, None]
        return (y - m[None, :, None, None]) * s + b[None, :, None, None]

    out = jax.lax.conv_general_dilated(x, params['w1'], (1, 1), 'VALID',
                                       dimension_numbers=dn)
    out = jax.nn.relu(bn(out, *params['bn1']))
    out = jax.lax.conv_general_dilated(out, params['w2'], (stride, stride),
                                       [(d, d), (d, d)], rhs_dilation=(d, d),
                                       dimension_numbers=dn)
    out = jax.nn.relu(bn(out, *params['bn2']))
    out = jax.lax.conv_general_dilated(out, params['w3'], (1, 1), 'VALID',
                                       dimension_numbers=dn)
    out = bn(out, *params['bn3'])
    return jax.nn.relu(out + x)


if __name__ == "__main__":
    # Small shapes: inplanes must equal planes*4 because downsample=None.
    N, H, W = 2, 16, 16
    planes = 4
    inplanes = planes * 4                 # 16

    key = jax.random.PRNGKey(0)
    ks = jax.random.split(key, 16)
    x = jax.random.normal(ks[0], (N, inplanes, H, W), jnp.float32)

    def bn_params(k0, k1, k2, k3, C):
        return (jax.random.uniform(k0, (C,), minval=0.5, maxval=1.5),
                jax.random.normal(k1, (C,)) * 0.1,
                jax.random.normal(k2, (C,)) * 0.1,
                jax.random.uniform(k3, (C,), minval=0.5, maxval=1.5))

    params = {
        'w1': jax.random.normal(ks[1], (planes, inplanes, 1, 1), jnp.float32) * 0.1,
        'w2': jax.random.normal(ks[2], (planes, planes, 3, 3), jnp.float32) * 0.1,
        'w3': jax.random.normal(ks[3], (planes * 4, planes, 1, 1), jnp.float32) * 0.1,
        'bn1': bn_params(ks[4], ks[5], ks[6], ks[7], planes),
        'bn2': bn_params(ks[8], ks[9], ks[10], ks[11], planes),
        'bn3': bn_params(ks[12], ks[13], ks[14], ks[15], planes * 4),
    }

    # row_tile=8 -> grid (N, 2): exercises the halo row-tiling path.
    out = bottleneck_forward(x, params, stride=1, dilation=1, multi_grid=1,
                             row_tile=8)
    out = jax.block_until_ready(out)

    ref = jax.block_until_ready(ref_bottleneck(x, params))
    assert out.shape == ref.shape == (N, planes * 4, H, W)
    # bf16 MXU inputs + bf16 output store -> loosened tolerance vs f32 ref.
    out_f32 = out.astype(jnp.float32)
    err = jnp.max(jnp.abs(out_f32 - ref))
    assert jnp.allclose(out_f32, ref, rtol=3e-2, atol=1e-1), \
        f"max abs err {err}"

    print("KERNEL_OK")
</pallas_src>

<mosaic_0001>
module attributes {stable_mosaic.version = 11 : i64} {
  func.func @bottleneck_kernel(%arg0: i32, %arg1: i32, %arg2: memref<1x8x16x128xbf16, #tpu.memory_space<vmem>>, %arg3: memref<1x1x16x128xbf16, #tpu.memory_space<vmem>>, %arg4: memref<1x1x16x128xbf16, #tpu.memory_space<vmem>>, %arg5: memref<128x128xbf16, #tpu.memory_space<vmem>>, %arg6: memref<1x128xf32, #tpu.memory_space<vmem>>, %arg7: memref<9x128x128xbf16, #tpu.memory_space<vmem>>, %arg8: memref<1x128xf32, #tpu.memory_space<vmem>>, %arg9: memref<128x128xbf16, #tpu.memory_space<vmem>>, %arg10: memref<1x128xf32, #tpu.memory_space<vmem>>, %arg11: memref<1x8x16x128xbf16, #tpu.memory_space<vmem>>, %arg12: memref<10x18x128xbf16, #tpu.memory_space<vmem>>) attributes {dimension_semantics = [#tpu.dimension_semantics<parallel>, #tpu.dimension_semantics<parallel>], iteration_bounds = array<i64: 2, 2>, scalar_prefetch = 0 : i64, scratch_operands = 1 : i64, tpu.core_type = #tpu.core_type<tc>, window_params = [{transform_indices = @transform_0, window_bounds = array<i64: 1, 8, 16, 128>}, {transform_indices = @transform_1, window_bounds = array<i64: 1, 1, 16, 128>}, {transform_indices = @transform_2, window_bounds = array<i64: 1, 1, 16, 128>}, {pipeline_mode = #tpu.pipeline_mode<synchronous>, transform_indices = @transform_3, window_bounds = array<i64: 128, 128>}, {pipeline_mode = #tpu.pipeline_mode<synchronous>, transform_indices = @transform_4, window_bounds = array<i64: 1, 128>}, {pipeline_mode = #tpu.pipeline_mode<synchronous>, transform_indices = @transform_5, window_bounds = array<i64: 9, 128, 128>}, {pipeline_mode = #tpu.pipeline_mode<synchronous>, transform_indices = @transform_6, window_bounds = array<i64: 1, 128>}, {pipeline_mode = #tpu.pipeline_mode<synchronous>, transform_indices = @transform_7, window_bounds = array<i64: 128, 128>}, {pipeline_mode = #tpu.pipeline_mode<synchronous>, transform_indices = @transform_8, window_bounds = array<i64: 1, 128>}, {transform_indices = @transform_9, window_bounds = array<i64: 1, 8, 16, 128>}]} {
    %c0 = arith.constant 0 : index
    %c0_0 = arith.constant 0 : index
    %c0_1 = arith.constant 0 : index
    %c0_2 = arith.constant 0 : index
    %0 = vector.load %arg3[%c0, %c0_0, %c0_1, %c0_2] : memref<1x1x16x128xbf16, #tpu.memory_space<vmem>>, vector<1x1x16x128xbf16>
    %1 = vector.shape_cast %0 : vector<1x1x16x128xbf16> to vector<1x16x128xbf16>
    %c0_3 = arith.constant 0 : index
    %c0_4 = arith.constant 0 : index
    %c0_5 = arith.constant 0 : index
    %c0_6 = arith.constant 0 : index
    %2 = vector.load %arg2[%c0_3, %c0_4, %c0_5, %c0_6] : memref<1x8x16x128xbf16, #tpu.memory_space<vmem>>, vector<1x8x16x128xbf16>
    %3 = vector.shape_cast %2 : vector<1x8x16x128xbf16> to vector<8x16x128xbf16>
    %c0_7 = arith.constant 0 : index
    %c0_8 = arith.constant 0 : index
    %c0_9 = arith.constant 0 : index
    %c0_10 = arith.constant 0 : index
    %4 = vector.load %arg4[%c0_7, %c0_8, %c0_9, %c0_10] : memref<1x1x16x128xbf16, #tpu.memory_space<vmem>>, vector<1x1x16x128xbf16>
    %5 = vector.shape_cast %4 : vector<1x1x16x128xbf16> to vector<1x16x128xbf16>
    %6 = tpu.concatenate %1, %3, %5 in 0 : vector<1x16x128xbf16>, vector<8x16x128xbf16>, vector<1x16x128xbf16> -> vector<10x16x128xbf16>
    %7 = vector.shape_cast %6 : vector<10x16x128xbf16> to vector<160x128xbf16>
    %c0_11 = arith.constant 0 : index
    %c0_12 = arith.constant 0 : index
    %8 = vector.load %arg5[%c0_11, %c0_12] : memref<128x128xbf16, #tpu.memory_space<vmem>>, vector<128x128xbf16>
    %cst = arith.constant dense<0.000000e+00> : vector<160x128xf32>
    %9 = tpu.matmul %7, %8, %cst {dimension_numbers = #tpu.dot_dimension_numbers<[1], [0], [0], [1], [0, 0, 1, 1], [], []>} : vector<160x128xbf16>, vector<128x128xbf16>, vector<160x128xf32> -> vector<160x128xf32>
    %c0_13 = arith.constant 0 : index
    %c0_14 = arith.constant 0 : index
    %10 = vector.load %arg6[%c0_13, %c0_14] : memref<1x128xf32, #tpu.memory_space<vmem>>, vector<1x128xf32>
    %11 = vector.broadcast %10 : vector<1x128xf32> to vector<160x128xf32>
    %12 = arith.addf %9, %11 : vector<160x128xf32>
    %cst_15 = arith.constant 0.000000e+00 : f32
    %13 = vector.broadcast %cst_15 : f32 to vector<160x128xf32>
    %14 = arith.maximumf %12, %13 : vector<160x128xf32>
    %15 = vector.shape_cast %14 : vector<160x128xf32> to vector<10x16x128xf32>
    %16 = tpu.iota {dimensions = array<i32: 0>} : vector<10x16x1xi32>
    %c8_i32 = arith.constant 8 : i32
    %17 = arith.muli %arg1, %c8_i32 : i32
    %c1_i32 = arith.constant 1 : i32
    %18 = arith.subi %17, %c1_i32 : i32
    %19 = vector.broadcast %18 : i32 to vector<10x16x1xi32>
    %20 = arith.addi %19, %16 : vector<10x16x1xi32>
    %c0_i32 = arith.constant 0 : i32
    %21 = vector.broadcast %c0_i32 : i32 to vector<10x16x1xi32>
    %22 = arith.cmpi sge, %20, %21 : vector<10x16x1xi32>
    %c16_i32 = arith.constant 16 : i32
    %23 = vector.broadcast %c16_i32 : i32 to vector<10x16x1xi32>
    %24 = arith.cmpi slt, %20, %23 : vector<10x16x1xi32>
    %25 = arith.andi %22, %24 : vector<10x16x1xi1>
    %cst_16 = arith.constant 0.000000e+00 : f32
    %26 = vector.shape_cast %25 : vector<10x16x1xi1> to vector<10x16x1xi1>
    %27 = vector.broadcast %26 : vector<10x16x1xi1> to vector<10x16x128xi1>
    %28 = vector.broadcast %cst_16 : f32 to vector<10x16x128xf32>
    %29 = arith.select %27, %15, %28 : vector<10x16x128xi1>, vector<10x16x128xf32>
    %30 = arith.truncf %29 : vector<10x16x128xf32> to vector<10x16x128xbf16>
    %cst_17 = arith.constant 0.000000e+00 : bf16
    %31 = vector.broadcast %cst_17 : bf16 to vector<10x1x128xbf16>
    %32 = tpu.concatenate %31, %30, %31 in 1 : vector<10x1x128xbf16>, vector<10x16x128xbf16>, vector<10x1x128xbf16> -> vector<10x18x128xbf16>
    %c0_18 = arith.constant 0 : index
    %c0_19 = arith.constant 0 : index
    %c0_20 = arith.constant 0 : index
    %33 = vector.load %arg12[%c0_18, %c0_19, %c0_20] : memref<10x18x128xbf16, #tpu.memory_space<vmem>>, vector<10x18x128xbf16>
    tpu.vector_store %arg12[%c0_18, %c0_19, %c0_20], %32 {strides = array<i32>} : memref<10x18x128xbf16, #tpu.memory_space<vmem>>, vector<10x18x128xbf16>,
    %cst_21 = arith.constant 0.000000e+00 : f32
    %34 = vector.broadcast %cst_21 : f32 to vector<128x128xf32>
    %c0_22 = arith.constant 0 : index
    %c0_23 = arith.constant 0 : index
    %c0_24 = arith.constant 0 : index
    %35 = vector.load %arg12[%c0_22, %c0_23, %c0_24] : memref<10x18x128xbf16, #tpu.memory_space<vmem>>, vector<8x16x128xbf16>
    %36 = vector.shape_cast %35 : vector<8x16x128xbf16> to vector<128x128xbf16>
    %c0_25 = arith.constant 0 : index
    %c0_26 = arith.constant 0 : index
    %c0_27 = arith.constant 0 : index
    %37 = vector.load %arg7[%c0_25, %c0_26, %c0_27] : memref<9x128x128xbf16, #tpu.memory_space<vmem>>, vector<1x128x128xbf16>
    %38 = vector.shape_cast %37 : vector<1x128x128xbf16> to vector<128x128xbf16>
    %cst_28 = arith.constant dense<0.000000e+00> : vector<128x128xf32>
    %39 = tpu.matmul %36, %38, %cst_28 {dimension_numbers = #tpu.dot_dimension_numbers<[1], [0], [0], [1], [0, 0, 1, 1], [], []>} : vector<128x128xbf16>, vector<128x128xbf16>, vector<128x128xf32> -> vector<128x128xf32>
    %40 = arith.addf %34, %39 : vector<128x128xf32>
    %c0_29 = arith.constant 0 : index
    %c1 = arith.constant 1 : index
    %c0_30 = arith.constant 0 : index
    %41 = vector.load %arg12[%c0_29, %c1, %c0_30] : memref<10x18x128xbf16, #tpu.memory_space<vmem>>, vector<8x16x128xbf16>
    %42 = vector.shape_cast %41 : vector<8x16x128xbf16> to vector<128x128xbf16>
    %c1_31 = arith.constant 1 : index
    %c0_32 = arith.constant 0 : index
    %c0_33 = arith.constant 0 : index
    %43 = vector.load %arg7[%c1_31, %c0_32, %c0_33] : memref<9x128x128xbf16, #tpu.memory_space<vmem>>, vector<1x128x128xbf16>
    %44 = vector.shape_cast %43 : vector<1x128x128xbf16> to vector<128x128xbf16>
    %cst_34 = arith.constant dense<0.000000e+00> : vector<128x128xf32>
    %45 = tpu.matmul %42, %44, %cst_34 {dimension_numbers = #tpu.dot_dimension_numbers<[1], [0], [0], [1], [0, 0, 1, 1], [], []>} : vector<128x128xbf16>, vector<128x128xbf16>, vector<128x128xf32> -> vector<128x128xf32>
    %46 = arith.addf %40, %45 : vector<128x128xf32>
    %c0_35 = arith.constant 0 : index
    %c2 = arith.constant 2 : index
    %c0_36 = arith.constant 0 : index
    %47 = vector.load %arg12[%c0_35, %c2, %c0_36] : memref<10x18x128xbf16, #tpu.memory_space<vmem>>, vector<8x16x128xbf16>
    %48 = vector.shape_cast %47 : vector<8x16x128xbf16> to vector<128x128xbf16>
    %c2_37 = arith.constant 2 : index
    %c0_38 = arith.constant 0 : index
    %c0_39 = arith.constant 0 : index
    %49 = vector.load %arg7[%c2_37, %c0_38, %c0_39] : memref<9x128x128xbf16, #tpu.memory_space<vmem>>, vector<1x128x128xbf16>
    %50 = vector.shape_cast %49 : vector<1x128x128xbf16> to vector<128x128xbf16>
    %cst_40 = arith.constant dense<0.000000e+00> : vector<128x128xf32>
    %51 = tpu.matmul %48, %50, %cst_40 {dimension_numbers = #tpu.dot_dimension_numbers<[1], [0], [0], [1], [0, 0, 1, 1], [], []>} : vector<128x128xbf16>, vector<128x128xbf16>, vector<128x128xf32> -> vector<128x128xf32>
    %52 = arith.addf %46, %51 : vector<128x128xf32>
    %c1_41 = arith.constant 1 : index
    %c0_42 = arith.constant 0 : index
    %c0_43 = arith.constant 0 : index
    %53 = vector.load %arg12[%c1_41, %c0_42, %c0_43] : memref<10x18x128xbf16, #tpu.memory_space<vmem>>, vector<8x16x128xbf16>
    %54 = vector.shape_cast %53 : vector<8x16x128xbf16> to vector<128x128xbf16>
    %c3 = arith.constant 3 : index
    %c0_44 = arith.constant 0 : index
    %c0_45 = arith.constant 0 : index
    %55 = vector.load %arg7[%c3, %c0_44, %c0_45] : memref<9x128x128xbf16, #tpu.memory_space<vmem>>, vector<1x128x128xbf16>
    %56 = vector.shape_cast %55 : vector<1x128x128xbf16> to vector<128x128xbf16>
    %cst_46 = arith.constant dense<0.000000e+00> : vector<128x128xf32>
    %57 = tpu.matmul %54, %56, %cst_46 {dimension_numbers = #tpu.dot_dimension_numbers<[1], [0], [0], [1], [0, 0, 1, 1], [], []>} : vector<128x128xbf16>, vector<128x128xbf16>, vector<128x128xf32> -> vector<128x128xf32>
    %58 = arith.addf %52, %57 : vector<128x128xf32>
    %c1_47 = arith.constant 1 : index
    %c1_48 = arith.constant 1 : index
    %c0_49 = arith.constant 0 : index
    %59 = vector.load %arg12[%c1_47, %c1_48, %c0_49] : memref<10x18x128xbf16, #tpu.memory_space<vmem>>, vector<8x16x128xbf16>
    %60 = vector.shape_cast %59 : vector<8x16x128xbf16> to vector<128x128xbf16>
    %c4 = arith.constant 4 : index
    %c0_50 = arith.constant 0 : index
    %c0_51 = arith.constant 0 : index
    %61 = vector.load %arg7[%c4, %c0_50, %c0_51] : memref<9x128x128xbf16, #tpu.memory_space<vmem>>, vector<1x128x128xbf16>
    %62 = vector.shape_cast %61 : vector<1x128x128xbf16> to vector<128x128xbf16>
    %cst_52 = arith.constant dense<0.000000e+00> : vector<128x128xf32>
    %63 = tpu.matmul %60, %62, %cst_52 {dimension_numbers = #tpu.dot_dimension_numbers<[1], [0], [0], [1], [0, 0, 1, 1], [], []>} : vector<128x128xbf16>, vector<128x128xbf16>, vector<128x128xf32> -> vector<128x128xf32>
    %64 = arith.addf %58, %63 : vector<128x128xf32>
    %c1_53 = arith.constant 1 : index
    %c2_54 = arith.constant 2 : index
    %c0_55 = arith.constant 0 : index
    %65 = vector.load %arg12[%c1_53, %c2_54, %c0_55] : memref<10x18x128xbf16, #tpu.memory_space<vmem>>, vector<8x16x128xbf16>
    %66 = vector.shape_cast %65 : vector<8x16x128xbf16> to vector<128x128xbf16>
    %c5 = arith.constant 5 : index
    %c0_56 = arith.constant 0 : index
    %c0_57 = arith.constant 0 : index
    %67 = vector.load %arg7[%c5, %c0_56, %c0_57] : memref<9x128x128xbf16, #tpu.memory_space<vmem>>, vector<1x128x128xbf16>
    %68 = vector.shape_cast %67 : vector<1x128x128xbf16> to vector<128x128xbf16>
    %cst_58 = arith.constant dense<0.000000e+00> : vector<128x128xf32>
    %69 = tpu.matmul %66, %68, %cst_58 {dimension_numbers = #tpu.dot_dimension_numbers<[1], [0], [0], [1], [0, 0, 1, 1], [], []>} : vector<128x128xbf16>, vector<128x128xbf16>, vector<128x128xf32> -> vector<128x128xf32>
    %70 = arith.addf %64, %69 : vector<128x128xf32>
    %c2_59 = arith.constant 2 : index
    %c0_60 = arith.constant 0 : index
    %c0_61 = arith.constant 0 : index
    %71 = vector.load %arg12[%c2_59, %c0_60, %c0_61] : memref<10x18x128xbf16, #tpu.memory_space<vmem>>, vector<8x16x128xbf16>
    %72 = vector.shape_cast %71 : vector<8x16x128xbf16> to vector<128x128xbf16>
    %c6 = arith.constant 6 : index
    %c0_62 = arith.constant 0 : index
    %c0_63 = arith.constant 0 : index
    %73 = vector.load %arg7[%c6, %c0_62, %c0_63] : memref<9x128x128xbf16, #tpu.memory_space<vmem>>, vector<1x128x128xbf16>
    %74 = vector.shape_cast %73 : vector<1x128x128xbf16> to vector<128x128xbf16>
    %cst_64 = arith.constant dense<0.000000e+00> : vector<128x128xf32>
    %75 = tpu.matmul %72, %74, %cst_64 {dimension_numbers = #tpu.dot_dimension_numbers<[1], [0], [0], [1], [0, 0, 1, 1], [], []>} : vector<128x128xbf16>, vector<128x128xbf16>, vector<128x128xf32> -> vector<128x128xf32>
    %76 = arith.addf %70, %75 : vector<128x128xf32>
    %c2_65 = arith.constant 2 : index
    %c1_66 = arith.constant 1 : index
    %c0_67 = arith.constant 0 : index
    %77 = vector.load %arg12[%c2_65, %c1_66, %c0_67] : memref<10x18x128xbf16, #tpu.memory_space<vmem>>, vector<8x16x128xbf16>
    %78 = vector.shape_cast %77 : vector<8x16x128xbf16> to vector<128x128xbf16>
    %c7 = arith.constant 7 : index
    %c0_68 = arith.constant 0 : index
    %c0_69 = arith.constant 0 : index
    %79 = vector.load %arg7[%c7, %c0_68, %c0_69] : memref<9x128x128xbf16, #tpu.memory_space<vmem>>, vector<1x128x128xbf16>
    %80 = vector.shape_cast %79 : vector<1x128x128xbf16> to vector<128x128xbf16>
    %cst_70 = arith.constant dense<0.000000e+00> : vector<128x128xf32>
    %81 = tpu.matmul %78, %80, %cst_70 {dimension_numbers = #tpu.dot_dimension_numbers<[1], [0], [0], [1], [0, 0, 1, 1], [], []>} : vector<128x128xbf16>, vector<128x128xbf16>, vector<128x128xf32> -> vector<128x128xf32>
    %82 = arith.addf %76, %81 : vector<128x128xf32>
    %c2_71 = arith.constant 2 : index
    %c2_72 = arith.constant 2 : index
    %c0_73 = arith.constant 0 : index
    %83 = vector.load %arg12[%c2_71, %c2_72, %c0_73] : memref<10x18x128xbf16, #tpu.memory_space<vmem>>, vector<8x16x128xbf16>
    %84 = vector.shape_cast %83 : vector<8x16x128xbf16> to vector<128x128xbf16>
    %c8 = arith.constant 8 : index
    %c0_74 = arith.constant 0 : index
    %c0_75 = arith.constant 0 : index
    %85 = vector.load %arg7[%c8, %c0_74, %c0_75] : memref<9x128x128xbf16, #tpu.memory_space<vmem>>, vector<1x128x128xbf16>
    %86 = vector.shape_cast %85 : vector<1x128x128xbf16> to vector<128x128xbf16>
    %cst_76 = arith.constant dense<0.000000e+00> : vector<128x128xf32>
    %87 = tpu.matmul %84, %86, %cst_76 {dimension_numbers = #tpu.dot_dimension_numbers<[1], [0], [0], [1], [0, 0, 1, 1], [], []>} : vector<128x128xbf16>, vector<128x128xbf16>, vector<128x128xf32> -> vector<128x128xf32>
    %88 = arith.addf %82, %87 : vector<128x128xf32>
    %c0_77 = arith.constant 0 : index
    %c0_78 = arith.constant 0 : index
    %89 = vector.load %arg8[%c0_77, %c0_78] : memref<1x128xf32, #tpu.memory_space<vmem>>, vector<1x128xf32>
    %90 = vector.broadcast %89 : vector<1x128xf32> to vector<128x128xf32>
    %91 = arith.addf %88, %90 : vector<128x128xf32>
    %cst_79 = arith.constant 0.000000e+00 : f32
    %92 = vector.broadcast %cst_79 : f32 to vector<128x128xf32>
    %93 = arith.maximumf %91, %92 : vector<128x128xf32>
    %94 = arith.truncf %93 : vector<128x128xf32> to vector<128x128xbf16>
    %c0_80 = arith.constant 0 : index
    %c0_81 = arith.constant 0 : index
    %95 = vector.load %arg9[%c0_80, %c0_81] : memref<128x128xbf16, #tpu.memory_space<vmem>>, vector<128x128xbf16>
    %cst_82 = arith.constant dense<0.000000e+00> : vector<128x128xf32>
    %96 = tpu.matmul %94, %95, %cst_82 {dimension_numbers = #tpu.dot_dimension_numbers<[1], [0], [0], [1], [0, 0, 1, 1], [], []>} : vector<128x128xbf16>, vector<128x128xbf16>, vector<128x128xf32> -> vector<128x128xf32>
    %c0_83 = arith.constant 0 : index
    %c0_84 = arith.constant 0 : index
    %97 = vector.load %arg10[%c0_83, %c0_84] : memref<1x128xf32, #tpu.memory_space<vmem>>, vector<1x128xf32>
    %98 = vector.broadcast %97 : vector<1x128xf32> to vector<128x128xf32>
    %99 = arith.addf %96, %98 : vector<128x128xf32>
    %c0_85 = arith.constant 0 : index
    %c0_86 = arith.constant 0 : index
    %c0_87 = arith.constant 0 : index
    %c0_88 = arith.constant 0 : index
    %100 = vector.load %arg2[%c0_85, %c0_86, %c0_87, %c0_88] : memref<1x8x16x128xbf16, #tpu.memory_space<vmem>>, vector<1x8x16x128xbf16>
    %101 = vector.shape_cast %100 : vector<1x8x16x128xbf16> to vector<8x16x128xbf16>
    %102 = vector.shape_cast %101 : vector<8x16x128xbf16> to vector<128x128xbf16>
    %103 = arith.extf %102 : vector<128x128xbf16> to vector<128x128xf32>
    %104 = arith.addf %99, %103 : vector<128x128xf32>
    %cst_89 = arith.constant 0.000000e+00 : f32
    %105 = vector.broadcast %cst_89 : f32 to vector<128x128xf32>
    %106 = arith.maximumf %104, %105 : vector<128x128xf32>
    %107 = vector.shape_cast %106 : vector<128x128xf32> to vector<8x16x128xf32>
    %108 = arith.truncf %107 : vector<8x16x128xf32> to vector<8x16x128xbf16>
    %c0_90 = arith.constant 0 : index
    %c0_91 = arith.constant 0 : index
    %c0_92 = arith.constant 0 : index
    %c0_93 = arith.constant 0 : index
    %109 = vector.load %arg11[%c0_90, %c0_91, %c0_92, %c0_93] : memref<1x8x16x128xbf16, #tpu.memory_space<vmem>>, vector<1x8x16x128xbf16>
    %110 = vector.shape_cast %109 : vector<1x8x16x128xbf16> to vector<8x16x128xbf16>
    %111 = vector.shape_cast %108 : vector<8x16x128xbf16> to vector<1x8x16x128xbf16>
    tpu.vector_store %arg11[%c0_90, %c0_91, %c0_92, %c0_93], %111 {strides = array<i32>} : memref<1x8x16x128xbf16, #tpu.memory_space<vmem>>, vector<1x8x16x128xbf16>,
    return
  }
  func.func @transform_0(%arg0: i32, %arg1: i32) -> (i32, i32, i32, i32) {
    %c0_i32 = arith.constant 0 : i32
    %c0_i32_0 = arith.constant 0 : i32
    %c0_i32_1 = arith.constant 0 : i32
    return %arg0, %arg1, %c0_i32, %c0_i32_0 : i32, i32, i32, i32
  }
  func.func @transform_1(%arg0: i32, %arg1: i32) -> (i32, i32, i32, i32) {
    %c8_i32 = arith.constant 8 : i32
    %0 = arith.muli %arg1, %c8_i32 : i32
    %c1_i32 = arith.constant 1 : i32
    %1 = arith.subi %0, %c1_i32 : i32
    %c0_i32 = arith.constant 0 : i32
    %2 = arith.maxsi %1, %c0_i32 : i32
    %c0_i32_0 = arith.constant 0 : i32
    %c0_i32_1 = arith.constant 0 : i32
    %c0_i32_2 = arith.constant 0 : i32
    return %arg0, %2, %c0_i32_0, %c0_i32_1 : i32, i32, i32, i32
  }
  func.func @transform_2(%arg0: i32, %arg1: i32) -> (i32, i32, i32, i32) {
    %c8_i32 = arith.constant 8 : i32
    %0 = arith.muli %arg1, %c8_i32 : i32
    %c8_i32_0 = arith.constant 8 : i32
    %1 = arith.addi %0, %c8_i32_0 : i32
    %c15_i32 = arith.constant 15 : i32
    %2 = arith.minsi %1, %c15_i32 : i32
    %c0_i32 = arith.constant 0 : i32
    %c0_i32_1 = arith.constant 0 : i32
    %c0_i32_2 = arith.constant 0 : i32
    return %arg0, %2, %c0_i32, %c0_i32_1 : i32, i32, i32, i32
  }
  func.func @transform_3(%arg0: i32, %arg1: i32) -> (i32, i32) {
    %c0_i32 = arith.constant 0 : i32
    %c0_i32_0 = arith.constant 0 : i32
    %c0_i32_1 = arith.constant 0 : i32
    return %c0_i32, %c0_i32_0 : i32, i32
  }
  func.func @transform_4(%arg0: i32, %arg1: i32) -> (i32, i32) {
    %c0_i32 = arith.constant 0 : i32
    %c0_i32_0 = arith.constant 0 : i32
    %c0_i32_1 = arith.constant 0 : i32
    return %c0_i32, %c0_i32_0 : i32, i32
  }
  func.func @transform_5(%arg0: i32, %arg1: i32) -> (i32, i32, i32) {
    %c0_i32 = arith.constant 0 : i32
    %c0_i32_0 = arith.constant 0 : i32
    %c0_i32_1 = arith.constant 0 : i32
    %c0_i32_2 = arith.constant 0 : i32
    return %c0_i32, %c0_i32_0, %c0_i32_1 : i32, i32, i32
  }
  func.func @transform_6(%arg0: i32, %arg1: i32) -> (i32, i32) {
    %c0_i32 = arith.constant 0 : i32
    %c0_i32_0 = arith.constant 0 : i32
    %c0_i32_1 = arith.constant 0 : i32
    return %c0_i32, %c0_i32_0 : i32, i32
  }
  func.func @transform_7(%arg0: i32, %arg1: i32) -> (i32, i32) {
    %c0_i32 = arith.constant 0 : i32
    %c0_i32_0 = arith.constant 0 : i32
    %c0_i32_1 = arith.constant 0 : i32
    return %c0_i32, %c0_i32_0 : i32, i32
  }
  func.func @transform_8(%arg0: i32, %arg1: i32) -> (i32, i32) {
    %c0_i32 = arith.constant 0 : i32
    %c0_i32_0 = arith.constant 0 : i32
    %c0_i32_1 = arith.constant 0 : i32
    return %c0_i32, %c0_i32_0 : i32, i32
  }
  func.func @transform_9(%arg0: i32, %arg1: i32) -> (i32, i32, i32, i32) {
    %c0_i32 = arith.constant 0 : i32
    %c0_i32_0 = arith.constant 0 : i32
    %c0_i32_1 = arith.constant 0 : i32
    return %arg0, %arg1, %c0_i32, %c0_i32_0 : i32, i32, i32, i32
  }
}

</mosaic_0001>

<llo_original>
// kernel: tpu_custom_call.1
$region0: #{tpu_custom_call.1}
  #allocation0 [shape = 'u32[]', space=smem, size = 0x4, offset = 0x4, fixed_abs, tag = 'smem constant byte address 0x4 - core index']
  #allocation1 [shape = 'u32[144,128]{1,0:T(1,128)}', space=vmem, size = 0x12000, scoped, tag = 'internal scratch']
  #allocation2 [shape = 'bf16[10,18,128]{2,1,0:T(8,128)(2,1)}', space=vmem, size = 0xf000, scoped, tag = 'scratch operand']
  %s0 = inlined_call_operand.hbm [shape: bf16[2,16,16,128], index: 0, kind: input, shape index: {}]
  %s1 = inlined_call_operand.hbm [shape: bf16[2,16,16,128], index: 1, kind: input, shape index: {}]
  %s2 = inlined_call_operand.hbm [shape: bf16[2,16,16,128], index: 2, kind: input, shape index: {}]
  %s3 = inlined_call_operand.hbm [shape: bf16[128,128], index: 3, kind: input, shape index: {}]
  %s4 = inlined_call_operand.vmem [shape: f32[1,128], index: 4, kind: input, shape index: {}]
  %s5 = inlined_call_operand.hbm [shape: bf16[9,128,128], index: 5, kind: input, shape index: {}]
  %s6 = inlined_call_operand.vmem [shape: f32[1,128], index: 6, kind: input, shape index: {}]
  %s7 = inlined_call_operand.hbm [shape: bf16[128,128], index: 7, kind: input, shape index: {}]
  %s8 = inlined_call_operand.vmem [shape: f32[1,128], index: 8, kind: input, shape index: {}]
  %s9 = inlined_call_operand.hbm [shape: bf16[2,16,16,128], index: 9, kind: output, shape index: {}]
  %s10 = sld [smem:[#allocation0]]
  $region93: #{tpu_custom_call.1} parent=0
    _
  %s12 = ssub.s32 1, %s10
  %s13 = scalar_select 0, %s12, %s10
  $region1: #{tpu_custom_call.1} parent=0
    #allocation3 [shape = 'u8[65536]{0}', space=vmem, size = 0x10000, scoped, tag = 'input window, operand 0']
    #allocation4 [shape = 's32[2]{0}', space=sflag, size = 0x8, scoped, tag = 'scoped memory for tpu_custom_call.1']
    #allocation5 [shape = 's32[2]{0}', space=sflag, size = 0x8, scoped, tag = 'scoped memory for tpu_custom_call.1']
    #allocation6 [shape = 'u8[8192]{0}', space=vmem, size = 0x2000, scoped, tag = 'input window, operand 1']
    #allocation7 [shape = 's32[2]{0}', space=sflag, size = 0x8, scoped, tag = 'scoped memory for tpu_custom_call.1']
    #allocation8 [shape = 'u8[8192]{0}', space=vmem, size = 0x2000, scoped, tag = 'input window, operand 2']
    #allocation9 [shape = 'u8[32768]{0}', space=vmem, size = 0x8000, scoped, tag = 'input window, operand 3, single buffered']
    #allocation10 [shape = 's32[1]{0}', space=sflag, size = 0x4, scoped, tag = 'scoped memory for tpu_custom_call.1']
    #allocation11 [shape = 'u8[294912]{0}', space=vmem, size = 0x48000, scoped, tag = 'input window, operand 5, single buffered']
    #allocation12 [shape = 'u8[32768]{0}', space=vmem, size = 0x8000, scoped, tag = 'input window, operand 7, single buffered']
    #allocation13 [shape = 's32[1]{0}', space=sflag, size = 0x4, scoped, tag = 'scoped memory for tpu_custom_call.1']
    #allocation14 [shape = 'u8[65536]{0}', space=vmem, size = 0x10000, scoped, tag = 'output window, operand 0']
    %14 = vsyncpa [#allocation4], 0
    %s15 = scalar_lea.sflag [#allocation4], 1
    %16 = vsyncpa %s15, 0
    %17 = vsyncpa [#allocation7], 0
    %s18 = scalar_lea.sflag [#allocation7], 1
    %19 = vsyncpa %s18, 0
    %20 = vsyncpa [#allocation10], 0
    %21 = vsyncpa [#allocation13], 0
    %22 = vsyncpa [#allocation5], 0
    %s23 = scalar_lea.sflag [#allocation5], 1
    %24 = vsyncpa %s23, 0
    loop: start=0, step=1, limit=6
    $region2: #{tpu_custom_call.1} parent=1 // loop_pre_header
      _
    $region3: #{tpu_custom_call.1} parent=1 // loop_header
      %s26 = sphi 0, %s30
      %p27 = scmp.ge.s32.totalorder %s26, 6
      %s33 = sphi 0, %s45
      %s34 = sphi 0, %s41
      %s35 = sphi 0, %s33
      %s36 = sphi 0, %s34
      %s37 = sphi 0, %s35
      %s38 = sphi 0, %s36
      %s50 = sphi 0, %s52
      %s53 = sphi 0, %s50
      %s54 = sphi 0, %s53
      %s70 = sphi 0, %s54
      %s86 = sphi 0, %s88
      %s89 = sphi 0, %s86
      %s90 = sphi 0, %s89
      %s106 = sphi 0, %s90
      %s122 = sphi 0, %s124
      %s125 = sphi 0, %s122
      %s126 = sphi 0, %s125
      %s142 = sphi 0, %s126
      %s146 = sphi 0, %s146
      %s148 = sphi 0, %s146
      %s149 = sphi 0, %s148
      %s163 = sphi 0, %s149
      %s167 = sphi 0, %s167
      %s169 = sphi 0, %s167
      %s170 = sphi 0, %s169
      %s184 = sphi 0, %s170
      %s188 = sphi 0, %s188
      %s190 = sphi 0, %s188
      %s191 = sphi 0, %s190
      %s205 = sphi 0, %s191
      %s209 = sphi 0, %s209
      %s211 = sphi 0, %s209
      %s212 = sphi 0, %s211
      %s226 = sphi 0, %s212
      %s230 = sphi 0, %s230
      %s232 = sphi 0, %s230
      %s233 = sphi 0, %s232
      %s247 = sphi 0, %s233
      %s251 = sphi 0, %s251
      %s253 = sphi 0, %s251
      %s254 = sphi 0, %s253
      %s268 = sphi 0, %s254
      %s276 = sphi 0, %s278
      %s279 = sphi 0, %s276
      %s280 = sphi 0, %s279
      %s296 = sphi 0, %s280
    $region4: #{tpu_custom_call.1} parent=1 // loop_header_branch
      %29 = sbr.rel (%p27) target = $region8
    $region5: #{tpu_custom_call.1} parent=1 // loop_body
      %s31 = ssub.s32 %s26, 1
      %s32 = ssub.s32 %s26, 2
      %s39 = sadd.s32 1, %s34
      %p40 = scmp.ge.s32.totalorder %s39, 2
      %s41 = scalar_select %p40, 0, %s39
      %s42 = sadd.s32 1, %s33
      %s43 = scalar_select %p40, %s42, %s33
      %p44 = scmp.ge.s32.totalorder %s43, 2
      %s45 = scalar_select %p44, 0, %s43
      %s46 = ssub.s32 %s33, %s45
      %s47 = ssub.s32 %s34, %s41
      %s48 = sor.u32 %s46, %s47
      %p49 = scmp.eq.s32.totalorder %s48, 0
      %s51 = sadd.s32 %s50, 1
      %s52 = scalar_select %p49, %s50, %s51
      %p55 = pneg %p49
      %p56 = scmp.eq.s32.totalorder %s26, 3
      %p57 = por %p55, %p56
      %p58 = scmp.ne.s32.totalorder %s50, %s53
      %p59 = scmp.eq.s32.totalorder %s26, 0
      %p60 = por %p58, %p59
      %p61 = scmp.ne.s32.totalorder %s50, %s53
      %p62 = scmp.eq.s32.totalorder %s31, 3
      %p63 = por %p61, %p62
      %p64 = scmp.ne.s32.totalorder %s53, %s54
      %p65 = scmp.eq.s32.totalorder %s31, 0
      %p66 = por %p64, %p65
      %p67 = scmp.ne.s32.totalorder %s53, %s54
      %p68 = scmp.eq.s32.totalorder %s32, 3
      %p69 = por %p67, %p68
      %p71 = scmp.ne.s32.totalorder %s54, %s70
      %p72 = scmp.eq.s32.totalorder %s32, 0
      %p73 = por %p71, %p72
      %s74 = smul.u32 %s34, 8
      %s75 = ssub.s32 %s74, 1
      %p76 = scmp.gt.s32.totalorder %s75, 0
      %s77 = scalar_select %p76, %s75, 0
      %s78 = smul.u32 %s41, 8
      %s79 = ssub.s32 %s78, 1
      %p80 = scmp.gt.s32.totalorder %s79, 0
      %s81 = scalar_select %p80, %s79, 0
      %s82 = ssub.s32 %s33, %s45
      %s83 = ssub.s32 %s77, %s81
      %s84 = sor.u32 %s82, %s83
      %p85 = scmp.eq.s32.totalorder %s84, 0
      %s87 = sadd.s32 %s86, 1
      %s88 = scalar_select %p85, %s86, %s87
      %p91 = pneg %p85
      %p92 = scmp.eq.s32.totalorder %s26, 3
      %p93 = por %p91, %p92
      %p94 = scmp.ne.s32.totalorder %s86, %s89
      %p95 = scmp.eq.s32.totalorder %s26, 0
      %p96 = por %p94, %p95
      %p97 = scmp.ne.s32.totalorder %s86, %s89
      %p98 = scmp.eq.s32.totalorder %s31, 3
      %p99 = por %p97, %p98
      %p100 = scmp.ne.s32.totalorder %s89, %s90
      %p101 = scmp.eq.s32.totalorder %s31, 0
      %p102 = por %p100, %p101
      %p103 = scmp.ne.s32.totalorder %s89, %s90
      %p104 = scmp.eq.s32.totalorder %s32, 3
      %p105 = por %p103, %p104
      %p107 = scmp.ne.s32.totalorder %s90, %s106
      %p108 = scmp.eq.s32.totalorder %s32, 0
      %p109 = por %p107, %p108
      %s110 = smul.u32 %s34, 8
      %s111 = sadd.s32 %s110, 8
      %p112 = scmp.lt.s32.totalorder %s111, 15
      %s113 = scalar_select %p112, %s111, 15
      %s114 = smul.u32 %s41, 8
      %s115 = sadd.s32 %s114, 8
      %p116 = scmp.lt.s32.totalorder %s115, 15
      %s117 = scalar_select %p116, %s115, 15
      %s118 = ssub.s32 %s33, %s45
      %s119 = ssub.s32 %s113, %s117
      %s120 = sor.u32 %s118, %s119
      %p121 = scmp.eq.s32.totalorder %s120, 0
      %s123 = sadd.s32 %s122, 1
      %s124 = scalar_select %p121, %s122, %s123
      %p127 = pneg %p121
      %p128 = scmp.eq.s32.totalorder %s26, 3
      %p129 = por %p127, %p128
      %p130 = scmp.ne.s32.totalorder %s122, %s125
      %p131 = scmp.eq.s32.totalorder %s26, 0
      %p132 = por %p130, %p131
      %p133 = scmp.ne.s32.totalorder %s122, %s125
      %p134 = scmp.eq.s32.totalorder %s31, 3
      %p135 = por %p133, %p134
      %p136 = scmp.ne.s32.totalorder %s125, %s126
      %p137 = scmp.eq.s32.totalorder %s31, 0
      %p138 = por %p136, %p137
      %p139 = scmp.ne.s32.totalorder %s125, %s126
      %p140 = scmp.eq.s32.totalorder %s32, 3
      %p141 = por %p139, %p140
      %p143 = scmp.ne.s32.totalorder %s126, %s142
      %p144 = scmp.eq.s32.totalorder %s32, 0
      %p145 = por %p143, %p144
      %s147 = sadd.s32 %s146, 1
      %p150 = scmp.eq.s32.totalorder %s26, 3
      %p151 = scmp.ne.s32.totalorder %s146, %s148
      %p152 = scmp.eq.s32.totalorder %s26, 0
      %p153 = por %p151, %p152
      %p154 = scmp.ne.s32.totalorder %s146, %s148
      %p155 = scmp.eq.s32.totalorder %s31, 3
      %p156 = por %p154, %p155
      %p157 = scmp.ne.s32.totalorder %s148, %s149
      %p158 = scmp.eq.s32.totalorder %s31, 0
      %p159 = por %p157, %p158
      %p160 = scmp.ne.s32.totalorder %s148, %s149
      %p161 = scmp.eq.s32.totalorder %s32, 3
      %p162 = por %p160, %p161
      %p164 = scmp.ne.s32.totalorder %s149, %s163
      %p165 = scmp.eq.s32.totalorder %s32, 0
      %p166 = por %p164, %p165
      %s168 = sadd.s32 %s167, 1
      %p171 = scmp.eq.s32.totalorder %s26, 3
      %p172 = scmp.ne.s32.totalorder %s167, %s169
      %p173 = scmp.eq.s32.totalorder %s26, 0
      %p174 = por %p172, %p173
      %p175 = scmp.ne.s32.totalorder %s167, %s169
      %p176 = scmp.eq.s32.totalorder %s31, 3
      %p177 = por %p175, %p176
      %p178 = scmp.ne.s32.totalorder %s169, %s170
      %p179 = scmp.eq.s32.totalorder %s31, 0
      %p180 = por %p178, %p179
      %p181 = scmp.ne.s32.totalorder %s169, %s170
      %p182 = scmp.eq.s32.totalorder %s32, 3
      %p183 = por %p181, %p182
      %p185 = scmp.ne.s32.totalorder %s170, %s184
      %p186 = scmp.eq.s32.totalorder %s32, 0
      %p187 = por %p185, %p186
      %s189 = sadd.s32 %s188, 1
      %p192 = scmp.eq.s32.totalorder %s26, 3
      %p193 = scmp.ne.s32.totalorder %s188, %s190
      %p194 = scmp.eq.s32.totalorder %s26, 0
      %p195 = por %p193, %p194
      %p196 = scmp.ne.s32.totalorder %s188, %s190
      %p197 = scmp.eq.s32.totalorder %s31, 3
      %p198 = por %p196, %p197
      %p199 = scmp.ne.s32.totalorder %s190, %s191
      %p200 = scmp.eq.s32.totalorder %s31, 0
      %p201 = por %p199, %p200
      %p202 = scmp.ne.s32.totalorder %s190, %s191
      %p203 = scmp.eq.s32.totalorder %s32, 3
      %p204 = por %p202, %p203
      %p206 = scmp.ne.s32.totalorder %s191, %s205
      %p207 = scmp.eq.s32.totalorder %s32, 0
      %p208 = por %p206, %p207
      %s210 = sadd.s32 %s209, 1
      %p213 = scmp.eq.s32.totalorder %s26, 3
      %p214 = scmp.ne.s32.totalorder %s209, %s211
      %p215 = scmp.eq.s32.totalorder %s26, 0
      %p216 = por %p214, %p215
      %p217 = scmp.ne.s32.totalorder %s209, %s211
      %p218 = scmp.eq.s32.totalorder %s31, 3
      %p219 = por %p217, %p218
      %p220 = scmp.ne.s32.totalorder %s211, %s212
      %p221 = scmp.eq.s32.totalorder %s31, 0
      %p222 = por %p220, %p221
      %p223 = scmp.ne.s32.totalorder %s211, %s212
      %p224 = scmp.eq.s32.totalorder %s32, 3
      %p225 = por %p223, %p224
      %p227 = scmp.ne.s32.totalorder %s212, %s226
      %p228 = scmp.eq.s32.totalorder %s32, 0
      %p229 = por %p227, %p228
      %s231 = sadd.s32 %s230, 1
      %p234 = scmp.eq.s32.totalorder %s26, 3
      %p235 = scmp.ne.s32.totalorder %s230, %s232
      %p236 = scmp.eq.s32.totalorder %s26, 0
      %p237 = por %p235, %p236
      %p238 = scmp.ne.s32.totalorder %s230, %s232
      %p239 = scmp.eq.s32.totalorder %s31, 3
      %p240 = por %p238, %p239
      %p241 = scmp.ne.s32.totalorder %s232, %s233
      %p242 = scmp.eq.s32.totalorder %s31, 0
      %p243 = por %p241, %p242
      %p244 = scmp.ne.s32.totalorder %s232, %s233
      %p245 = scmp.eq.s32.totalorder %s32, 3
      %p246 = por %p244, %p245
      %p248 = scmp.ne.s32.totalorder %s233, %s247
      %p249 = scmp.eq.s32.totalorder %s32, 0
      %p250 = por %p248, %p249
      %s252 = sadd.s32 %s251, 1
      %p255 = scmp.eq.s32.totalorder %s26, 3
      %p256 = scmp.ne.s32.totalorder %s251, %s253
      %p257 = scmp.eq.s32.totalorder %s26, 0
      %p258 = por %p256, %p257
      %p259 = scmp.ne.s32.totalorder %s251, %s253
      %p260 = scmp.eq.s32.totalorder %s31, 3
      %p261 = por %p259, %p260
      %p262 = scmp.ne.s32.totalorder %s253, %s254
      %p263 = scmp.eq.s32.totalorder %s31, 0
      %p264 = por %p262, %p263
      %p265 = scmp.ne.s32.totalorder %s253, %s254
      %p266 = scmp.eq.s32.totalorder %s32, 3
      %p267 = por %p265, %p266
      %p269 = scmp.ne.s32.totalorder %s254, %s268
      %p270 = scmp.eq.s32.totalorder %s32, 0
      %p271 = por %p269, %p270
      %s272 = ssub.s32 %s33, %s45
      %s273 = ssub.s32 %s34, %s41
      %s274 = sor.u32 %s272, %s273
      %p275 = scmp.eq.s32.totalorder %s274, 0
      %s277 = sadd.s32 %s276, 1
      %s278 = scalar_select %p275, %s276, %s277
      %p281 = pneg %p275
      %p282 = scmp.eq.s32.totalorder %s26, 3
      %p283 = por %p281, %p282
      %p284 = scmp.ne.s32.totalorder %s276, %s279
      %p285 = scmp.eq.s32.totalorder %s26, 0
      %p286 = por %p284, %p285
      %p287 = scmp.ne.s32.totalorder %s276, %s279
      %p288 = scmp.eq.s32.totalorder %s31, 3
      %p289 = por %p287, %p288
      %p290 = scmp.ne.s32.totalorder %s279, %s280
      %p291 = scmp.eq.s32.totalorder %s31, 0
      %p292 = por %p290, %p291
      %p293 = scmp.ne.s32.totalorder %s279, %s280
      %p294 = scmp.eq.s32.totalorder %s32, 3
      %p295 = por %p293, %p294
      %p297 = scmp.ne.s32.totalorder %s280, %s296
      %p298 = scmp.eq.s32.totalorder %s32, 0
      %p299 = por %p297, %p298
      %p300 = scmp.le.s32.totalorder 1, %s26
      %p301 = scmp.lt.s32.totalorder %s26, 5
      %p302 = pnand %p300, %p301
      %p303 = pneg %p302
      // Predicated region
      $region9: #{tpu_custom_call.1} parent=5 // pred_check
        _
      $region10: #{tpu_custom_call.1} parent=5 // pred_check_branch
        %305 = sbr.rel (%p302) target = $region12
      $region11: #{tpu_custom_call.1} parent=5 // pred_region
        %s306 = ssub.s32 %s26, 1
        // Predicated region
        $region13: #{tpu_custom_call.1} parent=11 // pred_check
          %p307 = pneg %p159
        $region14: #{tpu_custom_call.1} parent=11 // pred_check_branch
          %309 = sbr.rel (%p307) target = $region16
        $region15: #{tpu_custom_call.1} parent=11 // pred_region
          %s311 = ssub.s32 1024, 1024
          %312 = vsyncadd [#allocation10], %s311
          %s313 = sshll.u32 [#allocation9], 4
          %s314 = int_to_ptr.vmem [resolvable:$true] %s313
          %319 = dma.hbm_to_vmem [thread:$0]  %s3, 1024, %s314, [#allocation10], 64, 64, 4
        $region16: #{tpu_custom_call.1} parent=11 // pred_fallthru
          _
        // Predicated region
        $region17: #{tpu_custom_call.1} parent=11 // pred_check
          %p320 = pneg %p180
        $region18: #{tpu_custom_call.1} parent=11 // pred_check_branch
          %322 = sbr.rel (%p320) target = $region20
        $region19: #{tpu_custom_call.1} parent=11 // pred_region
          _
        $region20: #{tpu_custom_call.1} parent=11 // pred_fallthru
          _
        // Predicated region
        $region21: #{tpu_custom_call.1} parent=11 // pred_check
          %p323 = pneg %p201
        $region22: #{tpu_custom_call.1} parent=11 // pred_check_branch
          %325 = sbr.rel (%p323) target = $region24
        $region23: #{tpu_custom_call.1} parent=11 // pred_region
          %s327 = ssub.s32 9216, 9216
          %328 = vsyncadd [#allocation10], %s327
          %s329 = sshll.u32 [#allocation11], 4
          %s330 = int_to_ptr.vmem [resolvable:$true] %s329
          %335 = dma.hbm_to_vmem [thread:$0]  %s5, 9216, %s330, [#allocation10], 64, 64, 4
        $region24: #{tpu_custom_call.1} parent=11 // pred_fallthru
          _
        // Predicated region
        $region25: #{tpu_custom_call.1} parent=11 // pred_check
          %p336 = pneg %p222
        $region26: #{tpu_custom_call.1} parent=11 // pred_check_branch
          %338 = sbr.rel (%p336) target = $region28
        $region27: #{tpu_custom_call.1} parent=11 // pred_region
          _
        $region28: #{tpu_custom_call.1} parent=11 // pred_fallthru
          _
        // Predicated region
        $region29: #{tpu_custom_call.1} parent=11 // pred_check
          %p339 = pneg %p243
        $region30: #{tpu_custom_call.1} parent=11 // pred_check_branch
          %341 = sbr.rel (%p339) target = $region32
        $region31: #{tpu_custom_call.1} parent=11 // pred_region
          %s343 = ssub.s32 1024, 1024
          %344 = vsyncadd [#allocation13], %s343
          %s345 = sshll.u32 [#allocation12], 4
          %s346 = int_to_ptr.vmem [resolvable:$true] %s345
          %351 = dma.hbm_to_vmem [thread:$0]  %s7, 1024, %s346, [#allocation13], 64, 64, 4
        $region32: #{tpu_custom_call.1} parent=11 // pred_fallthru
          _
        // Predicated region
        $region33: #{tpu_custom_call.1} parent=11 // pred_check
          %p352 = pneg %p264
        $region34: #{tpu_custom_call.1} parent=11 // pred_check_branch
          %354 = sbr.rel (%p352) target = $region36
        $region35: #{tpu_custom_call.1} parent=11 // pred_region
          _
        $region36: #{tpu_custom_call.1} parent=11 // pred_fallthru
          _
      $region12: #{tpu_custom_call.1} parent=5 // pred_fallthru
        _
      %p355 = scmp.lt.s32.totalorder %s26, 4
      // Predicated region
      $region37: #{tpu_custom_call.1} parent=5 // pred_check
        %p356 = pneg %p355
      $region38: #{tpu_custom_call.1} parent=5 // pred_check_branch
        %358 = sbr.rel (%p356) target = $region40
      $region39: #{tpu_custom_call.1} parent=5 // pred_region
        // Predicated region
        $region41: #{tpu_custom_call.1} parent=39 // pred_check
          %p359 = pneg %p60
        $region42: #{tpu_custom_call.1} parent=39 // pred_check_branch
          %361 = sbr.rel (%p359) target = $region44
        $region43: #{tpu_custom_call.1} parent=39 // pred_region
          %s362 = sand.u32 %s50, 1
          %s363 = scalar_lea.sflag [#allocation4], %s362
          %s364 = sand.u32 %s50, 1
          %s365 = smul.addr %s364, 64
          %s366 = scalar_lea.vmem [#allocation3], %s365
          %s367 = smul.u32 8, %s34
          %s369 = ssub.s32 1024, 1024
          %370 = vsyncadd %s363, %s369
          %s371 = smul.addr %s367, 2
          %s372 = smul.addr %s33, 32
          %s373 = sadd.s32 %s371, %s372
          %s374 = smul.addr %s373, 64
          %s375 = scalar_lea.hbm %s0, %s374
          %s376 = sshll.u32 %s366, 4
          %s377 = int_to_ptr.vmem [resolvable:$true] %s376
          %382 = dma.hbm_to_vmem [thread:$0]  %s375, 1024, %s377, %s363, 64, 64, 4
        $region44: #{tpu_custom_call.1} parent=39 // pred_fallthru
          _
        // Predicated region
        $region45: #{tpu_custom_call.1} parent=39 // pred_check
          %p383 = pneg %p96
        $region46: #{tpu_custom_call.1} parent=39 // pred_check_branch
          %385 = sbr.rel (%p383) target = $region48
        $region47: #{tpu_custom_call.1} parent=39 // pred_region
          %s386 = sand.u32 %s26, 1
          %s387 = scalar_lea.sflag [#allocation7], %s386
          %s388 = sand.u32 %s86, 1
          %s389 = smul.addr %s388, 8
          %s390 = scalar_lea.vmem [#allocation6], %s389
          %s391 = smul.u32 %s34, 8
          %s392 = ssub.s32 %s391, 1
          %p393 = scmp.gt.s32.totalorder %s392, 0
          %s394 = scalar_select %p393, %s392, 0
          %s396 = ssub.s32 128, 128
          %397 = vsyncadd %s387, %s396
          %s398 = smul.addr %s394, 2
          %s399 = smul.addr %s33, 32
          %s400 = sadd.s32 %s398, %s399
          %s401 = smul.addr %s400, 64
          %s402 = scalar_lea.hbm %s1, %s401
          %s403 = sshll.u32 %s390, 4
          %s404 = int_to_ptr.vmem [resolvable:$true] %s403
          %409 = dma.hbm_to_vmem [thread:$0]  %s402, 128, %s404, %s387, 64, 64, 4
        $region48: #{tpu_custom_call.1} parent=39 // pred_fallthru
          _
        // Predicated region
        $region49: #{tpu_custom_call.1} parent=39 // pred_check
          %p410 = pneg %p132
        $region50: #{tpu_custom_call.1} parent=39 // pred_check_branch
          %412 = sbr.rel (%p410) target = $region52
        $region51: #{tpu_custom_call.1} parent=39 // pred_region
          %s413 = sand.u32 %s26, 1
          %s414 = scalar_lea.sflag [#allocation7], %s413
          %s415 = sand.u32 %s122, 1
          %s416 = smul.addr %s415, 8
          %s417 = scalar_lea.vmem [#allocation8], %s416
          %s418 = smul.u32 %s34, 8
          %s419 = sadd.s32 %s418, 8
          %p420 = scmp.lt.s32.totalorder %s419, 15
          %s421 = scalar_select %p420, %s419, 15
          %s423 = ssub.s32 128, 128
          %424 = vsyncadd %s414, %s423
          %s425 = smul.addr %s421, 2
          %s426 = smul.addr %s33, 32
          %s427 = sadd.s32 %s425, %s426
          %s428 = smul.addr %s427, 64
          %s429 = scalar_lea.hbm %s2, %s428
          %s430 = sshll.u32 %s417, 4
          %s431 = int_to_ptr.vmem [resolvable:$true] %s430
          %436 = dma.hbm_to_vmem [thread:$0]  %s429, 128, %s431, %s414, 64, 64, 4
        $region52: #{tpu_custom_call.1} parent=39 // pred_fallthru
          _
      $region40: #{tpu_custom_call.1} parent=5 // pred_fallthru
        _
      %p437 = scmp.le.s32.totalorder 1, %s26
      %p438 = scmp.lt.s32.totalorder %s26, 5
      %p439 = pnand %p437, %p438
      %p440 = pneg %p439
      // Predicated region
      $region53: #{tpu_custom_call.1} parent=5 // pred_check
        _
      $region54: #{tpu_custom_call.1} parent=5 // pred_check_branch
        %442 = sbr.rel (%p439) target = $region56
      $region55: #{tpu_custom_call.1} parent=5 // pred_region
        %s443 = ssub.s32 %s26, 1
        %s444 = sand.u32 %s53, 1
        %s445 = scalar_lea.sflag [#allocation4], %s444
        %s446 = sand.u32 %s53, 1
        %s447 = smul.addr %s446, 64
        %s448 = scalar_lea.vmem [#allocation3], %s447
        // Predicated region
        $region57: #{tpu_custom_call.1} parent=55 // pred_check
          %p449 = pneg %p66
        $region58: #{tpu_custom_call.1} parent=55 // pred_check_branch
          %451 = sbr.rel (%p449) target = $region60
        $region59: #{tpu_custom_call.1} parent=55 // pred_region
          %452 = dma.done %s445, 1024
        $region60: #{tpu_custom_call.1} parent=55 // pred_fallthru
          _
        %s453 = sand.u32 %s31, 1
        %s454 = scalar_lea.sflag [#allocation7], %s453
        %s455 = sand.u32 %s89, 1
        %s456 = smul.addr %s455, 8
        %s457 = scalar_lea.vmem [#allocation6], %s456
        // Predicated region
        $region61: #{tpu_custom_call.1} parent=55 // pred_check
          %p458 = pneg %p102
        $region62: #{tpu_custom_call.1} parent=55 // pred_check_branch
          %460 = sbr.rel (%p458) target = $region64
        $region63: #{tpu_custom_call.1} parent=55 // pred_region
          %461 = dma.done %s454, 128
        $region64: #{tpu_custom_call.1} parent=55 // pred_fallthru
          _
        %s462 = sand.u32 %s31, 1
        %s463 = scalar_lea.sflag [#allocation7], %s462
        %s464 = sand.u32 %s125, 1
        %s465 = smul.addr %s464, 8
        %s466 = scalar_lea.vmem [#allocation8], %s465
        // Predicated region
        $region65: #{tpu_custom_call.1} parent=55 // pred_check
          %p467 = pneg %p138
        $region66: #{tpu_custom_call.1} parent=55 // pred_check_branch
          %469 = sbr.rel (%p467) target = $region68
        $region67: #{tpu_custom_call.1} parent=55 // pred_region
          %470 = dma.done %s463, 128
        $region68: #{tpu_custom_call.1} parent=55 // pred_fallthru
          _
        // Predicated region
        $region69: #{tpu_custom_call.1} parent=55 // pred_check
          %p471 = pneg %p159
        $region70: #{tpu_custom_call.1} parent=55 // pred_check_branch
          %473 = sbr.rel (%p471) target = $region72
        $region71: #{tpu_custom_call.1} parent=55 // pred_region
          %474 = dma.done [#allocation10], 1024
        $region72: #{tpu_custom_call.1} parent=55 // pred_fallthru
          _
        // Predicated region
        $region73: #{tpu_custom_call.1} parent=55 // pred_check
          %p475 = pneg %p201
        $region74: #{tpu_custom_call.1} parent=55 // pred_check_branch
          %477 = sbr.rel (%p475) target = $region76
        $region75: #{tpu_custom_call.1} parent=55 // pred_region
          %478 = dma.done [#allocation10], 9216
        $region76: #{tpu_custom_call.1} parent=55 // pred_fallthru
          _
        // Predicated region
        $region77: #{tpu_custom_call.1} parent=55 // pred_check
          %p479 = pneg %p243
        $region78: #{tpu_custom_call.1} parent=55 // pred_check_branch
          %481 = sbr.rel (%p479) target = $region80
        $region79: #{tpu_custom_call.1} parent=55 // pred_region
          %482 = dma.done [#allocation13], 1024
        $region80: #{tpu_custom_call.1} parent=55 // pred_fallthru
          _
        %s483 = sand.u32 %s53, 1
        %s484 = scalar_lea.sflag [#allocation4], %s483
        %s485 = sand.u32 %s53, 1
        %s486 = smul.addr %s485, 64
        %s487 = scalar_lea.vmem [#allocation3], %s486
        %p488 = pneg %p66
        %p489 = pneg %p63
        %s490 = sand.u32 %s31, 1
        %s491 = scalar_lea.sflag [#allocation7], %s490
        %s492 = sand.u32 %s89, 1
        %s493 = smul.addr %s492, 8
        %s494 = scalar_lea.vmem [#allocation6], %s493
        %p495 = pneg %p102
        %p496 = pneg %p99
        %s497 = sand.u32 %s31, 1
        %s498 = scalar_lea.sflag [#allocation7], %s497
        %s499 = sand.u32 %s125, 1
        %s500 = smul.addr %s499, 8
        %s501 = scalar_lea.vmem [#allocation8], %s500
        %p502 = pneg %p138
        %p503 = pneg %p135
        %p504 = pneg %p159
        %p505 = pneg %p156
        %p506 = pneg %p180
        %p507 = pneg %p177
        %p508 = pneg %p201
        %p509 = pneg %p198
        %p510 = pneg %p222
        %p511 = pneg %p219
        %p512 = pneg %p243
        %p513 = pneg %p240
        %p514 = pneg %p264
        %p515 = pneg %p261
        %p516 = pneg %p292
        %p517 = pneg %p289
        %s518 = sand.u32 %s279, 1
        %s519 = scalar_lea.sflag [#allocation5], %s518
        %s520 = sand.u32 %s279, 1
        %s521 = smul.addr %s520, 64
        %s522 = scalar_lea.vmem [#allocation14], %s521
        %s523 = smul.u32 8, %s36
        %s524 = smul.u32 %s36, 8
        %s525 = ssub.s32 %s524, 1
        %p526 = scmp.gt.s32.totalorder %s525, 0
        %s527 = scalar_select %p526, %s525, 0
        %s528 = smul.u32 %s36, 8
        %s529 = sadd.s32 %s528, 8
        %p530 = scmp.lt.s32.totalorder %s529, 15
        %s531 = scalar_select %p530, %s529, 15
        %s532 = smul.u32 8, %s36
        %v534 = vld [vmem:[%s457] sm:$0xf]
        %v535 = vld [vmem:[%s457 + $0x4] sm:$0xf]
        %v536 = vld [vmem:[%s448] sm:$0xf]
        %v537 = vld [vmem:[%s448 + $0x4] sm:$0xf]
        %v538 = vld [vmem:[%s448 + $0x8] sm:$0xf]
        %v539 = vld [vmem:[%s448 + $0xc] sm:$0xf]
        %v540 = vld [vmem:[%s448 + $0x10] sm:$0xf]
        %v541 = vld [vmem:[%s448 + $0x14] sm:$0xf]
        %v542 = vld [vmem:[%s448 + $0x18] sm:$0xf]
        %v543 = vld [vmem:[%s448 + $0x1c] sm:$0xf]
        %v544 = vld [vmem:[%s448 + $0x20] sm:$0xf]
        %v545 = vld [vmem:[%s448 + $0x24] sm:$0xf]
        %v546 = vld [vmem:[%s448 + $0x28] sm:$0xf]
        %v547 = vld [vmem:[%s448 + $0x2c] sm:$0xf]
        %v548 = vld [vmem:[%s448 + $0x30] sm:$0xf]
        %v549 = vld [vmem:[%s448 + $0x34] sm:$0xf]
        %v550 = vld [vmem:[%s448 + $0x38] sm:$0xf]
        %v551 = vld [vmem:[%s448 + $0x3c] sm:$0xf]
        %v552 = vld [vmem:[%s466] sm:$0xf]
        %v553 = vld [vmem:[%s466 + $0x4] sm:$0xf]
        %v554 = vld [vmem:[#allocation9] sm:$0xf]
        %v555 = vld [vmem:[#allocation9 + $0x4] sm:$0xf]
        %v556 = vld [vmem:[#allocation9 + $0x8] sm:$0xf]
        %v557 = vld [vmem:[#allocation9 + $0xc] sm:$0xf]
        %v558 = vld [vmem:[#allocation9 + $0x10] sm:$0xf]
        %v559 = vld [vmem:[#allocation9 + $0x14] sm:$0xf]
        %v560 = vld [vmem:[#allocation9 + $0x18] sm:$0xf]
        %v561 = vld [vmem:[#allocation9 + $0x1c] sm:$0xf]
        %v562 = vld [vmem:[#allocation9 + $0x20] sm:$0xf]
        %v563 = vld [vmem:[#allocation9 + $0x24] sm:$0xf]
        %v564 = vld [vmem:[#allocation9 + $0x28] sm:$0xf]
        %v565 = vld [vmem:[#allocation9 + $0x2c] sm:$0xf]
        %v566 = vld [vmem:[#allocation9 + $0x30] sm:$0xf]
        %v567 = vld [vmem:[#allocation9 + $0x34] sm:$0xf]
        %v568 = vld [vmem:[#allocation9 + $0x38] sm:$0xf]
        %v569 = vld [vmem:[#allocation9 + $0x3c] sm:$0xf]
        %v570 = vld [vmem:[%s4] sm:$0x1]
        %v572 = vlaneseq
        %v573 = vshrl.u32 %v572, 7
        %v574 = vsub.s32 0, %v573
        %v575 = vrot.slane %v570, %v574
        %v597 = vunpack.c.l.b16 %v534
        %v598 = vunpack.c.l.b16 %v535
        %v599 = vunpack.c.l.b16 %v536
        %v600 = vunpack.c.l.b16 %v537
        %v601 = vunpack.c.l.b16 %v538
        %v602 = vunpack.c.l.b16 %v539
        %v603 = vunpack.c.l.b16 %v540
        %v604 = vunpack.c.l.b16 %v541
        %v605 = vunpack.c.l.b16 %v542
        %v606 = vunpack.c.l.b16 %v543
        %v607 = vunpack.c.l.b16 %v544
        %v608 = vunpack.c.l.b16 %v545
        %v609 = vunpack.c.l.b16 %v546
        %v610 = vunpack.c.l.b16 %v547
        %v611 = vunpack.c.l.b16 %v548
        %v612 = vunpack.c.l.b16 %v549
        %v613 = vunpack.c.l.b16 %v550
        %v614 = vunpack.c.l.b16 %v551
        %v615 = vunpack.c.l.b16 %v552
        %v616 = vunpack.c.l.b16 %v553
        %v617 = vpack.c.b16 %v598, %v597
        %v618 = vpack.c.b16 %v600, %v599
        %v619 = vpack.c.b16 %v602, %v601
        %v620 = vpack.c.b16 %v604, %v603
        %v621 = vpack.c.b16 %v606, %v605
        %v622 = vpack.c.b16 %v608, %v607
        %v623 = vpack.c.b16 %v610, %v609
        %v624 = vpack.c.b16 %v612, %v611
        %v625 = vpack.c.b16 %v614, %v613
        %v626 = vpack.c.b16 %v616, %v615
        %v653 = vunpack.c.l.b16 %v554
        %v654 = vunpack.c.l.b16 %v555
        %v655 = vunpack.c.l.b16 %v556
        %v656 = vunpack.c.l.b16 %v557
        %v657 = vunpack.c.l.b16 %v558
        %v658 = vunpack.c.l.b16 %v559
        %v659 = vunpack.c.l.b16 %v560
        %v660 = vunpack.c.l.b16 %v561
        %v661 = vunpack.c.l.b16 %v562
        %v662 = vunpack.c.l.b16 %v563
        %v663 = vunpack.c.l.b16 %v564
        %v664 = vunpack.c.l.b16 %v565
        %v665 = vunpack.c.l.b16 %v566
        %v666 = vunpack.c.l.b16 %v567
        %v667 = vunpack.c.l.b16 %v568
        %v668 = vunpack.c.l.b16 %v569
        %v669 = vpack.c.b16 %v654, %v653
        %v670 = vpack.c.b16 %v656, %v655
        %v671 = vpack.c.b16 %v658, %v657
        %v672 = vpack.c.b16 %v660, %v659
        %v673 = vpack.c.b16 %v662, %v661
        %v674 = vpack.c.b16 %v664, %v663
        %v675 = vpack.c.b16 %v666, %v665
        %v676 = vpack.c.b16 %v668, %v667
        %685 = vmatprep.subr.bf16.mxu0 0
        %686 = vmatpush1.bf16.msra.mxu0 %v676
        %687 = vmatprep.subr.bf16.mxu0 0
        %688 = vmatpush1.bf16.msra.mxu0 %v675
        %689 = vmatprep.subr.bf16.mxu0 0
        %690 = vmatpush1.bf16.msra.mxu0 %v674
        %691 = vmatprep.subr.bf16.mxu0 0
        %692 = vmatpush1.bf16.msra.mxu0 %v673
        %693 = vmatprep.subr.bf16.mxu0 0
        %694 = vmatpush1.bf16.msra.mxu0 %v672
        %695 = vmatprep.subr.bf16.mxu0 0
        %696 = vmatpush1.bf16.msra.mxu0 %v671
        %697 = vmatprep.subr.bf16.mxu0 0
        %698 = vmatpush1.bf16.msra.mxu0 %v670
        %699 = vmatprep.subr.bf16.mxu0 0
        %700 = vmatpush1.bf16.msra.mxu0 %v669
        %701 = vmatprep.subr.bf16.mxu0 0
        %702 = vmatpush2.bf16.msra.mxu0 0
        %703 = vmatprep.subr.bf16.mxu0 0
        %704 = vmatpush2.bf16.msra.mxu0 0
        %705 = vmatprep.subr.bf16.mxu0 0
        %706 = vmatpush2.bf16.msra.mxu0 0
        %707 = vmatprep.subr.bf16.mxu0 0
        %708 = vmatpush2.bf16.msra.mxu0 0
        %709 = vmatprep.subr.bf16.mxu0 0
        %710 = vmatpush2.bf16.msra.mxu0 0
        %711 = vmatprep.subr.bf16.mxu0 0
        %712 = vmatpush2.bf16.msra.mxu0 0
        %713 = vmatprep.subr.bf16.mxu0 0
        %714 = vmatpush2.bf16.msra.mxu0 0
        %715 = vmatprep.subr.bf16.mxu0 0
        %716 = vmatpush2.bf16.msra.mxu0 0
        %717 = vmatprep.mubr.bf16.mxu0 0
        %718 = vmatmul.mubr.bf16.gmra.mxu0 %v617
        %v719 = vpop.f32.mrf.mxu0
        %v720 = vadd.f32 %v575, %v719
        %v721 = vpop.f32.mrf.mxu0
        %v722 = vpop.f32.mrf.mxu0
        %v723 = vadd.f32 %v575, %v722
        %v724 = vpop.f32.mrf.mxu0
        %725 = vmatprep.mubr.bf16.mxu0 0
        %726 = vmatmul.mubr.bf16.gmra.mxu0 %v618
        %v727 = vpop.f32.mrf.mxu0
        %v728 = vadd.f32 %v575, %v727
        %v729 = vpop.f32.mrf.mxu0
        %v730 = vpop.f32.mrf.mxu0
        %v731 = vadd.f32 %v575, %v730
        %v732 = vpop.f32.mrf.mxu0
        %733 = vmatprep.mubr.bf16.mxu0 0
        %734 = vmatmul.mubr.bf16.gmra.mxu0 %v619
        %v735 = vpop.f32.mrf.mxu0
        %v736 = vadd.f32 %v575, %v735
        %v737 = vpop.f32.mrf.mxu0
        %v738 = vpop.f32.mrf.mxu0
        %v739 = vadd.f32 %v575, %v738
        %v740 = vpop.f32.mrf.mxu0
        %741 = vmatprep.mubr.bf16.mxu0 0
        %742 = vmatmul.mubr.bf16.gmra.mxu0 %v620
        %v743 = vpop.f32.mrf.mxu0
        %v744 = vadd.f32 %v575, %v743
        %v745 = vpop.f32.mrf.mxu0
        %v746 = vpop.f32.mrf.mxu0
        %v747 = vadd.f32 %v575, %v746
        %v748 = vpop.f32.mrf.mxu0
        %749 = vmatprep.mubr.bf16.mxu0 0
        %750 = vmatmul.mubr.bf16.gmra.mxu0 %v621
        %v751 = vpop.f32.mrf.mxu0
        %v752 = vadd.f32 %v575, %v751
        %v753 = vpop.f32.mrf.mxu0
        %v754 = vpop.f32.mrf.mxu0
        %v755 = vadd.f32 %v575, %v754
        %v756 = vpop.f32.mrf.mxu0
        %757 = vmatprep.mubr.bf16.mxu0 0
        %758 = vmatmul.mubr.bf16.gmra.mxu0 %v622
        %v759 = vpop.f32.mrf.mxu0
        %v760 = vadd.f32 %v575, %v759
        %v761 = vpop.f32.mrf.mxu0
        %v762 = vpop.f32.mrf.mxu0
        %v763 = vadd.f32 %v575, %v762
        %v764 = vpop.f32.mrf.mxu0
        %765 = vmatprep.mubr.bf16.mxu0 0
        %766 = vmatmul.mubr.bf16.gmra.mxu0 %v623
        %v767 = vpop.f32.mrf.mxu0
        %v768 = vadd.f32 %v575, %v767
        %v769 = vpop.f32.mrf.mxu0
        %v770 = vpop.f32.mrf.mxu0
        %v771 = vadd.f32 %v575, %v770
        %v772 = vpop.f32.mrf.mxu0
        %773 = vmatprep.mubr.bf16.mxu0 0
        %774 = vmatmul.mubr.bf16.gmra.mxu0 %v624
        %v775 = vpop.f32.mrf.mxu0
        %v776 = vadd.f32 %v575, %v775
        %v777 = vpop.f32.mrf.mxu0
        %v778 = vpop.f32.mrf.mxu0
        %v779 = vadd.f32 %v575, %v778
        %v780 = vpop.f32.mrf.mxu0
        %781 = vmatprep.mubr.bf16.mxu0 0
        %782 = vmatmul.mubr.bf16.gmra.mxu0 %v625
        %v783 = vpop.f32.mrf.mxu0
        %v784 = vadd.f32 %v575, %v783
        %v785 = vpop.f32.mrf.mxu0
        %v786 = vpop.f32.mrf.mxu0
        %v787 = vadd.f32 %v575, %v786
        %v788 = vpop.f32.mrf.mxu0
        %789 = vmatprep.mubr.bf16.mxu0 0
        %790 = vmatmul.mubr.bf16.gmra.mxu0 %v626
        %v791 = vpop.f32.mrf.mxu0
        %v792 = vadd.f32 %v575, %v791
        %v793 = vpop.f32.mrf.mxu0
        %v794 = vpop.f32.mrf.mxu0
        %v795 = vadd.f32 %v575, %v794
        %v796 = vpop.f32.mrf.mxu0
        %797 = vdwg.mxu0
        %v798 = vmax.f32 %v720, 0.0
        %v799 = vmax.f32 %v723, 0.0
        %v800 = vmax.f32 %v728, 0.0
        %v801 = vmax.f32 %v731, 0.0
        %v802 = vmax.f32 %v736, 0.0
        %v803 = vmax.f32 %v739, 0.0
        %v804 = vmax.f32 %v744, 0.0
        %v805 = vmax.f32 %v747, 0.0
        %v806 = vmax.f32 %v752, 0.0
        %v807 = vmax.f32 %v755, 0.0
        %v808 = vmax.f32 %v760, 0.0
        %v809 = vmax.f32 %v763, 0.0
        %v810 = vmax.f32 %v768, 0.0
        %v811 = vmax.f32 %v771, 0.0
        %v812 = vmax.f32 %v776, 0.0
        %v813 = vmax.f32 %v779, 0.0
        %v814 = vmax.f32 %v784, 0.0
        %v815 = vmax.f32 %v787, 0.0
        %v816 = vmax.f32 %v792, 0.0
        %v817 = vmax.f32 %v795, 0.0
        %s818 = smul.u32 %s36, 8
        %s819 = ssub.s32 %s818, 1
        %v820 = vstv %s819
        %v821 = vadd.s32 %v820, 1
        %v822 = vadd.s32 %v820, 2
        %v823 = vadd.s32 %v820, 3
        %v824 = vadd.s32 %v820, 4
        %v825 = vadd.s32 %v820, 5
        %v826 = vadd.s32 %v820, 6
        %v827 = vadd.s32 %v820, 7
        %v828 = vadd.s32 %v820, 8
        %v829 = vadd.s32 %v820, 9
        %vm830 = vcmp.ge.s32.totalorder %v820, 0
        %vm831 = vcmp.ge.s32.totalorder %v821, 0
        %vm832 = vcmp.ge.s32.totalorder %v822, 0
        %vm833 = vcmp.ge.s32.totalorder %v823, 0
        %vm834 = vcmp.ge.s32.totalorder %v824, 0
        %vm835 = vcmp.ge.s32.totalorder %v825, 0
        %vm836 = vcmp.ge.s32.totalorder %v826, 0
        %vm837 = vcmp.ge.s32.totalorder %v827, 0
        %vm838 = vcmp.ge.s32.totalorder %v828, 0
        %vm839 = vcmp.ge.s32.totalorder %v829, 0
        %vm840 = vcmp.lt.s32.totalorder %v820, 16
        %vm841 = vcmp.lt.s32.totalorder %v821, 16
        %vm842 = vcmp.lt.s32.totalorder %v822, 16
        %vm843 = vcmp.lt.s32.totalorder %v823, 16
        %vm844 = vcmp.lt.s32.totalorder %v824, 16
        %vm845 = vcmp.lt.s32.totalorder %v825, 16
        %vm846 = vcmp.lt.s32.totalorder %v826, 16
        %vm847 = vcmp.lt.s32.totalorder %v827, 16
        %vm848 = vcmp.lt.s32.totalorder %v828, 16
        %vm849 = vcmp.lt.s32.totalorder %v829, 16
        %vm850 = vmand %vm830, %vm840
        %vm851 = vmand %vm831, %vm841
        %vm852 = vmand %vm832, %vm842
        %vm853 = vmand %vm833, %vm843
        %vm854 = vmand %vm834, %vm844
        %vm855 = vmand %vm835, %vm845
        %vm856 = vmand %vm836, %vm846
        %vm857 = vmand %vm837, %vm847
        %vm858 = vmand %vm838, %vm848
        %vm859 = vmand %vm839, %vm849
        %v860 = vsel %vm850, 1, 0
        %v861 = vsel %vm851, 1, 0
        %v862 = vsel %vm852, 1, 0
        %v863 = vsel %vm853, 1, 0
        %v864 = vsel %vm854, 1, 0
        %v865 = vsel %vm855, 1, 0
        %v866 = vsel %vm856, 1, 0
        %v867 = vsel %vm857, 1, 0
        %v868 = vsel %vm858, 1, 0
        %v869 = vsel %vm859, 1, 0
        %vm870 = vcmp.eq.s32.totalorder %v860, 1
        %vm871 = vcmp.eq.s32.totalorder %v861, 1
        %vm872 = vcmp.eq.s32.totalorder %v862, 1
        %vm873 = vcmp.eq.s32.totalorder %v863, 1
        %vm874 = vcmp.eq.s32.totalorder %v864, 1
        %vm875 = vcmp.eq.s32.totalorder %v865, 1
        %vm876 = vcmp.eq.s32.totalorder %v866, 1
        %vm877 = vcmp.eq.s32.totalorder %v867, 1
        %vm878 = vcmp.eq.s32.totalorder %v868, 1
        %vm879 = vcmp.eq.s32.totalorder %v869, 1
        %v880 = vsel %vm870, %v798, 0.0
        %v881 = vsel %vm870, %v799, 0.0
        %v882 = vsel %vm871, %v800, 0.0
        %v883 = vsel %vm871, %v801, 0.0
        %v884 = vsel %vm872, %v802, 0.0
        %v885 = vsel %vm872, %v803, 0.0
        %v886 = vsel %vm873, %v804, 0.0
        %v887 = vsel %vm873, %v805, 0.0
        %v888 = vsel %vm874, %v806, 0.0
        %v889 = vsel %vm874, %v807, 0.0
        %v890 = vsel %vm875, %v808, 0.0
        %v891 = vsel %vm875, %v809, 0.0
        %v892 = vsel %vm876, %v810, 0.0
        %v893 = vsel %vm876, %v811, 0.0
        %v894 = vsel %vm877, %v812, 0.0
        %v895 = vsel %vm877, %v813, 0.0
        %v896 = vsel %vm878, %v814, 0.0
        %v897 = vsel %vm878, %v815, 0.0
        %v898 = vsel %vm879, %v816, 0.0
        %v899 = vsel %vm879, %v817, 0.0
        %v900 = vpack.c.bf16 %v881, %v880
        %v901 = vpack.c.bf16 %v883, %v882
        %v902 = vpack.c.bf16 %v885, %v884
        %v903 = vpack.c.bf16 %v887, %v886
        %v904 = vpack.c.bf16 %v889, %v888
        %v905 = vpack.c.bf16 %v891, %v890
        %v906 = vpack.c.bf16 %v893, %v892
        %v907 = vpack.c.bf16 %v895, %v894
        %v908 = vpack.c.bf16 %v897, %v896
        %v909 = vpack.c.bf16 %v899, %v898
        %v911 = vshrl.u32 %v900, 16
        %v913 = vrot.slane %v911, 7
        %v914 = vshll.u32 %v900, 16
        %v916 = vor.u32 %v913, %v914
        %v918 = vshrl.u32 %v901, 16
        %v920 = vrot.slane %v918, 7
        %v921 = vshll.u32 %v901, 16
        %v923 = vor.u32 %v920, %v921
        %v925 = vshrl.u32 %v902, 16
        %v927 = vrot.slane %v925, 7
        %v928 = vshll.u32 %v902, 16
        %v930 = vor.u32 %v927, %v928
        %v932 = vshrl.u32 %v903, 16
        %v934 = vrot.slane %v932, 7
        %v935 = vshll.u32 %v903, 16
        %v937 = vor.u32 %v934, %v935
        %v939 = vshrl.u32 %v904, 16
        %v941 = vrot.slane %v939, 7
        %v942 = vshll.u32 %v904, 16
        %v944 = vor.u32 %v941, %v942
        %v946 = vshrl.u32 %v905, 16
        %v948 = vrot.slane %v946, 7
        %v949 = vshll.u32 %v905, 16
        %v951 = vor.u32 %v948, %v949
        %v953 = vshrl.u32 %v906, 16
        %v955 = vrot.slane %v953, 7
        %v956 = vshll.u32 %v906, 16
        %v958 = vor.u32 %v955, %v956
        %v960 = vshrl.u32 %v907, 16
        %v962 = vrot.slane %v960, 7
        %v963 = vshll.u32 %v907, 16
        %v965 = vor.u32 %v962, %v963
        %v967 = vshrl.u32 %v908, 16
        %v969 = vrot.slane %v967, 7
        %v970 = vshll.u32 %v908, 16
        %v972 = vor.u32 %v969, %v970
        %v974 = vshrl.u32 %v909, 16
        %v976 = vrot.slane %v974, 7
        %v977 = vshll.u32 %v909, 16
        %v979 = vor.u32 %v976, %v977
        %vm1000 = vcmask 1040384
        %vm1001 = vsmask.f32 256
        %vm1002 = vmand %vm1000, %vm1001
        %v1003 = vsel %vm1002, 0, %v916
        %v1004 = vsel %vm1002, 0, %v923
        %v1005 = vsel %vm1002, 0, %v930
        %v1006 = vsel %vm1002, 0, %v937
        %v1007 = vsel %vm1002, 0, %v944
        %v1008 = vsel %vm1002, 0, %v951
        %v1009 = vsel %vm1002, 0, %v958
        %v1010 = vsel %vm1002, 0, %v965
        %v1011 = vsel %vm1002, 0, %v972
        %v1012 = vsel %vm1002, 0, %v979
        %v1013 = vsel %vm1002, %v913, 0
        %v1014 = vsel %vm1002, %v920, 0
        %v1015 = vsel %vm1002, %v927, 0
        %v1016 = vsel %vm1002, %v934, 0
        %v1017 = vsel %vm1002, %v941, 0
        %v1018 = vsel %vm1002, %v948, 0
        %v1019 = vsel %vm1002, %v955, 0
        %v1020 = vsel %vm1002, %v962, 0
        %v1021 = vsel %vm1002, %v969, 0
        %v1022 = vsel %vm1002, %v976, 0
        %v1043 = vunpack.c.l.b16 %v1003
        %v1044 = vunpack.c.h.b16 %v1003
        %v1045 = vunpack.c.l.b16 %v1013
        %v1046 = vunpack.c.l.b16 %v1004
        %v1047 = vunpack.c.h.b16 %v1004
        %v1048 = vunpack.c.l.b16 %v1014
        %v1049 = vunpack.c.l.b16 %v1005
        %v1050 = vunpack.c.h.b16 %v1005
        %v1051 = vunpack.c.l.b16 %v1015
        %v1052 = vunpack.c.l.b16 %v1006
        %v1053 = vunpack.c.h.b16 %v1006
        %v1054 = vunpack.c.l.b16 %v1016
        %v1055 = vunpack.c.l.b16 %v1007
        %v1056 = vunpack.c.h.b16 %v1007
        %v1057 = vunpack.c.l.b16 %v1017
        %v1058 = vunpack.c.l.b16 %v1008
        %v1059 = vunpack.c.h.b16 %v1008
        %v1060 = vunpack.c.l.b16 %v1018
        %v1061 = vunpack.c.l.b16 %v1009
        %v1062 = vunpack.c.h.b16 %v1009
        %v1063 = vunpack.c.l.b16 %v1019
        %v1064 = vunpack.c.l.b16 %v1010
        %v1065 = vunpack.c.h.b16 %v1010
        %v1066 = vunpack.c.l.b16 %v1020
        %v1067 = vunpack.c.l.b16 %v1011
        %v1068 = vunpack.c.h.b16 %v1011
        %v1069 = vunpack.c.l.b16 %v1021
        %v1070 = vunpack.c.l.b16 %v1012
        %v1071 = vunpack.c.h.b16 %v1012
        %v1072 = vunpack.c.l.b16 %v1022
        %v1073 = vpack.c.b16 %v1043, %v1043
        %v1074 = vpack.c.b16 %v1044, %v1044
        %v1075 = vpack.c.b16 %v1045, %v1045
        %v1076 = vpack.c.b16 %v1046, %v1046
        %v1077 = vpack.c.b16 %v1047, %v1047
        %v1078 = vpack.c.b16 %v1048, %v1048
        %v1079 = vpack.c.b16 %v1049, %v1049
        %v1080 = vpack.c.b16 %v1050, %v1050
        %v1081 = vpack.c.b16 %v1051, %v1051
        %v1082 = vpack.c.b16 %v1052, %v1052
        %v1083 = vpack.c.b16 %v1053, %v1053
        %v1084 = vpack.c.b16 %v1054, %v1054
        %v1085 = vpack.c.b16 %v1055, %v1055
        %v1086 = vpack.c.b16 %v1056, %v1056
        %v1087 = vpack.c.b16 %v1057, %v1057
        %v1088 = vpack.c.b16 %v1058, %v1058
        %v1089 = vpack.c.b16 %v1059, %v1059
        %v1090 = vpack.c.b16 %v1060, %v1060
        %v1091 = vpack.c.b16 %v1061, %v1061
        %v1092 = vpack.c.b16 %v1062, %v1062
        %v1093 = vpack.c.b16 %v1063, %v1063
        %v1094 = vpack.c.b16 %v1064, %v1064
        %v1095 = vpack.c.b16 %v1065, %v1065
        %v1096 = vpack.c.b16 %v1066, %v1066
        %v1097 = vpack.c.b16 %v1067, %v1067
        %v1098 = vpack.c.b16 %v1068, %v1068
        %v1099 = vpack.c.b16 %v1069, %v1069
        %v1100 = vpack.c.b16 %v1070, %v1070
        %v1101 = vpack.c.b16 %v1071, %v1071
        %v1102 = vpack.c.b16 %v1072, %v1072
        %1133 = vst [vmem:[#allocation2] sm:$0xf] %v1073
        %1134 = vst [vmem:[#allocation2 + $0x4] sm:$0xf] %v1074
        %1135 = vst [vmem:[#allocation2 + $0x8] sm:$0x1] %v1075
        %1136 = vst [vmem:[#allocation2 + $0xc] sm:$0xf] %v1076
        %1137 = vst [vmem:[#allocation2 + $0x10] sm:$0xf] %v1077
        %1138 = vst [vmem:[#allocation2 + $0x14] sm:$0x1] %v1078
        %1139 = vst [vmem:[#allocation2 + $0x18] sm:$0xf] %v1079
        %1140 = vst [vmem:[#allocation2 + $0x1c] sm:$0xf] %v1080
        %1141 = vst [vmem:[#allocation2 + $0x20] sm:$0x1] %v1081
        %1142 = vst [vmem:[#allocation2 + $0x24] sm:$0xf] %v1082
        %1143 = vst [vmem:[#allocation2 + $0x28] sm:$0xf] %v1083
        %1144 = vst [vmem:[#allocation2 + $0x2c] sm:$0x1] %v1084
        %1145 = vst [vmem:[#allocation2 + $0x30] sm:$0xf] %v1085
        %1146 = vst [vmem:[#allocation2 + $0x34] sm:$0xf] %v1086
        %1147 = vst [vmem:[#allocation2 + $0x38] sm:$0x1] %v1087
        %1148 = vst [vmem:[#allocation2 + $0x3c] sm:$0xf] %v1088
        %1149 = vst [vmem:[#allocation2 + $0x40] sm:$0xf] %v1089
        %1150 = vst [vmem:[#allocation2 + $0x44] sm:$0x1] %v1090
        %1151 = vst [vmem:[#allocation2 + $0x48] sm:$0xf] %v1091
        %1152 = vst [vmem:[#allocation2 + $0x4c] sm:$0xf] %v1092
        %1153 = vst [vmem:[#allocation2 + $0x50] sm:$0x1] %v1093
        %1154 = vst [vmem:[#allocation2 + $0x54] sm:$0xf] %v1094
        %1155 = vst [vmem:[#allocation2 + $0x58] sm:$0xf] %v1095
        %1156 = vst [vmem:[#allocation2 + $0x5c] sm:$0x1] %v1096
        %1157 = vst [vmem:[#allocation2 + $0x60] sm:$0xf] %v1097
        %1158 = vst [vmem:[#allocation2 + $0x64] sm:$0xf] %v1098
        %1159 = vst [vmem:[#allocation2 + $0x68] sm:$0x1] %v1099
        %1160 = vst [vmem:[#allocation2 + $0x6c] sm:$0xf] %v1100
        %1161 = vst [vmem:[#allocation2 + $0x70] sm:$0xf] %v1101
        %1162 = vst [vmem:[#allocation2 + $0x74] sm:$0x1] %v1102
        %v1163 = vld [vmem:[#allocation2] sm:$0xf]
        %v1164 = vld [vmem:[#allocation2 + $0x4] sm:$0xf]
        %v1165 = vld [vmem:[#allocation2 + $0xc] sm:$0xf]
        %v1166 = vld [vmem:[#allocation2 + $0x10] sm:$0xf]
        %v1167 = vld [vmem:[#allocation2 + $0x18] sm:$0xf]
        %v1168 = vld [vmem:[#allocation2 + $0x1c] sm:$0xf]
        %v1169 = vld [vmem:[#allocation2 + $0x24] sm:$0xf]
        %v1170 = vld [vmem:[#allocation2 + $0x28] sm:$0xf]
        %v1171 = vld [vmem:[#allocation2 + $0x30] sm:$0xf]
        %v1172 = vld [vmem:[#allocation2 + $0x34] sm:$0xf]
        %v1173 = vld [vmem:[#allocation2 + $0x3c] sm:$0xf]
        %v1174 = vld [vmem:[#allocation2 + $0x40] sm:$0xf]
        %v1175 = vld [vmem:[#allocation2 + $0x48] sm:$0xf]
        %v1176 = vld [vmem:[#allocation2 + $0x4c] sm:$0xf]
        %v1177 = vld [vmem:[#allocation2 + $0x54] sm:$0xf]
        %v1178 = vld [vmem:[#allocation2 + $0x58] sm:$0xf]
        %v1179 = vld [vmem:[#allocation11] sm:$0xf]
        %v1180 = vld [vmem:[#allocation11 + $0x4] sm:$0xf]
        %v1181 = vld [vmem:[#allocation11 + $0x8] sm:$0xf]
        %v1182 = vld [vmem:[#allocation11 + $0xc] sm:$0xf]
        %v1183 = vld [vmem:[#allocation11 + $0x10] sm:$0xf]
        %v1184 = vld [vmem:[#allocation11 + $0x14] sm:$0xf]
        %v1185 = vld [vmem:[#allocation11 + $0x18] sm:$0xf]
        %v1186 = vld [vmem:[#allocation11 + $0x1c] sm:$0xf]
        %v1187 = vld [vmem:[#allocation11 + $0x20] sm:$0xf]
        %v1188 = vld [vmem:[#allocation11 + $0x24] sm:$0xf]
        %v1189 = vld [vmem:[#allocation11 + $0x28] sm:$0xf]
        %v1190 = vld [vmem:[#allocation11 + $0x2c] sm:$0xf]
        %v1191 = vld [vmem:[#allocation11 + $0x30] sm:$0xf]
        %v1192 = vld [vmem:[#allocation11 + $0x34] sm:$0xf]
        %v1193 = vld [vmem:[#allocation11 + $0x38] sm:$0xf]
        %v1194 = vld [vmem:[#allocation11 + $0x3c] sm:$0xf]
        %v1195 = vld [vmem:[#allocation2 + $0x8] sm:$0x1]
        %v1196 = vld [vmem:[#allocation2 + $0x14] sm:$0x1]
        %v1197 = vld [vmem:[#allocation2 + $0x20] sm:$0x1]
        %v1198 = vld [vmem:[#allocation2 + $0x2c] sm:$0x1]
        %v1199 = vld [vmem:[#allocation2 + $0x38] sm:$0x1]
        %v1200 = vld [vmem:[#allocation2 + $0x44] sm:$0x1]
        %v1201 = vld [vmem:[#allocation2 + $0x50] sm:$0x1]
        %v1202 = vld [vmem:[#allocation2 + $0x5c] sm:$0x1]
        %vm1203 = vsmask.f32 3328
        %vm1204 = vsmask.f32 7440
        %vm1205 = vmor %vm1203, %vm1204
        %v1207 = vshrl.u32 %v1163, 16
        %v1209 = vrot.slane %v1207, 4
        %v1210 = vshll.u32 %v1163, 16
        %v1212 = vrot.slane %v1210, 5
        %v1213 = vor.u32 %v1209, %v1212
        %v1214 = vrot.slane %v1213, 4
        %v1216 = vshll.u32 %v1164, 16
        %v1218 = vrot.slane %v1216, 5
        %v1219 = vsel %vm1205, %v1214, %v1218
        %v1220 = vshrl.u32 %v1164, 16
        %v1222 = vrot.slane %v1220, 4
        %v1223 = vor.u32 %v1222, %v1218
        %v1224 = vrot.slane %v1223, 4
        %v1226 = vshll.u32 %v1195, 16
        %v1228 = vrot.slane %v1226, 5
        %v1229 = vsel %vm1205, %v1224, %v1228
        %v1231 = vshrl.u32 %v1165, 16
        %v1233 = vrot.slane %v1231, 4
        %v1234 = vshll.u32 %v1165, 16
        %v1236 = vrot.slane %v1234, 5
        %v1237 = vor.u32 %v1233, %v1236
        %v1238 = vrot.slane %v1237, 4
        %v1240 = vshll.u32 %v1166, 16
        %v1242 = vrot.slane %v1240, 5
        %v1243 = vsel %vm1205, %v1238, %v1242
        %v1244 = vshrl.u32 %v1166, 16
        %v1246 = vrot.slane %v1244, 4
        %v1247 = vor.u32 %v1246, %v1242
        %v1248 = vrot.slane %v1247, 4
        %v1250 = vshll.u32 %v1196, 16
        %v1252 = vrot.slane %v1250, 5
        %v1253 = vsel %vm1205, %v1248, %v1252
        %v1255 = vshrl.u32 %v1167, 16
        %v1257 = vrot.slane %v1255, 4
        %v1258 = vshll.u32 %v1167, 16
        %v1260 = vrot.slane %v1258, 5
        %v1261 = vor.u32 %v1257, %v1260
        %v1262 = vrot.slane %v1261, 4
        %v1264 = vshll.u32 %v1168, 16
        %v1266 = vrot.slane %v1264, 5
        %v1267 = vsel %vm1205, %v1262, %v1266
        %v1268 = vshrl.u32 %v1168, 16
        %v1270 = vrot.slane %v1268, 4
        %v1271 = vor.u32 %v1270, %v1266
        %v1272 = vrot.slane %v1271, 4
        %v1274 = vshll.u32 %v1197, 16
        %v1276 = vrot.slane %v1274, 5
        %v1277 = vsel %vm1205, %v1272, %v1276
        %v1279 = vshrl.u32 %v1169, 16
        %v1281 = vrot.slane %v1279, 4
        %v1282 = vshll.u32 %v1169, 16
        %v1284 = vrot.slane %v1282, 5
        %v1285 = vor.u32 %v1281, %v1284
        %v1286 = vrot.slane %v1285, 4
        %v1288 = vshll.u32 %v1170, 16
        %v1290 = vrot.slane %v1288, 5
        %v1291 = vsel %vm1205, %v1286, %v1290
        %v1292 = vshrl.u32 %v1170, 16
        %v1294 = vrot.slane %v1292, 4
        %v1295 = vor.u32 %v1294, %v1290
        %v1296 = vrot.slane %v1295, 4
        %v1298 = vshll.u32 %v1198, 16
        %v1300 = vrot.slane %v1298, 5
        %v1301 = vsel %vm1205, %v1296, %v1300
        %v1303 = vshrl.u32 %v1171, 16
        %v1305 = vrot.slane %v1303, 4
        %v1306 = vshll.u32 %v1171, 16
        %v1308 = vrot.slane %v1306, 5
        %v1309 = vor.u32 %v1305, %v1308
        %v1310 = vrot.slane %v1309, 4
        %v1312 = vshll.u32 %v1172, 16
        %v1314 = vrot.slane %v1312, 5
        %v1315 = vsel %vm1205, %v1310, %v1314
        %v1316 = vshrl.u32 %v1172, 16
        %v1318 = vrot.slane %v1316, 4
        %v1319 = vor.u32 %v1318, %v1314
        %v1320 = vrot.slane %v1319, 4
        %v1322 = vshll.u32 %v1199, 16
        %v1324 = vrot.slane %v1322, 5
        %v1325 = vsel %vm1205, %v1320, %v1324
        %v1327 = vshrl.u32 %v1173, 16
        %v1329 = vrot.slane %v1327, 4
        %v1330 = vshll.u32 %v1173, 16
        %v1332 = vrot.slane %v1330, 5
        %v1333 = vor.u32 %v1329, %v1332
        %v1334 = vrot.slane %v1333, 4
        %v1336 = vshll.u32 %v1174, 16
        %v1338 = vrot.slane %v1336, 5
        %v1339 = vsel %vm1205, %v1334, %v1338
        %v1340 = vshrl.u32 %v1174, 16
        %v1342 = vrot.slane %v1340, 4
        %v1343 = vor.u32 %v1342, %v1338
        %v1344 = vrot.slane %v1343, 4
        %v1346 = vshll.u32 %v1200, 16
        %v1348 = vrot.slane %v1346, 5
        %v1349 = vsel %vm1205, %v1344, %v1348
        %v1351 = vshrl.u32 %v1175, 16
        %v1353 = vrot.slane %v1351, 4
        %v1354 = vshll.u32 %v1175, 16
        %v1356 = vrot.slane %v1354, 5
        %v1357 = vor.u32 %v1353, %v1356
        %v1358 = vrot.slane %v1357, 4
        %v1360 = vshll.u32 %v1176, 16
        %v1362 = vrot.slane %v1360, 5
        %v1363 = vsel %vm1205, %v1358, %v1362
        %v1364 = vshrl.u32 %v1176, 16
        %v1366 = vrot.slane %v1364, 4
        %v1367 = vor.u32 %v1366, %v1362
        %v1368 = vrot.slane %v1367, 4
        %v1370 = vshll.u32 %v1201, 16
        %v1372 = vrot.slane %v1370, 5
        %v1373 = vsel %vm1205, %v1368, %v1372
        %v1375 = vshrl.u32 %v1177, 16
        %v1377 = vrot.slane %v1375, 4
        %v1378 = vshll.u32 %v1177, 16
        %v1380 = vrot.slane %v1378, 5
        %v1381 = vor.u32 %v1377, %v1380
        %v1382 = vrot.slane %v1381, 4
        %v1384 = vshll.u32 %v1178, 16
        %v1386 = vrot.slane %v1384, 5
        %v1387 = vsel %vm1205, %v1382, %v1386
        %v1388 = vshrl.u32 %v1178, 16
        %v1390 = vrot.slane %v1388, 4
        %v1391 = vor.u32 %v1390, %v1386
        %v1392 = vrot.slane %v1391, 4
        %v1394 = vshll.u32 %v1202, 16
        %v1396 = vrot.slane %v1394, 5
        %v1397 = vsel %vm1205, %v1392, %v1396
        %s1398 = scalar_lea.vmem [#allocation11], 64
        %v1399 = vld [vmem:[%s1398] sm:$0xf]
        %v1400 = vld [vmem:[%s1398 + $0x4] sm:$0xf]
        %v1401 = vld [vmem:[%s1398 + $0x8] sm:$0xf]
        %v1402 = vld [vmem:[%s1398 + $0xc] sm:$0xf]
        %v1403 = vld [vmem:[%s1398 + $0x10] sm:$0xf]
        %v1404 = vld [vmem:[%s1398 + $0x14] sm:$0xf]
        %v1405 = vld [vmem:[%s1398 + $0x18] sm:$0xf]
        %v1406 = vld [vmem:[%s1398 + $0x1c] sm:$0xf]
        %v1407 = vld [vmem:[%s1398 + $0x20] sm:$0xf]
        %v1408 = vld [vmem:[%s1398 + $0x24] sm:$0xf]
        %v1409 = vld [vmem:[%s1398 + $0x28] sm:$0xf]
        %v1410 = vld [vmem:[%s1398 + $0x2c] sm:$0xf]
        %v1411 = vld [vmem:[%s1398 + $0x30] sm:$0xf]
        %v1412 = vld [vmem:[%s1398 + $0x34] sm:$0xf]
        %v1413 = vld [vmem:[%s1398 + $0x38] sm:$0xf]
        %v1414 = vld [vmem:[%s1398 + $0x3c] sm:$0xf]
        %v1415 = vunpack.c.l.b16 %v1219
        %v1416 = vunpack.c.l.b16 %v1229
        %v1417 = vunpack.c.l.b16 %v1243
        %v1418 = vunpack.c.l.b16 %v1253
        %v1419 = vunpack.c.l.b16 %v1267
        %v1420 = vunpack.c.l.b16 %v1277
        %v1421 = vunpack.c.l.b16 %v1291
        %v1422 = vunpack.c.l.b16 %v1301
        %v1423 = vunpack.c.l.b16 %v1315
        %v1424 = vunpack.c.l.b16 %v1325
        %v1425 = vunpack.c.l.b16 %v1339
        %v1426 = vunpack.c.l.b16 %v1349
        %v1427 = vunpack.c.l.b16 %v1363
        %v1428 = vunpack.c.l.b16 %v1373
        %v1429 = vunpack.c.l.b16 %v1387
        %v1430 = vunpack.c.l.b16 %v1397
        %v1431 = vpack.c.b16 %v1416, %v1415
        %v1432 = vpack.c.b16 %v1418, %v1417
        %v1433 = vpack.c.b16 %v1420, %v1419
        %v1434 = vpack.c.b16 %v1422, %v1421
        %v1435 = vpack.c.b16 %v1424, %v1423
        %v1436 = vpack.c.b16 %v1426, %v1425
        %v1437 = vpack.c.b16 %v1428, %v1427
        %v1438 = vpack.c.b16 %v1430, %v1429
        %v1463 = vunpack.c.l.b16 %v1399
        %v1464 = vunpack.c.l.b16 %v1400
        %v1465 = vunpack.c.l.b16 %v1401
        %v1466 = vunpack.c.l.b16 %v1402
        %v1467 = vunpack.c.l.b16 %v1403
        %v1468 = vunpack.c.l.b16 %v1404
        %v1469 = vunpack.c.l.b16 %v1405
        %v1470 = vunpack.c.l.b16 %v1406
        %v1471 = vunpack.c.l.b16 %v1407
        %v1472 = vunpack.c.l.b16 %v1408
        %v1473 = vunpack.c.l.b16 %v1409
        %v1474 = vunpack.c.l.b16 %v1410
        %v1475 = vunpack.c.l.b16 %v1411
        %v1476 = vunpack.c.l.b16 %v1412
        %v1477 = vunpack.c.l.b16 %v1413
        %v1478 = vunpack.c.l.b16 %v1414
        %v1479 = vpack.c.b16 %v1464, %v1463
        %v1480 = vpack.c.b16 %v1466, %v1465
        %v1481 = vpack.c.b16 %v1468, %v1467
        %v1482 = vpack.c.b16 %v1470, %v1469
        %v1483 = vpack.c.b16 %v1472, %v1471
        %v1484 = vpack.c.b16 %v1474, %v1473
        %v1485 = vpack.c.b16 %v1476, %v1475
        %v1486 = vpack.c.b16 %v1478, %v1477
        %1495 = vmatprep.subr.bf16.mxu0 0
        %1496 = vmatpush1.bf16.msra.mxu0 %v1486
        %1497 = vmatprep.subr.bf16.mxu0 0
        %1498 = vmatpush1.bf16.msra.mxu0 %v1485
        %1499 = vmatprep.subr.bf16.mxu0 0
        %1500 = vmatpush1.bf16.msra.mxu0 %v1484
        %1501 = vmatprep.subr.bf16.mxu0 0
        %1502 = vmatpush1.bf16.msra.mxu0 %v1483
        %1503 = vmatprep.subr.bf16.mxu0 0
        %1504 = vmatpush1.bf16.msra.mxu0 %v1482
        %1505 = vmatprep.subr.bf16.mxu0 0
        %1506 = vmatpush1.bf16.msra.mxu0 %v1481
        %1507 = vmatprep.subr.bf16.mxu0 0
        %1508 = vmatpush1.bf16.msra.mxu0 %v1480
        %1509 = vmatprep.subr.bf16.mxu0 0
        %1510 = vmatpush1.bf16.msra.mxu0 %v1479
        %1511 = vmatprep.subr.bf16.mxu0 0
        %1512 = vmatpush2.bf16.msra.mxu0 0
        %1513 = vmatprep.subr.bf16.mxu0 0
        %1514 = vmatpush2.bf16.msra.mxu0 0
        %1515 = vmatprep.subr.bf16.mxu0 0
        %1516 = vmatpush2.bf16.msra.mxu0 0
        %1517 = vmatprep.subr.bf16.mxu0 0
        %1518 = vmatpush2.bf16.msra.mxu0 0
        %1519 = vmatprep.subr.bf16.mxu0 0
        %1520 = vmatpush2.bf16.msra.mxu0 0
        %1521 = vmatprep.subr.bf16.mxu0 0
        %1522 = vmatpush2.bf16.msra.mxu0 0
        %1523 = vmatprep.subr.bf16.mxu0 0
        %1524 = vmatpush2.bf16.msra.mxu0 0
        %1525 = vmatprep.subr.bf16.mxu0 0
        %1526 = vmatpush2.bf16.msra.mxu0 0
        %1527 = vmatprep.mubr.bf16.mxu0 0
        %1528 = vmatmul.mubr.bf16.gmra.mxu0 %v1431
        %v1529 = vpop.f32.mrf.mxu0
        %v1530 = vadd.f32 0.0, %v1529
        %v1531 = vpop.f32.mrf.mxu0
        %v1532 = vpop.f32.mrf.mxu0
        %v1533 = vadd.f32 0.0, %v1532
        %v1534 = vpop.f32.mrf.mxu0
        %1535 = vmatprep.mubr.bf16.mxu0 0
        %1536 = vmatmul.mubr.bf16.gmra.mxu0 %v1432
        %v1537 = vpop.f32.mrf.mxu0
        %v1538 = vadd.f32 0.0, %v1537
        %v1539 = vpop.f32.mrf.mxu0
        %v1540 = vpop.f32.mrf.mxu0
        %v1541 = vadd.f32 0.0, %v1540
        %v1542 = vpop.f32.mrf.mxu0
        %1543 = vmatprep.mubr.bf16.mxu0 0
        %1544 = vmatmul.mubr.bf16.gmra.mxu0 %v1433
        %v1545 = vpop.f32.mrf.mxu0
        %v1546 = vadd.f32 0.0, %v1545
        %v1547 = vpop.f32.mrf.mxu0
        %v1548 = vpop.f32.mrf.mxu0
        %v1549 = vadd.f32 0.0, %v1548
        %v1550 = vpop.f32.mrf.mxu0
        %1551 = vmatprep.mubr.bf16.mxu0 0
        %1552 = vmatmul.mubr.bf16.gmra.mxu0 %v1434
        %v1553 = vpop.f32.mrf.mxu0
        %v1554 = vadd.f32 0.0, %v1553
        %v1555 = vpop.f32.mrf.mxu0
        %v1556 = vpop.f32.mrf.mxu0
        %v1557 = vadd.f32 0.0, %v1556
        %v1558 = vpop.f32.mrf.mxu0
        %1559 = vmatprep.mubr.bf16.mxu0 0
        %1560 = vmatmul.mubr.bf16.gmra.mxu0 %v1435
        %v1561 = vpop.f32.mrf.mxu0
        %v1562 = vadd.f32 0.0, %v1561
        %v1563 = vpop.f32.mrf.mxu0
        %v1564 = vpop.f32.mrf.mxu0
        %v1565 = vadd.f32 0.0, %v1564
        %v1566 = vpop.f32.mrf.mxu0
        %1567 = vmatprep.mubr.bf16.mxu0 0
        %1568 = vmatmul.mubr.bf16.gmra.mxu0 %v1436
        %v1569 = vpop.f32.mrf.mxu0
        %v1570 = vadd.f32 0.0, %v1569
        %v1571 = vpop.f32.mrf.mxu0
        %v1572 = vpop.f32.mrf.mxu0
        %v1573 = vadd.f32 0.0, %v1572
        %v1574 = vpop.f32.mrf.mxu0
        %1575 = vmatprep.mubr.bf16.mxu0 0
        %1576 = vmatmul.mubr.bf16.gmra.mxu0 %v1437
        %v1577 = vpop.f32.mrf.mxu0
        %v1578 = vadd.f32 0.0, %v1577
        %v1579 = vpop.f32.mrf.mxu0
        %v1580 = vpop.f32.mrf.mxu0
        %v1581 = vadd.f32 0.0, %v1580
        %v1582 = vpop.f32.mrf.mxu0
        %1583 = vmatprep.mubr.bf16.mxu0 0
        %1584 = vmatmul.mubr.bf16.gmra.mxu0 %v1438
        %v1585 = vpop.f32.mrf.mxu0
        %v1586 = vadd.f32 0.0, %v1585
        %v1587 = vpop.f32.mrf.mxu0
        %v1588 = vpop.f32.mrf.mxu0
        %v1589 = vadd.f32 0.0, %v1588
        %v1590 = vpop.f32.mrf.mxu0
        %1591 = vdwg.mxu0
        %v1608 = vunpack.c.l.b16 %v1163
        %v1609 = vunpack.c.l.b16 %v1164
        %v1610 = vunpack.c.l.b16 %v1165
        %v1611 = vunpack.c.l.b16 %v1166
        %v1612 = vunpack.c.l.b16 %v1167
        %v1613 = vunpack.c.l.b16 %v1168
        %v1614 = vunpack.c.l.b16 %v1169
        %v1615 = vunpack.c.l.b16 %v1170
        %v1616 = vunpack.c.l.b16 %v1171
        %v1617 = vunpack.c.l.b16 %v1172
        %v1618 = vunpack.c.l.b16 %v1173
        %v1619 = vunpack.c.l.b16 %v1174
        %v1620 = vunpack.c.l.b16 %v1175
        %v1621 = vunpack.c.l.b16 %v1176
        %v1622 = vunpack.c.l.b16 %v1177
        %v1623 = vunpack.c.l.b16 %v1178
        %v1624 = vpack.c.b16 %v1609, %v1608
        %v1625 = vpack.c.b16 %v1611, %v1610
        %v1626 = vpack.c.b16 %v1613, %v1612
        %v1627 = vpack.c.b16 %v1615, %v1614
        %v1628 = vpack.c.b16 %v1617, %v1616
        %v1629 = vpack.c.b16 %v1619, %v1618
        %v1630 = vpack.c.b16 %v1621, %v1620
        %v1631 = vpack.c.b16 %v1623, %v1622
        %v1656 = vunpack.c.l.b16 %v1179
        %v1657 = vunpack.c.l.b16 %v1180
        %v1658 = vunpack.c.l.b16 %v1181
        %v1659 = vunpack.c.l.b16 %v1182
        %v1660 = vunpack.c.l.b16 %v1183
        %v1661 = vunpack.c.l.b16 %v1184
        %v1662 = vunpack.c.l.b16 %v1185
        %v1663 = vunpack.c.l.b16 %v1186
        %v1664 = vunpack.c.l.b16 %v1187
        %v1665 = vunpack.c.l.b16 %v1188
        %v1666 = vunpack.c.l.b16 %v1189
        %v1667 = vunpack.c.l.b16 %v1190
        %v1668 = vunpack.c.l.b16 %v1191
        %v1669 = vunpack.c.l.b16 %v1192
        %v1670 = vunpack.c.l.b16 %v1193
        %v1671 = vunpack.c.l.b16 %v1194
        %v1672 = vpack.c.b16 %v1657, %v1656
        %v1673 = vpack.c.b16 %v1659, %v1658
        %v1674 = vpack.c.b16 %v1661, %v1660
        %v1675 = vpack.c.b16 %v1663, %v1662
        %v1676 = vpack.c.b16 %v1665, %v1664
        %v1677 = vpack.c.b16 %v1667, %v1666
        %v1678 = vpack.c.b16 %v1669, %v1668
        %v1679 = vpack.c.b16 %v1671, %v1670
        %1688 = vmatprep.subr.bf16.mxu0 0
        %1689 = vmatpush1.bf16.msra.mxu0 %v1679
        %1690 = vmatprep.subr.bf16.mxu0 0
        %1691 = vmatpush1.bf16.msra.mxu0 %v1678
        %1692 = vmatprep.subr.bf16.mxu0 0
        %1693 = vmatpush1.bf16.msra.mxu0 %v1677
        %1694 = vmatprep.subr.bf16.mxu0 0
        %1695 = vmatpush1.bf16.msra.mxu0 %v1676
        %1696 = vmatprep.subr.bf16.mxu0 0
        %1697 = vmatpush1.bf16.msra.mxu0 %v1675
        %1698 = vmatprep.subr.bf16.mxu0 0
        %1699 = vmatpush1.bf16.msra.mxu0 %v1674
        %1700 = vmatprep.subr.bf16.mxu0 0
        %1701 = vmatpush1.bf16.msra.mxu0 %v1673
        %1702 = vmatprep.subr.bf16.mxu0 0
        %1703 = vmatpush1.bf16.msra.mxu0 %v1672
        %1704 = vmatprep.subr.bf16.mxu0 0
        %1705 = vmatpush2.bf16.msra.mxu0 0
        %1706 = vmatprep.subr.bf16.mxu0 0
        %1707 = vmatpush2.bf16.msra.mxu0 0
        %1708 = vmatprep.subr.bf16.mxu0 0
        %1709 = vmatpush2.bf16.msra.mxu0 0
        %1710 = vmatprep.subr.bf16.mxu0 0
        %1711 = vmatpush2.bf16.msra.mxu0 0
        %1712 = vmatprep.subr.bf16.mxu0 0
        %1713 = vmatpush2.bf16.msra.mxu0 0
        %1714 = vmatprep.subr.bf16.mxu0 0
        %1715 = vmatpush2.bf16.msra.mxu0 0
        %1716 = vmatprep.subr.bf16.mxu0 0
        %1717 = vmatpush2.bf16.msra.mxu0 0
        %1718 = vmatprep.subr.bf16.mxu0 0
        %1719 = vmatpush2.bf16.msra.mxu0 0
        %1720 = vmatprep.mubr.bf16.mxu0 0
        %1721 = vmatmul.mubr.bf16.gmra.mxu0 %v1624
        %v1722 = vpop.f32.mrf.mxu0
        %v1723 = vadd.f32 %v1530, %v1722
        %v1724 = vpop.f32.mrf.mxu0
        %v1725 = vpop.f32.mrf.mxu0
        %v1726 = vadd.f32 %v1533, %v1725
        %v1727 = vpop.f32.mrf.mxu0
        %1728 = vmatprep.mubr.bf16.mxu0 0
        %1729 = vmatmul.mubr.bf16.gmra.mxu0 %v1625
        %v1730 = vpop.f32.mrf.mxu0
        %v1731 = vadd.f32 %v1538, %v1730
        %v1732 = vpop.f32.mrf.mxu0
        %v1733 = vpop.f32.mrf.mxu0
        %v1734 = vadd.f32 %v1541, %v1733
        %v1735 = vpop.f32.mrf.mxu0
        %1736 = vmatprep.mubr.bf16.mxu0 0
        %1737 = vmatmul.mubr.bf16.gmra.mxu0 %v1626
        %v1738 = vpop.f32.mrf.mxu0
        %v1739 = vadd.f32 %v1546, %v1738
        %v1740 = vpop.f32.mrf.mxu0
        %v1741 = vpop.f32.mrf.mxu0
        %v1742 = vadd.f32 %v1549, %v1741
        %v1743 = vpop.f32.mrf.mxu0
        %1744 = vmatprep.mubr.bf16.mxu0 0
        %1745 = vmatmul.mubr.bf16.gmra.mxu0 %v1627
        %v1746 = vpop.f32.mrf.mxu0
        %v1747 = vadd.f32 %v1554, %v1746
        %v1748 = vpop.f32.mrf.mxu0
        %v1749 = vpop.f32.mrf.mxu0
        %v1750 = vadd.f32 %v1557, %v1749
        %v1751 = vpop.f32.mrf.mxu0
        %1752 = vmatprep.mubr.bf16.mxu0 0
        %1753 = vmatmul.mubr.bf16.gmra.mxu0 %v1628
        %v1754 = vpop.f32.mrf.mxu0
        %v1755 = vadd.f32 %v1562, %v1754
        %v1756 = vpop.f32.mrf.mxu0
        %v1757 = vpop.f32.mrf.mxu0
        %v1758 = vadd.f32 %v1565, %v1757
        %v1759 = vpop.f32.mrf.mxu0
        %1760 = vmatprep.mubr.bf16.mxu0 0
        %1761 = vmatmul.mubr.bf16.gmra.mxu0 %v1629
        %v1762 = vpop.f32.mrf.mxu0
        %v1763 = vadd.f32 %v1570, %v1762
        %v1764 = vpop.f32.mrf.mxu0
        %v1765 = vpop.f32.mrf.mxu0
        %v1766 = vadd.f32 %v1573, %v1765
        %v1767 = vpop.f32.mrf.mxu0
        %1768 = vmatprep.mubr.bf16.mxu0 0
        %1769 = vmatmul.mubr.bf16.gmra.mxu0 %v1630
        %v1770 = vpop.f32.mrf.mxu0
        %v1771 = vadd.f32 %v1578, %v1770
        %v1772 = vpop.f32.mrf.mxu0
        %v1773 = vpop.f32.mrf.mxu0
        %v1774 = vadd.f32 %v1581, %v1773
        %v1775 = vpop.f32.mrf.mxu0
        %1776 = vmatprep.mubr.bf16.mxu0 0
        %1777 = vmatmul.mubr.bf16.gmra.mxu0 %v1631
        %v1778 = vpop.f32.mrf.mxu0
        %v1779 = vadd.f32 %v1586, %v1778
        %v1780 = vpop.f32.mrf.mxu0
        %v1781 = vpop.f32.mrf.mxu0
        %v1782 = vadd.f32 %v1589, %v1781
        %v1783 = vpop.f32.mrf.mxu0
        %1784 = vdwg.mxu0
        %v1785 = vld [vmem:[#allocation2] sm:$0xe]
        %v1786 = vld [vmem:[#allocation2 + $0xc] sm:$0xe]
        %v1787 = vld [vmem:[#allocation2 + $0x18] sm:$0xe]
        %v1788 = vld [vmem:[#allocation2 + $0x24] sm:$0xe]
        %v1789 = vld [vmem:[#allocation2 + $0x30] sm:$0xe]
        %v1790 = vld [vmem:[#allocation2 + $0x3c] sm:$0xe]
        %v1791 = vld [vmem:[#allocation2 + $0x48] sm:$0xe]
        %v1792 = vld [vmem:[#allocation2 + $0x54] sm:$0xe]
        %vm1809 = vcmask 1042432
        %vm1810 = vcmask 1046532
        %vm1811 = vmor %vm1809, %vm1810
        %v1812 = vrot.slane %v1785, 5
        %v1813 = vrot.slane %v1812, 4
        %v1814 = vrot.slane %v1164, 5
        %v1815 = vsel %vm1811, %v1813, %v1814
        %v1816 = vrot.slane %v1814, 4
        %v1817 = vrot.slane %v1195, 5
        %v1818 = vsel %vm1811, %v1816, %v1817
        %v1819 = vrot.slane %v1786, 5
        %v1820 = vrot.slane %v1819, 4
        %v1821 = vrot.slane %v1166, 5
        %v1822 = vsel %vm1811, %v1820, %v1821
        %v1823 = vrot.slane %v1821, 4
        %v1824 = vrot.slane %v1196, 5
        %v1825 = vsel %vm1811, %v1823, %v1824
        %v1826 = vrot.slane %v1787, 5
        %v1827 = vrot.slane %v1826, 4
        %v1828 = vrot.slane %v1168, 5
        %v1829 = vsel %vm1811, %v1827, %v1828
        %v1830 = vrot.slane %v1828, 4
        %v1831 = vrot.slane %v1197, 5
        %v1832 = vsel %vm1811, %v1830, %v1831
        %v1833 = vrot.slane %v1788, 5
        %v1834 = vrot.slane %v1833, 4
        %v1835 = vrot.slane %v1170, 5
        %v1836 = vsel %vm1811, %v1834, %v1835
        %v1837 = vrot.slane %v1835, 4
        %v1838 = vrot.slane %v1198, 5
        %v1839 = vsel %vm1811, %v1837, %v1838
        %v1840 = vrot.slane %v1789, 5
        %v1841 = vrot.slane %v1840, 4
        %v1842 = vrot.slane %v1172, 5
        %v1843 = vsel %vm1811, %v1841, %v1842
        %v1844 = vrot.slane %v1842, 4
        %v1845 = vrot.slane %v1199, 5
        %v1846 = vsel %vm1811, %v1844, %v1845
        %v1847 = vrot.slane %v1790, 5
        %v1848 = vrot.slane %v1847, 4
        %v1849 = vrot.slane %v1174, 5
        %v1850 = vsel %vm1811, %v1848, %v1849
        %v1851 = vrot.slane %v1849, 4
        %v1852 = vrot.slane %v1200, 5
        %v1853 = vsel %vm1811, %v1851, %v1852
        %v1854 = vrot.slane %v1791, 5
        %v1855 = vrot.slane %v1854, 4
        %v1856 = vrot.slane %v1176, 5
        %v1857 = vsel %vm1811, %v1855, %v1856
        %v1858 = vrot.slane %v1856, 4
        %v1859 = vrot.slane %v1201, 5
        %v1860 = vsel %vm1811, %v1858, %v1859
        %v1861 = vrot.slane %v1792, 5
        %v1862 = vrot.slane %v1861, 4
        %v1863 = vrot.slane %v1178, 5
        %v1864 = vsel %vm1811, %v1862, %v1863
        %v1865 = vrot.slane %v1863, 4
        %v1866 = vrot.slane %v1202, 5
        %v1867 = vsel %vm1811, %v1865, %v1866
        %s1868 = scalar_lea.vmem [#allocation11], 128
        %v1869 = vld [vmem:[%s1868] sm:$0xf]
        %v1870 = vld [vmem:[%s1868 + $0x4] sm:$0xf]
        %v1871 = vld [vmem:[%s1868 + $0x8] sm:$0xf]
        %v1872 = vld [vmem:[%s1868 + $0xc] sm:$0xf]
        %v1873 = vld [vmem:[%s1868 + $0x10] sm:$0xf]
        %v1874 = vld [vmem:[%s1868 + $0x14] sm:$0xf]
        %v1875 = vld [vmem:[%s1868 + $0x18] sm:$0xf]
        %v1876 = vld [vmem:[%s1868 + $0x1c] sm:$0xf]
        %v1877 = vld [vmem:[%s1868 + $0x20] sm:$0xf]
        %v1878 = vld [vmem:[%s1868 + $0x24] sm:$0xf]
        %v1879 = vld [vmem:[%s1868 + $0x28] sm:$0xf]
        %v1880 = vld [vmem:[%s1868 + $0x2c] sm:$0xf]
        %v1881 = vld [vmem:[%s1868 + $0x30] sm:$0xf]
        %v1882 = vld [vmem:[%s1868 + $0x34] sm:$0xf]
        %v1883 = vld [vmem:[%s1868 + $0x38] sm:$0xf]
        %v1884 = vld [vmem:[%s1868 + $0x3c] sm:$0xf]
        %v1885 = vunpack.c.l.b16 %v1815
        %v1886 = vunpack.c.l.b16 %v1818
        %v1887 = vunpack.c.l.b16 %v1822
        %v1888 = vunpack.c.l.b16 %v1825
        %v1889 = vunpack.c.l.b16 %v1829
        %v1890 = vunpack.c.l.b16 %v1832
        %v1891 = vunpack.c.l.b16 %v1836
        %v1892 = vunpack.c.l.b16 %v1839
        %v1893 = vunpack.c.l.b16 %v1843
        %v1894 = vunpack.c.l.b16 %v1846
        %v1895 = vunpack.c.l.b16 %v1850
        %v1896 = vunpack.c.l.b16 %v1853
        %v1897 = vunpack.c.l.b16 %v1857
        %v1898 = vunpack.c.l.b16 %v1860
        %v1899 = vunpack.c.l.b16 %v1864
        %v1900 = vunpack.c.l.b16 %v1867
        %v1901 = vpack.c.b16 %v1886, %v1885
        %v1902 = vpack.c.b16 %v1888, %v1887
        %v1903 = vpack.c.b16 %v1890, %v1889
        %v1904 = vpack.c.b16 %v1892, %v1891
        %v1905 = vpack.c.b16 %v1894, %v1893
        %v1906 = vpack.c.b16 %v1896, %v1895
        %v1907 = vpack.c.b16 %v1898, %v1897
        %v1908 = vpack.c.b16 %v1900, %v1899
        %v1933 = vunpack.c.l.b16 %v1869
        %v1934 = vunpack.c.l.b16 %v1870
        %v1935 = vunpack.c.l.b16 %v1871
        %v1936 = vunpack.c.l.b16 %v1872
        %v1937 = vunpack.c.l.b16 %v1873
        %v1938 = vunpack.c.l.b16 %v1874
        %v1939 = vunpack.c.l.b16 %v1875
        %v1940 = vunpack.c.l.b16 %v1876
        %v1941 = vunpack.c.l.b16 %v1877
        %v1942 = vunpack.c.l.b16 %v1878
        %v1943 = vunpack.c.l.b16 %v1879
        %v1944 = vunpack.c.l.b16 %v1880
        %v1945 = vunpack.c.l.b16 %v1881
        %v1946 = vunpack.c.l.b16 %v1882
        %v1947 = vunpack.c.l.b16 %v1883
        %v1948 = vunpack.c.l.b16 %v1884
        %v1949 = vpack.c.b16 %v1934, %v1933
        %v1950 = vpack.c.b16 %v1936, %v1935
        %v1951 = vpack.c.b16 %v1938, %v1937
        %v1952 = vpack.c.b16 %v1940, %v1939
        %v1953 = vpack.c.b16 %v1942, %v1941
        %v1954 = vpack.c.b16 %v1944, %v1943
        %v1955 = vpack.c.b16 %v1946, %v1945
        %v1956 = vpack.c.b16 %v1948, %v1947
        %1965 = vmatprep.subr.bf16.mxu0 0
        %1966 = vmatpush1.bf16.msra.mxu0 %v1956
        %1967 = vmatprep.subr.bf16.mxu0 0
        %1968 = vmatpush1.bf16.msra.mxu0 %v1955
        %1969 = vmatprep.subr.bf16.mxu0 0
        %1970 = vmatpush1.bf16.msra.mxu0 %v1954
        %1971 = vmatprep.subr.bf16.mxu0 0
        %1972 = vmatpush1.bf16.msra.mxu0 %v1953
        %1973 = vmatprep.subr.bf16.mxu0 0
        %1974 = vmatpush1.bf16.msra.mxu0 %v1952
        %1975 = vmatprep.subr.bf16.mxu0 0
        %1976 = vmatpush1.bf16.msra.mxu0 %v1951
        %1977 = vmatprep.subr.bf16.mxu0 0
        %1978 = vmatpush1.bf16.msra.mxu0 %v1950
        %1979 = vmatprep.subr.bf16.mxu0 0
        %1980 = vmatpush1.bf16.msra.mxu0 %v1949
        %1981 = vmatprep.subr.bf16.mxu0 0
        %1982 = vmatpush2.bf16.msra.mxu0 0
        %1983 = vmatprep.subr.bf16.mxu0 0
        %1984 = vmatpush2.bf16.msra.mxu0 0
        %1985 = vmatprep.subr.bf16.mxu0 0
        %1986 = vmatpush2.bf16.msra.mxu0 0
        %1987 = vmatprep.subr.bf16.mxu0 0
        %1988 = vmatpush2.bf16.msra.mxu0 0
        %1989 = vmatprep.subr.bf16.mxu0 0
        %1990 = vmatpush2.bf16.msra.mxu0 0
        %1991 = vmatprep.subr.bf16.mxu0 0
        %1992 = vmatpush2.bf16.msra.mxu0 0
        %1993 = vmatprep.subr.bf16.mxu0 0
        %1994 = vmatpush2.bf16.msra.mxu0 0
        %1995 = vmatprep.subr.bf16.mxu0 0
        %1996 = vmatpush2.bf16.msra.mxu0 0
        %1997 = vmatprep.mubr.bf16.mxu0 0
        %1998 = vmatmul.mubr.bf16.gmra.mxu0 %v1901
        %v1999 = vpop.f32.mrf.mxu0
        %v2000 = vadd.f32 0.0, %v1999
        %v2001 = vpop.f32.mrf.mxu0
        %v2002 = vpop.f32.mrf.mxu0
        %v2003 = vadd.f32 0.0, %v2002
        %v2004 = vpop.f32.mrf.mxu0
        %2005 = vmatprep.mubr.bf16.mxu0 0
        %2006 = vmatmul.mubr.bf16.gmra.mxu0 %v1902
        %v2007 = vpop.f32.mrf.mxu0
        %v2008 = vadd.f32 0.0, %v2007
        %v2009 = vpop.f32.mrf.mxu0
        %v2010 = vpop.f32.mrf.mxu0
        %v2011 = vadd.f32 0.0, %v2010
        %v2012 = vpop.f32.mrf.mxu0
        %2013 = vmatprep.mubr.bf16.mxu0 0
        %2014 = vmatmul.mubr.bf16.gmra.mxu0 %v1903
        %v2015 = vpop.f32.mrf.mxu0
        %v2016 = vadd.f32 0.0, %v2015
        %v2017 = vpop.f32.mrf.mxu0
        %v2018 = vpop.f32.mrf.mxu0
        %v2019 = vadd.f32 0.0, %v2018
        %v2020 = vpop.f32.mrf.mxu0
        %2021 = vmatprep.mubr.bf16.mxu0 0
        %2022 = vmatmul.mubr.bf16.gmra.mxu0 %v1904
        %v2023 = vpop.f32.mrf.mxu0
        %v2024 = vadd.f32 0.0, %v2023
        %v2025 = vpop.f32.mrf.mxu0
        %v2026 = vpop.f32.mrf.mxu0
        %v2027 = vadd.f32 0.0, %v2026
        %v2028 = vpop.f32.mrf.mxu0
        %2029 = vmatprep.mubr.bf16.mxu0 0
        %2030 = vmatmul.mubr.bf16.gmra.mxu0 %v1905
        %v2031 = vpop.f32.mrf.mxu0
        %v2032 = vadd.f32 0.0, %v2031
        %v2033 = vpop.f32.mrf.mxu0
        %v2034 = vpop.f32.mrf.mxu0
        %v2035 = vadd.f32 0.0, %v2034
        %v2036 = vpop.f32.mrf.mxu0
        %2037 = vmatprep.mubr.bf16.mxu0 0
        %2038 = vmatmul.mubr.bf16.gmra.mxu0 %v1906
        %v2039 = vpop.f32.mrf.mxu0
        %v2040 = vadd.f32 0.0, %v2039
        %v2041 = vpop.f32.mrf.mxu0
        %v2042 = vpop.f32.mrf.mxu0
        %v2043 = vadd.f32 0.0, %v2042
        %v2044 = vpop.f32.mrf.mxu0
        %2045 = vmatprep.mubr.bf16.mxu0 0
        %2046 = vmatmul.mubr.bf16.gmra.mxu0 %v1907
        %v2047 = vpop.f32.mrf.mxu0
        %v2048 = vadd.f32 0.0, %v2047
        %v2049 = vpop.f32.mrf.mxu0
        %v2050 = vpop.f32.mrf.mxu0
        %v2051 = vadd.f32 0.0, %v2050
        %v2052 = vpop.f32.mrf.mxu0
        %2053 = vmatprep.mubr.bf16.mxu0 0
        %2054 = vmatmul.mubr.bf16.gmra.mxu0 %v1908
        %v2055 = vpop.f32.mrf.mxu0
        %v2056 = vadd.f32 0.0, %v2055
        %v2057 = vpop.f32.mrf.mxu0
        %v2058 = vpop.f32.mrf.mxu0
        %v2059 = vadd.f32 0.0, %v2058
        %v2060 = vpop.f32.mrf.mxu0
        %2061 = vdwg.mxu0
        %v2062 = vadd.f32 %v1723, %v2000
        %v2063 = vadd.f32 %v1726, %v2003
        %v2064 = vadd.f32 %v1731, %v2008
        %v2065 = vadd.f32 %v1734, %v2011
        %v2066 = vadd.f32 %v1739, %v2016
        %v2067 = vadd.f32 %v1742, %v2019
        %v2068 = vadd.f32 %v1747, %v2024
        %v2069 = vadd.f32 %v1750, %v2027
        %v2070 = vadd.f32 %v1755, %v2032
        %v2071 = vadd.f32 %v1758, %v2035
        %v2072 = vadd.f32 %v1763, %v2040
        %v2073 = vadd.f32 %v1766, %v2043
        %v2074 = vadd.f32 %v1771, %v2048
        %v2075 = vadd.f32 %v1774, %v2051
        %v2076 = vadd.f32 %v1779, %v2056
        %v2077 = vadd.f32 %v1782, %v2059
        %s2078 = scalar_lea.vmem [#allocation2], 12
        %v2079 = vld [vmem:[%s2078] sm:$0xf]
        %v2080 = vld [vmem:[%s2078 + $0x4] sm:$0xf]
        %v2081 = vld [vmem:[%s2078 + $0xc] sm:$0xf]
        %v2082 = vld [vmem:[%s2078 + $0x10] sm:$0xf]
        %v2083 = vld [vmem:[%s2078 + $0x18] sm:$0xf]
        %v2084 = vld [vmem:[%s2078 + $0x1c] sm:$0xf]
        %v2085 = vld [vmem:[%s2078 + $0x24] sm:$0xf]
        %v2086 = vld [vmem:[%s2078 + $0x28] sm:$0xf]
        %v2087 = vld [vmem:[%s2078 + $0x30] sm:$0xf]
        %v2088 = vld [vmem:[%s2078 + $0x34] sm:$0xf]
        %v2089 = vld [vmem:[%s2078 + $0x3c] sm:$0xf]
        %v2090 = vld [vmem:[%s2078 + $0x40] sm:$0xf]
        %v2091 = vld [vmem:[%s2078 + $0x48] sm:$0xf]
        %v2092 = vld [vmem:[%s2078 + $0x4c] sm:$0xf]
        %v2093 = vld [vmem:[%s2078 + $0x54] sm:$0xf]
        %v2094 = vld [vmem:[%s2078 + $0x58] sm:$0xf]
        %s2095 = scalar_lea.vmem [#allocation11], 192
        %v2096 = vld [vmem:[%s2095] sm:$0xf]
        %v2097 = vld [vmem:[%s2095 + $0x4] sm:$0xf]
        %v2098 = vld [vmem:[%s2095 + $0x8] sm:$0xf]
        %v2099 = vld [vmem:[%s2095 + $0xc] sm:$0xf]
        %v2100 = vld [vmem:[%s2095 + $0x10] sm:$0xf]
        %v2101 = vld [vmem:[%s2095 + $0x14] sm:$0xf]
        %v2102 = vld [vmem:[%s2095 + $0x18] sm:$0xf]
        %v2103 = vld [vmem:[%s2095 + $0x1c] sm:$0xf]
        %v2104 = vld [vmem:[%s2095 + $0x20] sm:$0xf]
        %v2105 = vld [vmem:[%s2095 + $0x24] sm:$0xf]
        %v2106 = vld [vmem:[%s2095 + $0x28] sm:$0xf]
        %v2107 = vld [vmem:[%s2095 + $0x2c] sm:$0xf]
        %v2108 = vld [vmem:[%s2095 + $0x30] sm:$0xf]
        %v2109 = vld [vmem:[%s2095 + $0x34] sm:$0xf]
        %v2110 = vld [vmem:[%s2095 + $0x38] sm:$0xf]
        %v2111 = vld [vmem:[%s2095 + $0x3c] sm:$0xf]
        %v2128 = vunpack.c.l.b16 %v2079
        %v2129 = vunpack.c.l.b16 %v2080
        %v2130 = vunpack.c.l.b16 %v2081
        %v2131 = vunpack.c.l.b16 %v2082
        %v2132 = vunpack.c.l.b16 %v2083
        %v2133 = vunpack.c.l.b16 %v2084
        %v2134 = vunpack.c.l.b16 %v2085
        %v2135 = vunpack.c.l.b16 %v2086
        %v2136 = vunpack.c.l.b16 %v2087
        %v2137 = vunpack.c.l.b16 %v2088
        %v2138 = vunpack.c.l.b16 %v2089
        %v2139 = vunpack.c.l.b16 %v2090
        %v2140 = vunpack.c.l.b16 %v2091
        %v2141 = vunpack.c.l.b16 %v2092
        %v2142 = vunpack.c.l.b16 %v2093
        %v2143 = vunpack.c.l.b16 %v2094
        %v2144 = vpack.c.b16 %v2129, %v2128
        %v2145 = vpack.c.b16 %v2131, %v2130
        %v2146 = vpack.c.b16 %v2133, %v2132
        %v2147 = vpack.c.b16 %v2135, %v2134
        %v2148 = vpack.c.b16 %v2137, %v2136
        %v2149 = vpack.c.b16 %v2139, %v2138
        %v2150 = vpack.c.b16 %v2141, %v2140
        %v2151 = vpack.c.b16 %v2143, %v2142
        %v2176 = vunpack.c.l.b16 %v2096
        %v2177 = vunpack.c.l.b16 %v2097
        %v2178 = vunpack.c.l.b16 %v2098
        %v2179 = vunpack.c.l.b16 %v2099
        %v2180 = vunpack.c.l.b16 %v2100
        %v2181 = vunpack.c.l.b16 %v2101
        %v2182 = vunpack.c.l.b16 %v2102
        %v2183 = vunpack.c.l.b16 %v2103
        %v2184 = vunpack.c.l.b16 %v2104
        %v2185 = vunpack.c.l.b16 %v2105
        %v2186 = vunpack.c.l.b16 %v2106
        %v2187 = vunpack.c.l.b16 %v2107
        %v2188 = vunpack.c.l.b16 %v2108
        %v2189 = vunpack.c.l.b16 %v2109
        %v2190 = vunpack.c.l.b16 %v2110
        %v2191 = vunpack.c.l.b16 %v2111
        %v2192 = vpack.c.b16 %v2177, %v2176
        %v2193 = vpack.c.b16 %v2179, %v2178
        %v2194 = vpack.c.b16 %v2181, %v2180
        %v2195 = vpack.c.b16 %v2183, %v2182
        %v2196 = vpack.c.b16 %v2185, %v2184
        %v2197 = vpack.c.b16 %v2187, %v2186
        %v2198 = vpack.c.b16 %v2189, %v2188
        %v2199 = vpack.c.b16 %v2191, %v2190
        %2208 = vmatprep.subr.bf16.mxu0 0
        %2209 = vmatpush1.bf16.msra.mxu0 %v2199
        %2210 = vmatprep.subr.bf16.mxu0 0
        %2211 = vmatpush1.bf16.msra.mxu0 %v2198
        %2212 = vmatprep.subr.bf16.mxu0 0
        %2213 = vmatpush1.bf16.msra.mxu0 %v2197
        %2214 = vmatprep.subr.bf16.mxu0 0
        %2215 = vmatpush1.bf16.msra.mxu0 %v2196
        %2216 = vmatprep.subr.bf16.mxu0 0
        %2217 = vmatpush1.bf16.msra.mxu0 %v2195
        %2218 = vmatprep.subr.bf16.mxu0 0
        %2219 = vmatpush1.bf16.msra.mxu0 %v2194
        %2220 = vmatprep.subr.bf16.mxu0 0
        %2221 = vmatpush1.bf16.msra.mxu0 %v2193
        %2222 = vmatprep.subr.bf16.mxu0 0
        %2223 = vmatpush1.bf16.msra.mxu0 %v2192
        %2224 = vmatprep.subr.bf16.mxu0 0
        %2225 = vmatpush2.bf16.msra.mxu0 0
        %2226 = vmatprep.subr.bf16.mxu0 0
        %2227 = vmatpush2.bf16.msra.mxu0 0
        %2228 = vmatprep.subr.bf16.mxu0 0
        %2229 = vmatpush2.bf16.msra.mxu0 0
        %2230 = vmatprep.subr.bf16.mxu0 0
        %2231 = vmatpush2.bf16.msra.mxu0 0
        %2232 = vmatprep.subr.bf16.mxu0 0
        %2233 = vmatpush2.bf16.msra.mxu0 0
        %2234 = vmatprep.subr.bf16.mxu0 0
        %2235 = vmatpush2.bf16.msra.mxu0 0
        %2236 = vmatprep.subr.bf16.mxu0 0
        %2237 = vmatpush2.bf16.msra.mxu0 0
        %2238 = vmatprep.subr.bf16.mxu0 0
        %2239 = vmatpush2.bf16.msra.mxu0 0
        %2240 = vmatprep.mubr.bf16.mxu0 0
        %2241 = vmatmul.mubr.bf16.gmra.mxu0 %v2144
        %v2242 = vpop.f32.mrf.mxu0
        %v2243 = vadd.f32 0.0, %v2242
        %v2244 = vpop.f32.mrf.mxu0
        %v2245 = vpop.f32.mrf.mxu0
        %v2246 = vadd.f32 0.0, %v2245
        %v2247 = vpop.f32.mrf.mxu0
        %2248 = vmatprep.mubr.bf16.mxu0 0
        %2249 = vmatmul.mubr.bf16.gmra.mxu0 %v2145
        %v2250 = vpop.f32.mrf.mxu0
        %v2251 = vadd.f32 0.0, %v2250
        %v2252 = vpop.f32.mrf.mxu0
        %v2253 = vpop.f32.mrf.mxu0
        %v2254 = vadd.f32 0.0, %v2253
        %v2255 = vpop.f32.mrf.mxu0
        %2256 = vmatprep.mubr.bf16.mxu0 0
        %2257 = vmatmul.mubr.bf16.gmra.mxu0 %v2146
        %v2258 = vpop.f32.mrf.mxu0
        %v2259 = vadd.f32 0.0, %v2258
        %v2260 = vpop.f32.mrf.mxu0
        %v2261 = vpop.f32.mrf.mxu0
        %v2262 = vadd.f32 0.0, %v2261
        %v2263 = vpop.f32.mrf.mxu0
        %2264 = vmatprep.mubr.bf16.mxu0 0
        %2265 = vmatmul.mubr.bf16.gmra.mxu0 %v2147
        %v2266 = vpop.f32.mrf.mxu0
        %v2267 = vadd.f32 0.0, %v2266
        %v2268 = vpop.f32.mrf.mxu0
        %v2269 = vpop.f32.mrf.mxu0
        %v2270 = vadd.f32 0.0, %v2269
        %v2271 = vpop.f32.mrf.mxu0
        %2272 = vmatprep.mubr.bf16.mxu0 0
        %2273 = vmatmul.mubr.bf16.gmra.mxu0 %v2148
        %v2274 = vpop.f32.mrf.mxu0
        %v2275 = vadd.f32 0.0, %v2274
        %v2276 = vpop.f32.mrf.mxu0
        %v2277 = vpop.f32.mrf.mxu0
        %v2278 = vadd.f32 0.0, %v2277
        %v2279 = vpop.f32.mrf.mxu0
        %2280 = vmatprep.mubr.bf16.mxu0 0
        %2281 = vmatmul.mubr.bf16.gmra.mxu0 %v2149
        %v2282 = vpop.f32.mrf.mxu0
        %v2283 = vadd.f32 0.0, %v2282
        %v2284 = vpop.f32.mrf.mxu0
        %v2285 = vpop.f32.mrf.mxu0
        %v2286 = vadd.f32 0.0, %v2285
        %v2287 = vpop.f32.mrf.mxu0
        %2288 = vmatprep.mubr.bf16.mxu0 0
        %2289 = vmatmul.mubr.bf16.gmra.mxu0 %v2150
        %v2290 = vpop.f32.mrf.mxu0
        %v2291 = vadd.f32 0.0, %v2290
        %v2292 = vpop.f32.mrf.mxu0
        %v2293 = vpop.f32.mrf.mxu0
        %v2294 = vadd.f32 0.0, %v2293
        %v2295 = vpop.f32.mrf.mxu0
        %2296 = vmatprep.mubr.bf16.mxu0 0
        %2297 = vmatmul.mubr.bf16.gmra.mxu0 %v2151
        %v2298 = vpop.f32.mrf.mxu0
        %v2299 = vadd.f32 0.0, %v2298
        %v2300 = vpop.f32.mrf.mxu0
        %v2301 = vpop.f32.mrf.mxu0
        %v2302 = vadd.f32 0.0, %v2301
        %v2303 = vpop.f32.mrf.mxu0
        %2304 = vdwg.mxu0
        %v2305 = vadd.f32 %v2062, %v2243
        %v2306 = vadd.f32 %v2063, %v2246
        %v2307 = vadd.f32 %v2064, %v2251
        %v2308 = vadd.f32 %v2065, %v2254
        %v2309 = vadd.f32 %v2066, %v2259
        %v2310 = vadd.f32 %v2067, %v2262
        %v2311 = vadd.f32 %v2068, %v2267
        %v2312 = vadd.f32 %v2069, %v2270
        %v2313 = vadd.f32 %v2070, %v2275
        %v2314 = vadd.f32 %v2071, %v2278
        %v2315 = vadd.f32 %v2072, %v2283
        %v2316 = vadd.f32 %v2073, %v2286
        %v2317 = vadd.f32 %v2074, %v2291
        %v2318 = vadd.f32 %v2075, %v2294
        %v2319 = vadd.f32 %v2076, %v2299
        %v2320 = vadd.f32 %v2077, %v2302
        %v2321 = vld [vmem:[%s2078] sm:$0xf]
        %v2322 = vld [vmem:[%s2078 + $0x4] sm:$0xf]
        %v2323 = vld [vmem:[%s2078 + $0x8] sm:$0x1]
        %v2324 = vld [vmem:[%s2078 + $0xc] sm:$0xf]
        %v2325 = vld [vmem:[%s2078 + $0x10] sm:$0xf]
        %v2326 = vld [vmem:[%s2078 + $0x14] sm:$0x1]
        %v2327 = vld [vmem:[%s2078 + $0x18] sm:$0xf]
        %v2328 = vld [vmem:[%s2078 + $0x1c] sm:$0xf]
        %v2329 = vld [vmem:[%s2078 + $0x20] sm:$0x1]
        %v2330 = vld [vmem:[%s2078 + $0x24] sm:$0xf]
        %v2331 = vld [vmem:[%s2078 + $0x28] sm:$0xf]
        %v2332 = vld [vmem:[%s2078 + $0x2c] sm:$0x1]
        %v2333 = vld [vmem:[%s2078 + $0x30] sm:$0xf]
        %v2334 = vld [vmem:[%s2078 + $0x34] sm:$0xf]
        %v2335 = vld [vmem:[%s2078 + $0x38] sm:$0x1]
        %v2336 = vld [vmem:[%s2078 + $0x3c] sm:$0xf]
        %v2337 = vld [vmem:[%s2078 + $0x40] sm:$0xf]
        %v2338 = vld [vmem:[%s2078 + $0x44] sm:$0x1]
        %v2339 = vld [vmem:[%s2078 + $0x48] sm:$0xf]
        %v2340 = vld [vmem:[%s2078 + $0x4c] sm:$0xf]
        %v2341 = vld [vmem:[%s2078 + $0x50] sm:$0x1]
        %v2342 = vld [vmem:[%s2078 + $0x54] sm:$0xf]
        %v2343 = vld [vmem:[%s2078 + $0x58] sm:$0xf]
        %v2344 = vld [vmem:[%s2078 + $0x5c] sm:$0x1]
        %v2346 = vshrl.u32 %v2321, 16
        %v2348 = vrot.slane %v2346, 4
        %v2349 = vshll.u32 %v2321, 16
        %v2351 = vrot.slane %v2349, 5
        %v2352 = vor.u32 %v2348, %v2351
        %v2353 = vrot.slane %v2352, 4
        %v2355 = vshll.u32 %v2322, 16
        %v2357 = vrot.slane %v2355, 5
        %v2358 = vsel %vm1205, %v2353, %v2357
        %v2359 = vshrl.u32 %v2322, 16
        %v2361 = vrot.slane %v2359, 4
        %v2362 = vor.u32 %v2361, %v2357
        %v2363 = vrot.slane %v2362, 4
        %v2365 = vshll.u32 %v2323, 16
        %v2367 = vrot.slane %v2365, 5
        %v2368 = vsel %vm1205, %v2363, %v2367
        %v2370 = vshrl.u32 %v2324, 16
        %v2372 = vrot.slane %v2370, 4
        %v2373 = vshll.u32 %v2324, 16
        %v2375 = vrot.slane %v2373, 5
        %v2376 = vor.u32 %v2372, %v2375
        %v2377 = vrot.slane %v2376, 4
        %v2379 = vshll.u32 %v2325, 16
        %v2381 = vrot.slane %v2379, 5
        %v2382 = vsel %vm1205, %v2377, %v2381
        %v2383 = vshrl.u32 %v2325, 16
        %v2385 = vrot.slane %v2383, 4
        %v2386 = vor.u32 %v2385, %v2381
        %v2387 = vrot.slane %v2386, 4
        %v2389 = vshll.u32 %v2326, 16
        %v2391 = vrot.slane %v2389, 5
        %v2392 = vsel %vm1205, %v2387, %v2391
        %v2394 = vshrl.u32 %v2327, 16
        %v2396 = vrot.slane %v2394, 4
        %v2397 = vshll.u32 %v2327, 16
        %v2399 = vrot.slane %v2397, 5
        %v2400 = vor.u32 %v2396, %v2399
        %v2401 = vrot.slane %v2400, 4
        %v2403 = vshll.u32 %v2328, 16
        %v2405 = vrot.slane %v2403, 5
        %v2406 = vsel %vm1205, %v2401, %v2405
        %v2407 = vshrl.u32 %v2328, 16
        %v2409 = vrot.slane %v2407, 4
        %v2410 = vor.u32 %v2409, %v2405
        %v2411 = vrot.slane %v2410, 4
        %v2413 = vshll.u32 %v2329, 16
        %v2415 = vrot.slane %v2413, 5
        %v2416 = vsel %vm1205, %v2411, %v2415
        %v2418 = vshrl.u32 %v2330, 16
        %v2420 = vrot.slane %v2418, 4
        %v2421 = vshll.u32 %v2330, 16
        %v2423 = vrot.slane %v2421, 5
        %v2424 = vor.u32 %v2420, %v2423
        %v2425 = vrot.slane %v2424, 4
        %v2427 = vshll.u32 %v2331, 16
        %v2429 = vrot.slane %v2427, 5
        %v2430 = vsel %vm1205, %v2425, %v2429
        %v2431 = vshrl.u32 %v2331, 16
        %v2433 = vrot.slane %v2431, 4
        %v2434 = vor.u32 %v2433, %v2429
        %v2435 = vrot.slane %v2434, 4
        %v2437 = vshll.u32 %v2332, 16
        %v2439 = vrot.slane %v2437, 5
        %v2440 = vsel %vm1205, %v2435, %v2439
        %v2442 = vshrl.u32 %v2333, 16
        %v2444 = vrot.slane %v2442, 4
        %v2445 = vshll.u32 %v2333, 16
        %v2447 = vrot.slane %v2445, 5
        %v2448 = vor.u32 %v2444, %v2447
        %v2449 = vrot.slane %v2448, 4
        %v2451 = vshll.u32 %v2334, 16
        %v2453 = vrot.slane %v2451, 5
        %v2454 = vsel %vm1205, %v2449, %v2453
        %v2455 = vshrl.u32 %v2334, 16
        %v2457 = vrot.slane %v2455, 4
        %v2458 = vor.u32 %v2457, %v2453
        %v2459 = vrot.slane %v2458, 4
        %v2461 = vshll.u32 %v2335, 16
        %v2463 = vrot.slane %v2461, 5
        %v2464 = vsel %vm1205, %v2459, %v2463
        %v2466 = vshrl.u32 %v2336, 16
        %v2468 = vrot.slane %v2466, 4
        %v2469 = vshll.u32 %v2336, 16
        %v2471 = vrot.slane %v2469, 5
        %v2472 = vor.u32 %v2468, %v2471
        %v2473 = vrot.slane %v2472, 4
        %v2475 = vshll.u32 %v2337, 16
        %v2477 = vrot.slane %v2475, 5
        %v2478 = vsel %vm1205, %v2473, %v2477
        %v2479 = vshrl.u32 %v2337, 16
        %v2481 = vrot.slane %v2479, 4
        %v2482 = vor.u32 %v2481, %v2477
        %v2483 = vrot.slane %v2482, 4
        %v2485 = vshll.u32 %v2338, 16
        %v2487 = vrot.slane %v2485, 5
        %v2488 = vsel %vm1205, %v2483, %v2487
        %v2490 = vshrl.u32 %v2339, 16
        %v2492 = vrot.slane %v2490, 4
        %v2493 = vshll.u32 %v2339, 16
        %v2495 = vrot.slane %v2493, 5
        %v2496 = vor.u32 %v2492, %v2495
        %v2497 = vrot.slane %v2496, 4
        %v2499 = vshll.u32 %v2340, 16
        %v2501 = vrot.slane %v2499, 5
        %v2502 = vsel %vm1205, %v2497, %v2501
        %v2503 = vshrl.u32 %v2340, 16
        %v2505 = vrot.slane %v2503, 4
        %v2506 = vor.u32 %v2505, %v2501
        %v2507 = vrot.slane %v2506, 4
        %v2509 = vshll.u32 %v2341, 16
        %v2511 = vrot.slane %v2509, 5
        %v2512 = vsel %vm1205, %v2507, %v2511
        %v2514 = vshrl.u32 %v2342, 16
        %v2516 = vrot.slane %v2514, 4
        %v2517 = vshll.u32 %v2342, 16
        %v2519 = vrot.slane %v2517, 5
        %v2520 = vor.u32 %v2516, %v2519
        %v2521 = vrot.slane %v2520, 4
        %v2523 = vshll.u32 %v2343, 16
        %v2525 = vrot.slane %v2523, 5
        %v2526 = vsel %vm1205, %v2521, %v2525
        %v2527 = vshrl.u32 %v2343, 16
        %v2529 = vrot.slane %v2527, 4
        %v2530 = vor.u32 %v2529, %v2525
        %v2531 = vrot.slane %v2530, 4
        %v2533 = vshll.u32 %v2344, 16
        %v2535 = vrot.slane %v2533, 5
        %v2536 = vsel %vm1205, %v2531, %v2535
        %s2537 = scalar_lea.vmem [#allocation11], 256
        %v2538 = vld [vmem:[%s2537] sm:$0xf]
        %v2539 = vld [vmem:[%s2537 + $0x4] sm:$0xf]
        %v2540 = vld [vmem:[%s2537 + $0x8] sm:$0xf]
        %v2541 = vld [vmem:[%s2537 + $0xc] sm:$0xf]
        %v2542 = vld [vmem:[%s2537 + $0x10] sm:$0xf]
        %v2543 = vld [vmem:[%s2537 + $0x14] sm:$0xf]
        %v2544 = vld [vmem:[%s2537 + $0x18] sm:$0xf]
        %v2545 = vld [vmem:[%s2537 + $0x1c] sm:$0xf]
        %v2546 = vld [vmem:[%s2537 + $0x20] sm:$0xf]
        %v2547 = vld [vmem:[%s2537 + $0x24] sm:$0xf]
        %v2548 = vld [vmem:[%s2537 + $0x28] sm:$0xf]
        %v2549 = vld [vmem:[%s2537 + $0x2c] sm:$0xf]
        %v2550 = vld [vmem:[%s2537 + $0x30] sm:$0xf]
        %v2551 = vld [vmem:[%s2537 + $0x34] sm:$0xf]
        %v2552 = vld [vmem:[%s2537 + $0x38] sm:$0xf]
        %v2553 = vld [vmem:[%s2537 + $0x3c] sm:$0xf]
        %v2554 = vunpack.c.l.b16 %v2358
        %v2555 = vunpack.c.l.b16 %v2368
        %v2556 = vunpack.c.l.b16 %v2382
        %v2557 = vunpack.c.l.b16 %v2392
        %v2558 = vunpack.c.l.b16 %v2406
        %v2559 = vunpack.c.l.b16 %v2416
        %v2560 = vunpack.c.l.b16 %v2430
        %v2561 = vunpack.c.l.b16 %v2440
        %v2562 = vunpack.c.l.b16 %v2454
        %v2563 = vunpack.c.l.b16 %v2464
        %v2564 = vunpack.c.l.b16 %v2478
        %v2565 = vunpack.c.l.b16 %v2488
        %v2566 = vunpack.c.l.b16 %v2502
        %v2567 = vunpack.c.l.b16 %v2512
        %v2568 = vunpack.c.l.b16 %v2526
        %v2569 = vunpack.c.l.b16 %v2536
        %v2570 = vpack.c.b16 %v2555, %v2554
        %v2571 = vpack.c.b16 %v2557, %v2556
        %v2572 = vpack.c.b16 %v2559, %v2558
        %v2573 = vpack.c.b16 %v2561, %v2560
        %v2574 = vpack.c.b16 %v2563, %v2562
        %v2575 = vpack.c.b16 %v2565, %v2564
        %v2576 = vpack.c.b16 %v2567, %v2566
        %v2577 = vpack.c.b16 %v2569, %v2568
        %v2602 = vunpack.c.l.b16 %v2538
        %v2603 = vunpack.c.l.b16 %v2539
        %v2604 = vunpack.c.l.b16 %v2540
        %v2605 = vunpack.c.l.b16 %v2541
        %v2606 = vunpack.c.l.b16 %v2542
        %v2607 = vunpack.c.l.b16 %v2543
        %v2608 = vunpack.c.l.b16 %v2544
        %v2609 = vunpack.c.l.b16 %v2545
        %v2610 = vunpack.c.l.b16 %v2546
        %v2611 = vunpack.c.l.b16 %v2547
        %v2612 = vunpack.c.l.b16 %v2548
        %v2613 = vunpack.c.l.b16 %v2549
        %v2614 = vunpack.c.l.b16 %v2550
        %v2615 = vunpack.c.l.b16 %v2551
        %v2616 = vunpack.c.l.b16 %v2552
        %v2617 = vunpack.c.l.b16 %v2553
        %v2618 = vpack.c.b16 %v2603, %v2602
        %v2619 = vpack.c.b16 %v2605, %v2604
        %v2620 = vpack.c.b16 %v2607, %v2606
        %v2621 = vpack.c.b16 %v2609, %v2608
        %v2622 = vpack.c.b16 %v2611, %v2610
        %v2623 = vpack.c.b16 %v2613, %v2612
        %v2624 = vpack.c.b16 %v2615, %v2614
        %v2625 = vpack.c.b16 %v2617, %v2616
        %2634 = vmatprep.subr.bf16.mxu0 0
        %2635 = vmatpush1.bf16.msra.mxu0 %v2625
        %2636 = vmatprep.subr.bf16.mxu0 0
        %2637 = vmatpush1.bf16.msra.mxu0 %v2624
        %2638 = vmatprep.subr.bf16.mxu0 0
        %2639 = vmatpush1.bf16.msra.mxu0 %v2623
        %2640 = vmatprep.subr.bf16.mxu0 0
        %2641 = vmatpush1.bf16.msra.mxu0 %v2622
        %2642 = vmatprep.subr.bf16.mxu0 0
        %2643 = vmatpush1.bf16.msra.mxu0 %v2621
        %2644 = vmatprep.subr.bf16.mxu0 0
        %2645 = vmatpush1.bf16.msra.mxu0 %v2620
        %2646 = vmatprep.subr.bf16.mxu0 0
        %2647 = vmatpush1.bf16.msra.mxu0 %v2619
        %2648 = vmatprep.subr.bf16.mxu0 0
        %2649 = vmatpush1.bf16.msra.mxu0 %v2618
        %2650 = vmatprep.subr.bf16.mxu0 0
        %2651 = vmatpush2.bf16.msra.mxu0 0
        %2652 = vmatprep.subr.bf16.mxu0 0
        %2653 = vmatpush2.bf16.msra.mxu0 0
        %2654 = vmatprep.subr.bf16.mxu0 0
        %2655 = vmatpush2.bf16.msra.mxu0 0
        %2656 = vmatprep.subr.bf16.mxu0 0
        %2657 = vmatpush2.bf16.msra.mxu0 0
        %2658 = vmatprep.subr.bf16.mxu0 0
        %2659 = vmatpush2.bf16.msra.mxu0 0
        %2660 = vmatprep.subr.bf16.mxu0 0
        %2661 = vmatpush2.bf16.msra.mxu0 0
        %2662 = vmatprep.subr.bf16.mxu0 0
        %2663 = vmatpush2.bf16.msra.mxu0 0
        %2664 = vmatprep.subr.bf16.mxu0 0
        %2665 = vmatpush2.bf16.msra.mxu0 0
        %2666 = vmatprep.mubr.bf16.mxu0 0
        %2667 = vmatmul.mubr.bf16.gmra.mxu0 %v2570
        %v2668 = vpop.f32.mrf.mxu0
        %v2669 = vadd.f32 0.0, %v2668
        %v2670 = vpop.f32.mrf.mxu0
        %v2671 = vpop.f32.mrf.mxu0
        %v2672 = vadd.f32 0.0, %v2671
        %v2673 = vpop.f32.mrf.mxu0
        %2674 = vmatprep.mubr.bf16.mxu0 0
        %2675 = vmatmul.mubr.bf16.gmra.mxu0 %v2571
        %v2676 = vpop.f32.mrf.mxu0
        %v2677 = vadd.f32 0.0, %v2676
        %v2678 = vpop.f32.mrf.mxu0
        %v2679 = vpop.f32.mrf.mxu0
        %v2680 = vadd.f32 0.0, %v2679
        %v2681 = vpop.f32.mrf.mxu0
        %2682 = vmatprep.mubr.bf16.mxu0 0
        %2683 = vmatmul.mubr.bf16.gmra.mxu0 %v2572
        %v2684 = vpop.f32.mrf.mxu0
        %v2685 = vadd.f32 0.0, %v2684
        %v2686 = vpop.f32.mrf.mxu0
        %v2687 = vpop.f32.mrf.mxu0
        %v2688 = vadd.f32 0.0, %v2687
        %v2689 = vpop.f32.mrf.mxu0
        %2690 = vmatprep.mubr.bf16.mxu0 0
        %2691 = vmatmul.mubr.bf16.gmra.mxu0 %v2573
        %v2692 = vpop.f32.mrf.mxu0
        %v2693 = vadd.f32 0.0, %v2692
        %v2694 = vpop.f32.mrf.mxu0
        %v2695 = vpop.f32.mrf.mxu0
        %v2696 = vadd.f32 0.0, %v2695
        %v2697 = vpop.f32.mrf.mxu0
        %2698 = vmatprep.mubr.bf16.mxu0 0
        %2699 = vmatmul.mubr.bf16.gmra.mxu0 %v2574
        %v2700 = vpop.f32.mrf.mxu0
        %v2701 = vadd.f32 0.0, %v2700
        %v2702 = vpop.f32.mrf.mxu0
        %v2703 = vpop.f32.mrf.mxu0
        %v2704 = vadd.f32 0.0, %v2703
        %v2705 = vpop.f32.mrf.mxu0
        %2706 = vmatprep.mubr.bf16.mxu0 0
        %2707 = vmatmul.mubr.bf16.gmra.mxu0 %v2575
        %v2708 = vpop.f32.mrf.mxu0
        %v2709 = vadd.f32 0.0, %v2708
        %v2710 = vpop.f32.mrf.mxu0
        %v2711 = vpop.f32.mrf.mxu0
        %v2712 = vadd.f32 0.0, %v2711
        %v2713 = vpop.f32.mrf.mxu0
        %2714 = vmatprep.mubr.bf16.mxu0 0
        %2715 = vmatmul.mubr.bf16.gmra.mxu0 %v2576
        %v2716 = vpop.f32.mrf.mxu0
        %v2717 = vadd.f32 0.0, %v2716
        %v2718 = vpop.f32.mrf.mxu0
        %v2719 = vpop.f32.mrf.mxu0
        %v2720 = vadd.f32 0.0, %v2719
        %v2721 = vpop.f32.mrf.mxu0
        %2722 = vmatprep.mubr.bf16.mxu0 0
        %2723 = vmatmul.mubr.bf16.gmra.mxu0 %v2577
        %v2724 = vpop.f32.mrf.mxu0
        %v2725 = vadd.f32 0.0, %v2724
        %v2726 = vpop.f32.mrf.mxu0
        %v2727 = vpop.f32.mrf.mxu0
        %v2728 = vadd.f32 0.0, %v2727
        %v2729 = vpop.f32.mrf.mxu0
        %2730 = vdwg.mxu0
        %v2731 = vadd.f32 %v2305, %v2669
        %v2732 = vadd.f32 %v2306, %v2672
        %v2733 = vadd.f32 %v2307, %v2677
        %v2734 = vadd.f32 %v2308, %v2680
        %v2735 = vadd.f32 %v2309, %v2685
        %v2736 = vadd.f32 %v2310, %v2688
        %v2737 = vadd.f32 %v2311, %v2693
        %v2738 = vadd.f32 %v2312, %v2696
        %v2739 = vadd.f32 %v2313, %v2701
        %v2740 = vadd.f32 %v2314, %v2704
        %v2741 = vadd.f32 %v2315, %v2709
        %v2742 = vadd.f32 %v2316, %v2712
        %v2743 = vadd.f32 %v2317, %v2717
        %v2744 = vadd.f32 %v2318, %v2720
        %v2745 = vadd.f32 %v2319, %v2725
        %v2746 = vadd.f32 %v2320, %v2728
        %v2747 = vld [vmem:[%s2078] sm:$0xe]
        %v2748 = vld [vmem:[%s2078 + $0xc] sm:$0xe]
        %v2749 = vld [vmem:[%s2078 + $0x18] sm:$0xe]
        %v2750 = vld [vmem:[%s2078 + $0x24] sm:$0xe]
        %v2751 = vld [vmem:[%s2078 + $0x30] sm:$0xe]
        %v2752 = vld [vmem:[%s2078 + $0x3c] sm:$0xe]
        %v2753 = vld [vmem:[%s2078 + $0x48] sm:$0xe]
        %v2754 = vld [vmem:[%s2078 + $0x54] sm:$0xe]
        %v2779 = vrot.slane %v2747, 5
        %v2780 = vrot.slane %v2779, 4
        %v2781 = vrot.slane %v2322, 5
        %v2782 = vsel %vm1811, %v2780, %v2781
        %v2783 = vrot.slane %v2781, 4
        %v2784 = vrot.slane %v2323, 5
        %v2785 = vsel %vm1811, %v2783, %v2784
        %v2786 = vrot.slane %v2748, 5
        %v2787 = vrot.slane %v2786, 4
        %v2788 = vrot.slane %v2325, 5
        %v2789 = vsel %vm1811, %v2787, %v2788
        %v2790 = vrot.slane %v2788, 4
        %v2791 = vrot.slane %v2326, 5
        %v2792 = vsel %vm1811, %v2790, %v2791
        %v2793 = vrot.slane %v2749, 5
        %v2794 = vrot.slane %v2793, 4
        %v2795 = vrot.slane %v2328, 5
        %v2796 = vsel %vm1811, %v2794, %v2795
        %v2797 = vrot.slane %v2795, 4
        %v2798 = vrot.slane %v2329, 5
        %v2799 = vsel %vm1811, %v2797, %v2798
        %v2800 = vrot.slane %v2750, 5
        %v2801 = vrot.slane %v2800, 4
        %v2802 = vrot.slane %v2331, 5
        %v2803 = vsel %vm1811, %v2801, %v2802
        %v2804 = vrot.slane %v2802, 4
        %v2805 = vrot.slane %v2332, 5
        %v2806 = vsel %vm1811, %v2804, %v2805
        %v2807 = vrot.slane %v2751, 5
        %v2808 = vrot.slane %v2807, 4
        %v2809 = vrot.slane %v2334, 5
        %v2810 = vsel %vm1811, %v2808, %v2809
        %v2811 = vrot.slane %v2809, 4
        %v2812 = vrot.slane %v2335, 5
        %v2813 = vsel %vm1811, %v2811, %v2812
        %v2814 = vrot.slane %v2752, 5
        %v2815 = vrot.slane %v2814, 4
        %v2816 = vrot.slane %v2337, 5
        %v2817 = vsel %vm1811, %v2815, %v2816
        %v2818 = vrot.slane %v2816, 4
        %v2819 = vrot.slane %v2338, 5
        %v2820 = vsel %vm1811, %v2818, %v2819
        %v2821 = vrot.slane %v2753, 5
        %v2822 = vrot.slane %v2821, 4
        %v2823 = vrot.slane %v2340, 5
        %v2824 = vsel %vm1811, %v2822, %v2823
        %v2825 = vrot.slane %v2823, 4
        %v2826 = vrot.slane %v2341, 5
        %v2827 = vsel %vm1811, %v2825, %v2826
        %v2828 = vrot.slane %v2754, 5
        %v2829 = vrot.slane %v2828, 4
        %v2830 = vrot.slane %v2343, 5
        %v2831 = vsel %vm1811, %v2829, %v2830
        %v2832 = vrot.slane %v2830, 4
        %v2833 = vrot.slane %v2344, 5
        %v2834 = vsel %vm1811, %v2832, %v2833
        %s2835 = scalar_lea.vmem [#allocation11], 320
        %v2836 = vld [vmem:[%s2835] sm:$0xf]
        %v2837 = vld [vmem:[%s2835 + $0x4] sm:$0xf]
        %v2838 = vld [vmem:[%s2835 + $0x8] sm:$0xf]
        %v2839 = vld [vmem:[%s2835 + $0xc] sm:$0xf]
        %v2840 = vld [vmem:[%s2835 + $0x10] sm:$0xf]
        %v2841 = vld [vmem:[%s2835 + $0x14] sm:$0xf]
        %v2842 = vld [vmem:[%s2835 + $0x18] sm:$0xf]
        %v2843 = vld [vmem:[%s2835 + $0x1c] sm:$0xf]
        %v2844 = vld [vmem:[%s2835 + $0x20] sm:$0xf]
        %v2845 = vld [vmem:[%s2835 + $0x24] sm:$0xf]
        %v2846 = vld [vmem:[%s2835 + $0x28] sm:$0xf]
        %v2847 = vld [vmem:[%s2835 + $0x2c] sm:$0xf]
        %v2848 = vld [vmem:[%s2835 + $0x30] sm:$0xf]
        %v2849 = vld [vmem:[%s2835 + $0x34] sm:$0xf]
        %v2850 = vld [vmem:[%s2835 + $0x38] sm:$0xf]
        %v2851 = vld [vmem:[%s2835 + $0x3c] sm:$0xf]
        %v2852 = vunpack.c.l.b16 %v2782
        %v2853 = vunpack.c.l.b16 %v2785
        %v2854 = vunpack.c.l.b16 %v2789
        %v2855 = vunpack.c.l.b16 %v2792
        %v2856 = vunpack.c.l.b16 %v2796
        %v2857 = vunpack.c.l.b16 %v2799
        %v2858 = vunpack.c.l.b16 %v2803
        %v2859 = vunpack.c.l.b16 %v2806
        %v2860 = vunpack.c.l.b16 %v2810
        %v2861 = vunpack.c.l.b16 %v2813
        %v2862 = vunpack.c.l.b16 %v2817
        %v2863 = vunpack.c.l.b16 %v2820
        %v2864 = vunpack.c.l.b16 %v2824
        %v2865 = vunpack.c.l.b16 %v2827
        %v2866 = vunpack.c.l.b16 %v2831
        %v2867 = vunpack.c.l.b16 %v2834
        %v2868 = vpack.c.b16 %v2853, %v2852
        %v2869 = vpack.c.b16 %v2855, %v2854
        %v2870 = vpack.c.b16 %v2857, %v2856
        %v2871 = vpack.c.b16 %v2859, %v2858
        %v2872 = vpack.c.b16 %v2861, %v2860
        %v2873 = vpack.c.b16 %v2863, %v2862
        %v2874 = vpack.c.b16 %v2865, %v2864
        %v2875 = vpack.c.b16 %v2867, %v2866
        %v2900 = vunpack.c.l.b16 %v2836
        %v2901 = vunpack.c.l.b16 %v2837
        %v2902 = vunpack.c.l.b16 %v2838
        %v2903 = vunpack.c.l.b16 %v2839
        %v2904 = vunpack.c.l.b16 %v2840
        %v2905 = vunpack.c.l.b16 %v2841
        %v2906 = vunpack.c.l.b16 %v2842
        %v2907 = vunpack.c.l.b16 %v2843
        %v2908 = vunpack.c.l.b16 %v2844
        %v2909 = vunpack.c.l.b16 %v2845
        %v2910 = vunpack.c.l.b16 %v2846
        %v2911 = vunpack.c.l.b16 %v2847
        %v2912 = vunpack.c.l.b16 %v2848
        %v2913 = vunpack.c.l.b16 %v2849
        %v2914 = vunpack.c.l.b16 %v2850
        %v2915 = vunpack.c.l.b16 %v2851
        %v2916 = vpack.c.b16 %v2901, %v2900
        %v2917 = vpack.c.b16 %v2903, %v2902
        %v2918 = vpack.c.b16 %v2905, %v2904
        %v2919 = vpack.c.b16 %v2907, %v2906
        %v2920 = vpack.c.b16 %v2909, %v2908
        %v2921 = vpack.c.b16 %v2911, %v2910
        %v2922 = vpack.c.b16 %v2913, %v2912
        %v2923 = vpack.c.b16 %v2915, %v2914
        %2932 = vmatprep.subr.bf16.mxu0 0
        %2933 = vmatpush1.bf16.msra.mxu0 %v2923
        %2934 = vmatprep.subr.bf16.mxu0 0
        %2935 = vmatpush1.bf16.msra.mxu0 %v2922
        %2936 = vmatprep.subr.bf16.mxu0 0
        %2937 = vmatpush1.bf16.msra.mxu0 %v2921
        %2938 = vmatprep.subr.bf16.mxu0 0
        %2939 = vmatpush1.bf16.msra.mxu0 %v2920
        %2940 = vmatprep.subr.bf16.mxu0 0
        %2941 = vmatpush1.bf16.msra.mxu0 %v2919
        %2942 = vmatprep.subr.bf16.mxu0 0
        %2943 = vmatpush1.bf16.msra.mxu0 %v2918
        %2944 = vmatprep.subr.bf16.mxu0 0
        %2945 = vmatpush1.bf16.msra.mxu0 %v2917
        %2946 = vmatprep.subr.bf16.mxu0 0
        %2947 = vmatpush1.bf16.msra.mxu0 %v2916
        %2948 = vmatprep.subr.bf16.mxu0 0
        %2949 = vmatpush2.bf16.msra.mxu0 0
        %2950 = vmatprep.subr.bf16.mxu0 0
        %2951 = vmatpush2.bf16.msra.mxu0 0
        %2952 = vmatprep.subr.bf16.mxu0 0
        %2953 = vmatpush2.bf16.msra.mxu0 0
        %2954 = vmatprep.subr.bf16.mxu0 0
        %2955 = vmatpush2.bf16.msra.mxu0 0
        %2956 = vmatprep.subr.bf16.mxu0 0
        %2957 = vmatpush2.bf16.msra.mxu0 0
        %2958 = vmatprep.subr.bf16.mxu0 0
        %2959 = vmatpush2.bf16.msra.mxu0 0
        %2960 = vmatprep.subr.bf16.mxu0 0
        %2961 = vmatpush2.bf16.msra.mxu0 0
        %2962 = vmatprep.subr.bf16.mxu0 0
        %2963 = vmatpush2.bf16.msra.mxu0 0
        %2964 = vmatprep.mubr.bf16.mxu0 0
        %2965 = vmatmul.mubr.bf16.gmra.mxu0 %v2868
        %v2966 = vpop.f32.mrf.mxu0
        %v2967 = vadd.f32 0.0, %v2966
        %v2968 = vpop.f32.mrf.mxu0
        %v2969 = vpop.f32.mrf.mxu0
        %v2970 = vadd.f32 0.0, %v2969
        %v2971 = vpop.f32.mrf.mxu0
        %2972 = vmatprep.mubr.bf16.mxu0 0
        %2973 = vmatmul.mubr.bf16.gmra.mxu0 %v2869
        %v2974 = vpop.f32.mrf.mxu0
        %v2975 = vadd.f32 0.0, %v2974
        %v2976 = vpop.f32.mrf.mxu0
        %v2977 = vpop.f32.mrf.mxu0
        %v2978 = vadd.f32 0.0, %v2977
        %v2979 = vpop.f32.mrf.mxu0
        %2980 = vmatprep.mubr.bf16.mxu0 0
        %2981 = vmatmul.mubr.bf16.gmra.mxu0 %v2870
        %v2982 = vpop.f32.mrf.mxu0
        %v2983 = vadd.f32 0.0, %v2982
        %v2984 = vpop.f32.mrf.mxu0
        %v2985 = vpop.f32.mrf.mxu0
        %v2986 = vadd.f32 0.0, %v2985
        %v2987 = vpop.f32.mrf.mxu0
        %2988 = vmatprep.mubr.bf16.mxu0 0
        %2989 = vmatmul.mubr.bf16.gmra.mxu0 %v2871
        %v2990 = vpop.f32.mrf.mxu0
        %v2991 = vadd.f32 0.0, %v2990
        %v2992 = vpop.f32.mrf.mxu0
        %v2993 = vpop.f32.mrf.mxu0
        %v2994 = vadd.f32 0.0, %v2993
        %v2995 = vpop.f32.mrf.mxu0
        %2996 = vmatprep.mubr.bf16.mxu0 0
        %2997 = vmatmul.mubr.bf16.gmra.mxu0 %v2872
        %v2998 = vpop.f32.mrf.mxu0
        %v2999 = vadd.f32 0.0, %v2998
        %v3000 = vpop.f32.mrf.mxu0
        %v3001 = vpop.f32.mrf.mxu0
        %v3002 = vadd.f32 0.0, %v3001
        %v3003 = vpop.f32.mrf.mxu0
        %3004 = vmatprep.mubr.bf16.mxu0 0
        %3005 = vmatmul.mubr.bf16.gmra.mxu0 %v2873
        %v3006 = vpop.f32.mrf.mxu0
        %v3007 = vadd.f32 0.0, %v3006
        %v3008 = vpop.f32.mrf.mxu0
        %v3009 = vpop.f32.mrf.mxu0
        %v3010 = vadd.f32 0.0, %v3009
        %v3011 = vpop.f32.mrf.mxu0
        %3012 = vmatprep.mubr.bf16.mxu0 0
        %3013 = vmatmul.mubr.bf16.gmra.mxu0 %v2874
        %v3014 = vpop.f32.mrf.mxu0
        %v3015 = vadd.f32 0.0, %v3014
        %v3016 = vpop.f32.mrf.mxu0
        %v3017 = vpop.f32.mrf.mxu0
        %v3018 = vadd.f32 0.0, %v3017
        %v3019 = vpop.f32.mrf.mxu0
        %3020 = vmatprep.mubr.bf16.mxu0 0
        %3021 = vmatmul.mubr.bf16.gmra.mxu0 %v2875
        %v3022 = vpop.f32.mrf.mxu0
        %v3023 = vadd.f32 0.0, %v3022
        %v3024 = vpop.f32.mrf.mxu0
        %v3025 = vpop.f32.mrf.mxu0
        %v3026 = vadd.f32 0.0, %v3025
        %v3027 = vpop.f32.mrf.mxu0
        %3028 = vdwg.mxu0
        %v3029 = vadd.f32 %v2731, %v2967
        %v3030 = vadd.f32 %v2732, %v2970
        %v3031 = vadd.f32 %v2733, %v2975
        %v3032 = vadd.f32 %v2734, %v2978
        %v3033 = vadd.f32 %v2735, %v2983
        %v3034 = vadd.f32 %v2736, %v2986
        %v3035 = vadd.f32 %v2737, %v2991
        %v3036 = vadd.f32 %v2738, %v2994
        %v3037 = vadd.f32 %v2739, %v2999
        %v3038 = vadd.f32 %v2740, %v3002
        %v3039 = vadd.f32 %v2741, %v3007
        %v3040 = vadd.f32 %v2742, %v3010
        %v3041 = vadd.f32 %v2743, %v3015
        %v3042 = vadd.f32 %v2744, %v3018
        %v3043 = vadd.f32 %v2745, %v3023
        %v3044 = vadd.f32 %v2746, %v3026
        %s3045 = scalar_lea.vmem [#allocation2], 24
        %v3046 = vld [vmem:[%s3045] sm:$0xf]
        %v3047 = vld [vmem:[%s3045 + $0x4] sm:$0xf]
        %v3048 = vld [vmem:[%s3045 + $0xc] sm:$0xf]
        %v3049 = vld [vmem:[%s3045 + $0x10] sm:$0xf]
        %v3050 = vld [vmem:[%s3045 + $0x18] sm:$0xf]
        %v3051 = vld [vmem:[%s3045 + $0x1c] sm:$0xf]
        %v3052 = vld [vmem:[%s3045 + $0x24] sm:$0xf]
        %v3053 = vld [vmem:[%s3045 + $0x28] sm:$0xf]
        %v3054 = vld [vmem:[%s3045 + $0x30] sm:$0xf]
        %v3055 = vld [vmem:[%s3045 + $0x34] sm:$0xf]
        %v3056 = vld [vmem:[%s3045 + $0x3c] sm:$0xf]
        %v3057 = vld [vmem:[%s3045 + $0x40] sm:$0xf]
        %v3058 = vld [vmem:[%s3045 + $0x48] sm:$0xf]
        %v3059 = vld [vmem:[%s3045 + $0x4c] sm:$0xf]
        %v3060 = vld [vmem:[%s3045 + $0x54] sm:$0xf]
        %v3061 = vld [vmem:[%s3045 + $0x58] sm:$0xf]
        %s3062 = scalar_lea.vmem [#allocation11], 384
        %v3063 = vld [vmem:[%s3062] sm:$0xf]
        %v3064 = vld [vmem:[%s3062 + $0x4] sm:$0xf]
        %v3065 = vld [vmem:[%s3062 + $0x8] sm:$0xf]
        %v3066 = vld [vmem:[%s3062 + $0xc] sm:$0xf]
        %v3067 = vld [vmem:[%s3062 + $0x10] sm:$0xf]
        %v3068 = vld [vmem:[%s3062 + $0x14] sm:$0xf]
        %v3069 = vld [vmem:[%s3062 + $0x18] sm:$0xf]
        %v3070 = vld [vmem:[%s3062 + $0x1c] sm:$0xf]
        %v3071 = vld [vmem:[%s3062 + $0x20] sm:$0xf]
        %v3072 = vld [vmem:[%s3062 + $0x24] sm:$0xf]
        %v3073 = vld [vmem:[%s3062 + $0x28] sm:$0xf]
        %v3074 = vld [vmem:[%s3062 + $0x2c] sm:$0xf]
        %v3075 = vld [vmem:[%s3062 + $0x30] sm:$0xf]
        %v3076 = vld [vmem:[%s3062 + $0x34] sm:$0xf]
        %v3077 = vld [vmem:[%s3062 + $0x38] sm:$0xf]
        %v3078 = vld [vmem:[%s3062 + $0x3c] sm:$0xf]
        %v3095 = vunpack.c.l.b16 %v3046
        %v3096 = vunpack.c.l.b16 %v3047
        %v3097 = vunpack.c.l.b16 %v3048
        %v3098 = vunpack.c.l.b16 %v3049
        %v3099 = vunpack.c.l.b16 %v3050
        %v3100 = vunpack.c.l.b16 %v3051
        %v3101 = vunpack.c.l.b16 %v3052
        %v3102 = vunpack.c.l.b16 %v3053
        %v3103 = vunpack.c.l.b16 %v3054
        %v3104 = vunpack.c.l.b16 %v3055
        %v3105 = vunpack.c.l.b16 %v3056
        %v3106 = vunpack.c.l.b16 %v3057
        %v3107 = vunpack.c.l.b16 %v3058
        %v3108 = vunpack.c.l.b16 %v3059
        %v3109 = vunpack.c.l.b16 %v3060
        %v3110 = vunpack.c.l.b16 %v3061
        %v3111 = vpack.c.b16 %v3096, %v3095
        %v3112 = vpack.c.b16 %v3098, %v3097
        %v3113 = vpack.c.b16 %v3100, %v3099
        %v3114 = vpack.c.b16 %v3102, %v3101
        %v3115 = vpack.c.b16 %v3104, %v3103
        %v3116 = vpack.c.b16 %v3106, %v3105
        %v3117 = vpack.c.b16 %v3108, %v3107
        %v3118 = vpack.c.b16 %v3110, %v3109
        %v3143 = vunpack.c.l.b16 %v3063
        %v3144 = vunpack.c.l.b16 %v3064
        %v3145 = vunpack.c.l.b16 %v3065
        %v3146 = vunpack.c.l.b16 %v3066
        %v3147 = vunpack.c.l.b16 %v3067
        %v3148 = vunpack.c.l.b16 %v3068
        %v3149 = vunpack.c.l.b16 %v3069
        %v3150 = vunpack.c.l.b16 %v3070
        %v3151 = vunpack.c.l.b16 %v3071
        %v3152 = vunpack.c.l.b16 %v3072
        %v3153 = vunpack.c.l.b16 %v3073
        %v3154 = vunpack.c.l.b16 %v3074
        %v3155 = vunpack.c.l.b16 %v3075
        %v3156 = vunpack.c.l.b16 %v3076
        %v3157 = vunpack.c.l.b16 %v3077
        %v3158 = vunpack.c.l.b16 %v3078
        %v3159 = vpack.c.b16 %v3144, %v3143
        %v3160 = vpack.c.b16 %v3146, %v3145
        %v3161 = vpack.c.b16 %v3148, %v3147
        %v3162 = vpack.c.b16 %v3150, %v3149
        %v3163 = vpack.c.b16 %v3152, %v3151
        %v3164 = vpack.c.b16 %v3154, %v3153
        %v3165 = vpack.c.b16 %v3156, %v3155
        %v3166 = vpack.c.b16 %v3158, %v3157
        %3175 = vmatprep.subr.bf16.mxu0 0
        %3176 = vmatpush1.bf16.msra.mxu0 %v3166
        %3177 = vmatprep.subr.bf16.mxu0 0
        %3178 = vmatpush1.bf16.msra.mxu0 %v3165
        %3179 = vmatprep.subr.bf16.mxu0 0
        %3180 = vmatpush1.bf16.msra.mxu0 %v3164
        %3181 = vmatprep.subr.bf16.mxu0 0
        %3182 = vmatpush1.bf16.msra.mxu0 %v3163
        %3183 = vmatprep.subr.bf16.mxu0 0
        %3184 = vmatpush1.bf16.msra.mxu0 %v3162
        %3185 = vmatprep.subr.bf16.mxu0 0
        %3186 = vmatpush1.bf16.msra.mxu0 %v3161
        %3187 = vmatprep.subr.bf16.mxu0 0
        %3188 = vmatpush1.bf16.msra.mxu0 %v3160
        %3189 = vmatprep.subr.bf16.mxu0 0
        %3190 = vmatpush1.bf16.msra.mxu0 %v3159
        %3191 = vmatprep.subr.bf16.mxu0 0
        %3192 = vmatpush2.bf16.msra.mxu0 0
        %3193 = vmatprep.subr.bf16.mxu0 0
        %3194 = vmatpush2.bf16.msra.mxu0 0
        %3195 = vmatprep.subr.bf16.mxu0 0
        %3196 = vmatpush2.bf16.msra.mxu0 0
        %3197 = vmatprep.subr.bf16.mxu0 0
        %3198 = vmatpush2.bf16.msra.mxu0 0
        %3199 = vmatprep.subr.bf16.mxu0 0
        %3200 = vmatpush2.bf16.msra.mxu0 0
        %3201 = vmatprep.subr.bf16.mxu0 0
        %3202 = vmatpush2.bf16.msra.mxu0 0
        %3203 = vmatprep.subr.bf16.mxu0 0
        %3204 = vmatpush2.bf16.msra.mxu0 0
        %3205 = vmatprep.subr.bf16.mxu0 0
        %3206 = vmatpush2.bf16.msra.mxu0 0
        %3207 = vmatprep.mubr.bf16.mxu0 0
        %3208 = vmatmul.mubr.bf16.gmra.mxu0 %v3111
        %v3209 = vpop.f32.mrf.mxu0
        %v3210 = vadd.f32 0.0, %v3209
        %v3211 = vpop.f32.mrf.mxu0
        %v3212 = vpop.f32.mrf.mxu0
        %v3213 = vadd.f32 0.0, %v3212
        %v3214 = vpop.f32.mrf.mxu0
        %3215 = vmatprep.mubr.bf16.mxu0 0
        %3216 = vmatmul.mubr.bf16.gmra.mxu0 %v3112
        %v3217 = vpop.f32.mrf.mxu0
        %v3218 = vadd.f32 0.0, %v3217
        %v3219 = vpop.f32.mrf.mxu0
        %v3220 = vpop.f32.mrf.mxu0
        %v3221 = vadd.f32 0.0, %v3220
        %v3222 = vpop.f32.mrf.mxu0
        %3223 = vmatprep.mubr.bf16.mxu0 0
        %3224 = vmatmul.mubr.bf16.gmra.mxu0 %v3113
        %v3225 = vpop.f32.mrf.mxu0
        %v3226 = vadd.f32 0.0, %v3225
        %v3227 = vpop.f32.mrf.mxu0
        %v3228 = vpop.f32.mrf.mxu0
        %v3229 = vadd.f32 0.0, %v3228
        %v3230 = vpop.f32.mrf.mxu0
        %3231 = vmatprep.mubr.bf16.mxu0 0
        %3232 = vmatmul.mubr.bf16.gmra.mxu0 %v3114
        %v3233 = vpop.f32.mrf.mxu0
        %v3234 = vadd.f32 0.0, %v3233
        %v3235 = vpop.f32.mrf.mxu0
        %v3236 = vpop.f32.mrf.mxu0
        %v3237 = vadd.f32 0.0, %v3236
        %v3238 = vpop.f32.mrf.mxu0
        %3239 = vmatprep.mubr.bf16.mxu0 0
        %3240 = vmatmul.mubr.bf16.gmra.mxu0 %v3115
        %v3241 = vpop.f32.mrf.mxu0
        %v3242 = vadd.f32 0.0, %v3241
        %v3243 = vpop.f32.mrf.mxu0
        %v3244 = vpop.f32.mrf.mxu0
        %v3245 = vadd.f32 0.0, %v3244
        %v3246 = vpop.f32.mrf.mxu0
        %3247 = vmatprep.mubr.bf16.mxu0 0
        %3248 = vmatmul.mubr.bf16.gmra.mxu0 %v3116
        %v3249 = vpop.f32.mrf.mxu0
        %v3250 = vadd.f32 0.0, %v3249
        %v3251 = vpop.f32.mrf.mxu0
        %v3252 = vpop.f32.mrf.mxu0
        %v3253 = vadd.f32 0.0, %v3252
        %v3254 = vpop.f32.mrf.mxu0
        %3255 = vmatprep.mubr.bf16.mxu0 0
        %3256 = vmatmul.mubr.bf16.gmra.mxu0 %v3117
        %v3257 = vpop.f32.mrf.mxu0
        %v3258 = vadd.f32 0.0, %v3257
        %v3259 = vpop.f32.mrf.mxu0
        %v3260 = vpop.f32.mrf.mxu0
        %v3261 = vadd.f32 0.0, %v3260
        %v3262 = vpop.f32.mrf.mxu0
        %3263 = vmatprep.mubr.bf16.mxu0 0
        %3264 = vmatmul.mubr.bf16.gmra.mxu0 %v3118
        %v3265 = vpop.f32.mrf.mxu0
        %v3266 = vadd.f32 0.0, %v3265
        %v3267 = vpop.f32.mrf.mxu0
        %v3268 = vpop.f32.mrf.mxu0
        %v3269 = vadd.f32 0.0, %v3268
        %v3270 = vpop.f32.mrf.mxu0
        %3271 = vdwg.mxu0
        %v3272 = vadd.f32 %v3029, %v3210
        %v3273 = vadd.f32 %v3030, %v3213
        %v3274 = vadd.f32 %v3031, %v3218
        %v3275 = vadd.f32 %v3032, %v3221
        %v3276 = vadd.f32 %v3033, %v3226
        %v3277 = vadd.f32 %v3034, %v3229
        %v3278 = vadd.f32 %v3035, %v3234
        %v3279 = vadd.f32 %v3036, %v3237
        %v3280 = vadd.f32 %v3037, %v3242
        %v3281 = vadd.f32 %v3038, %v3245
        %v3282 = vadd.f32 %v3039, %v3250
        %v3283 = vadd.f32 %v3040, %v3253
        %v3284 = vadd.f32 %v3041, %v3258
        %v3285 = vadd.f32 %v3042, %v3261
        %v3286 = vadd.f32 %v3043, %v3266
        %v3287 = vadd.f32 %v3044, %v3269
        %v3288 = vld [vmem:[%s3045] sm:$0xf]
        %v3289 = vld [vmem:[%s3045 + $0x4] sm:$0xf]
        %v3290 = vld [vmem:[%s3045 + $0x8] sm:$0x1]
        %v3291 = vld [vmem:[%s3045 + $0xc] sm:$0xf]
        %v3292 = vld [vmem:[%s3045 + $0x10] sm:$0xf]
        %v3293 = vld [vmem:[%s3045 + $0x14] sm:$0x1]
        %v3294 = vld [vmem:[%s3045 + $0x18] sm:$0xf]
        %v3295 = vld [vmem:[%s3045 + $0x1c] sm:$0xf]
        %v3296 = vld [vmem:[%s3045 + $0x20] sm:$0x1]
        %v3297 = vld [vmem:[%s3045 + $0x24] sm:$0xf]
        %v3298 = vld [vmem:[%s3045 + $0x28] sm:$0xf]
        %v3299 = vld [vmem:[%s3045 + $0x2c] sm:$0x1]
        %v3300 = vld [vmem:[%s3045 + $0x30] sm:$0xf]
        %v3301 = vld [vmem:[%s3045 + $0x34] sm:$0xf]
        %v3302 = vld [vmem:[%s3045 + $0x38] sm:$0x1]
        %v3303 = vld [vmem:[%s3045 + $0x3c] sm:$0xf]
        %v3304 = vld [vmem:[%s3045 + $0x40] sm:$0xf]
        %v3305 = vld [vmem:[%s3045 + $0x44] sm:$0x1]
        %v3306 = vld [vmem:[%s3045 + $0x48] sm:$0xf]
        %v3307 = vld [vmem:[%s3045 + $0x4c] sm:$0xf]
        %v3308 = vld [vmem:[%s3045 + $0x50] sm:$0x1]
        %v3309 = vld [vmem:[%s3045 + $0x54] sm:$0xf]
        %v3310 = vld [vmem:[%s3045 + $0x58] sm:$0xf]
        %v3311 = vld [vmem:[%s3045 + $0x5c] sm:$0x1]
        %v3313 = vshrl.u32 %v3288, 16
        %v3315 = vrot.slane %v3313, 4
        %v3316 = vshll.u32 %v3288, 16
        %v3318 = vrot.slane %v3316, 5
        %v3319 = vor.u32 %v3315, %v3318
        %v3320 = vrot.slane %v3319, 4
        %v3322 = vshll.u32 %v3289, 16
        %v3324 = vrot.slane %v3322, 5
        %v3325 = vsel %vm1205, %v3320, %v3324
        %v3326 = vshrl.u32 %v3289, 16
        %v3328 = vrot.slane %v3326, 4
        %v3329 = vor.u32 %v3328, %v3324
        %v3330 = vrot.slane %v3329, 4
        %v3332 = vshll.u32 %v3290, 16
        %v3334 = vrot.slane %v3332, 5
        %v3335 = vsel %vm1205, %v3330, %v3334
        %v3337 = vshrl.u32 %v3291, 16
        %v3339 = vrot.slane %v3337, 4
        %v3340 = vshll.u32 %v3291, 16
        %v3342 = vrot.slane %v3340, 5
        %v3343 = vor.u32 %v3339, %v3342
        %v3344 = vrot.slane %v3343, 4
        %v3346 = vshll.u32 %v3292, 16
        %v3348 = vrot.slane %v3346, 5
        %v3349 = vsel %vm1205, %v3344, %v3348
        %v3350 = vshrl.u32 %v3292, 16
        %v3352 = vrot.slane %v3350, 4
        %v3353 = vor.u32 %v3352, %v3348
        %v3354 = vrot.slane %v3353, 4
        %v3356 = vshll.u32 %v3293, 16
        %v3358 = vrot.slane %v3356, 5
        %v3359 = vsel %vm1205, %v3354, %v3358
        %v3361 = vshrl.u32 %v3294, 16
        %v3363 = vrot.slane %v3361, 4
        %v3364 = vshll.u32 %v3294, 16
        %v3366 = vrot.slane %v3364, 5
        %v3367 = vor.u32 %v3363, %v3366
        %v3368 = vrot.slane %v3367, 4
        %v3370 = vshll.u32 %v3295, 16
        %v3372 = vrot.slane %v3370, 5
        %v3373 = vsel %vm1205, %v3368, %v3372
        %v3374 = vshrl.u32 %v3295, 16
        %v3376 = vrot.slane %v3374, 4
        %v3377 = vor.u32 %v3376, %v3372
        %v3378 = vrot.slane %v3377, 4
        %v3380 = vshll.u32 %v3296, 16
        %v3382 = vrot.slane %v3380, 5
        %v3383 = vsel %vm1205, %v3378, %v3382
        %v3385 = vshrl.u32 %v3297, 16
        %v3387 = vrot.slane %v3385, 4
        %v3388 = vshll.u32 %v3297, 16
        %v3390 = vrot.slane %v3388, 5
        %v3391 = vor.u32 %v3387, %v3390
        %v3392 = vrot.slane %v3391, 4
        %v3394 = vshll.u32 %v3298, 16
        %v3396 = vrot.slane %v3394, 5
        %v3397 = vsel %vm1205, %v3392, %v3396
        %v3398 = vshrl.u32 %v3298, 16
        %v3400 = vrot.slane %v3398, 4
        %v3401 = vor.u32 %v3400, %v3396
        %v3402 = vrot.slane %v3401, 4
        %v3404 = vshll.u32 %v3299, 16
        %v3406 = vrot.slane %v3404, 5
        %v3407 = vsel %vm1205, %v3402, %v3406
        %v3409 = vshrl.u32 %v3300, 16
        %v3411 = vrot.slane %v3409, 4
        %v3412 = vshll.u32 %v3300, 16
        %v3414 = vrot.slane %v3412, 5
        %v3415 = vor.u32 %v3411, %v3414
        %v3416 = vrot.slane %v3415, 4
        %v3418 = vshll.u32 %v3301, 16
        %v3420 = vrot.slane %v3418, 5
        %v3421 = vsel %vm1205, %v3416, %v3420
        %v3422 = vshrl.u32 %v3301, 16
        %v3424 = vrot.slane %v3422, 4
        %v3425 = vor.u32 %v3424, %v3420
        %v3426 = vrot.slane %v3425, 4
        %v3428 = vshll.u32 %v3302, 16
        %v3430 = vrot.slane %v3428, 5
        %v3431 = vsel %vm1205, %v3426, %v3430
        %v3433 = vshrl.u32 %v3303, 16
        %v3435 = vrot.slane %v3433, 4
        %v3436 = vshll.u32 %v3303, 16
        %v3438 = vrot.slane %v3436, 5
        %v3439 = vor.u32 %v3435, %v3438
        %v3440 = vrot.slane %v3439, 4
        %v3442 = vshll.u32 %v3304, 16
        %v3444 = vrot.slane %v3442, 5
        %v3445 = vsel %vm1205, %v3440, %v3444
        %v3446 = vshrl.u32 %v3304, 16
        %v3448 = vrot.slane %v3446, 4
        %v3449 = vor.u32 %v3448, %v3444
        %v3450 = vrot.slane %v3449, 4
        %v3452 = vshll.u32 %v3305, 16
        %v3454 = vrot.slane %v3452, 5
        %v3455 = vsel %vm1205, %v3450, %v3454
        %v3457 = vshrl.u32 %v3306, 16
        %v3459 = vrot.slane %v3457, 4
        %v3460 = vshll.u32 %v3306, 16
        %v3462 = vrot.slane %v3460, 5
        %v3463 = vor.u32 %v3459, %v3462
        %v3464 = vrot.slane %v3463, 4
        %v3466 = vshll.u32 %v3307, 16
        %v3468 = vrot.slane %v3466, 5
        %v3469 = vsel %vm1205, %v3464, %v3468
        %v3470 = vshrl.u32 %v3307, 16
        %v3472 = vrot.slane %v3470, 4
        %v3473 = vor.u32 %v3472, %v3468
        %v3474 = vrot.slane %v3473, 4
        %v3476 = vshll.u32 %v3308, 16
        %v3478 = vrot.slane %v3476, 5
        %v3479 = vsel %vm1205, %v3474, %v3478
        %v3481 = vshrl.u32 %v3309, 16
        %v3483 = vrot.slane %v3481, 4
        %v3484 = vshll.u32 %v3309, 16
        %v3486 = vrot.slane %v3484, 5
        %v3487 = vor.u32 %v3483, %v3486
        %v3488 = vrot.slane %v3487, 4
        %v3490 = vshll.u32 %v3310, 16
        %v3492 = vrot.slane %v3490, 5
        %v3493 = vsel %vm1205, %v3488, %v3492
        %v3494 = vshrl.u32 %v3310, 16
        %v3496 = vrot.slane %v3494, 4
        %v3497 = vor.u32 %v3496, %v3492
        %v3498 = vrot.slane %v3497, 4
        %v3500 = vshll.u32 %v3311, 16
        %v3502 = vrot.slane %v3500, 5
        %v3503 = vsel %vm1205, %v3498, %v3502
        %s3504 = scalar_lea.vmem [#allocation11], 448
        %v3505 = vld [vmem:[%s3504] sm:$0xf]
        %v3506 = vld [vmem:[%s3504 + $0x4] sm:$0xf]
        %v3507 = vld [vmem:[%s3504 + $0x8] sm:$0xf]
        %v3508 = vld [vmem:[%s3504 + $0xc] sm:$0xf]
        %v3509 = vld [vmem:[%s3504 + $0x10] sm:$0xf]
        %v3510 = vld [vmem:[%s3504 + $0x14] sm:$0xf]
        %v3511 = vld [vmem:[%s3504 + $0x18] sm:$0xf]
        %v3512 = vld [vmem:[%s3504 + $0x1c] sm:$0xf]
        %v3513 = vld [vmem:[%s3504 + $0x20] sm:$0xf]
        %v3514 = vld [vmem:[%s3504 + $0x24] sm:$0xf]
        %v3515 = vld [vmem:[%s3504 + $0x28] sm:$0xf]
        %v3516 = vld [vmem:[%s3504 + $0x2c] sm:$0xf]
        %v3517 = vld [vmem:[%s3504 + $0x30] sm:$0xf]
        %v3518 = vld [vmem:[%s3504 + $0x34] sm:$0xf]
        %v3519 = vld [vmem:[%s3504 + $0x38] sm:$0xf]
        %v3520 = vld [vmem:[%s3504 + $0x3c] sm:$0xf]
        %v3521 = vunpack.c.l.b16 %v3325
        %v3522 = vunpack.c.l.b16 %v3335
        %v3523 = vunpack.c.l.b16 %v3349
        %v3524 = vunpack.c.l.b16 %v3359
        %v3525 = vunpack.c.l.b16 %v3373
        %v3526 = vunpack.c.l.b16 %v3383
        %v3527 = vunpack.c.l.b16 %v3397
        %v3528 = vunpack.c.l.b16 %v3407
        %v3529 = vunpack.c.l.b16 %v3421
        %v3530 = vunpack.c.l.b16 %v3431
        %v3531 = vunpack.c.l.b16 %v3445
        %v3532 = vunpack.c.l.b16 %v3455
        %v3533 = vunpack.c.l.b16 %v3469
        %v3534 = vunpack.c.l.b16 %v3479
        %v3535 = vunpack.c.l.b16 %v3493
        %v3536 = vunpack.c.l.b16 %v3503
        %v3537 = vpack.c.b16 %v3522, %v3521
        %v3538 = vpack.c.b16 %v3524, %v3523
        %v3539 = vpack.c.b16 %v3526, %v3525
        %v3540 = vpack.c.b16 %v3528, %v3527
        %v3541 = vpack.c.b16 %v3530, %v3529
        %v3542 = vpack.c.b16 %v3532, %v3531
        %v3543 = vpack.c.b16 %v3534, %v3533
        %v3544 = vpack.c.b16 %v3536, %v3535
        %v3569 = vunpack.c.l.b16 %v3505
        %v3570 = vunpack.c.l.b16 %v3506
        %v3571 = vunpack.c.l.b16 %v3507
        %v3572 = vunpack.c.l.b16 %v3508
        %v3573 = vunpack.c.l.b16 %v3509
        %v3574 = vunpack.c.l.b16 %v3510
        %v3575 = vunpack.c.l.b16 %v3511
        %v3576 = vunpack.c.l.b16 %v3512
        %v3577 = vunpack.c.l.b16 %v3513
        %v3578 = vunpack.c.l.b16 %v3514
        %v3579 = vunpack.c.l.b16 %v3515
        %v3580 = vunpack.c.l.b16 %v3516
        %v3581 = vunpack.c.l.b16 %v3517
        %v3582 = vunpack.c.l.b16 %v3518
        %v3583 = vunpack.c.l.b16 %v3519
        %v3584 = vunpack.c.l.b16 %v3520
        %v3585 = vpack.c.b16 %v3570, %v3569
        %v3586 = vpack.c.b16 %v3572, %v3571
        %v3587 = vpack.c.b16 %v3574, %v3573
        %v3588 = vpack.c.b16 %v3576, %v3575
        %v3589 = vpack.c.b16 %v3578, %v3577
        %v3590 = vpack.c.b16 %v3580, %v3579
        %v3591 = vpack.c.b16 %v3582, %v3581
        %v3592 = vpack.c.b16 %v3584, %v3583
        %3601 = vmatprep.subr.bf16.mxu0 0
        %3602 = vmatpush1.bf16.msra.mxu0 %v3592
        %3603 = vmatprep.subr.bf16.mxu0 0
        %3604 = vmatpush1.bf16.msra.mxu0 %v3591
        %3605 = vmatprep.subr.bf16.mxu0 0
        %3606 = vmatpush1.bf16.msra.mxu0 %v3590
        %3607 = vmatprep.subr.bf16.mxu0 0
        %3608 = vmatpush1.bf16.msra.mxu0 %v3589
        %3609 = vmatprep.subr.bf16.mxu0 0
        %3610 = vmatpush1.bf16.msra.mxu0 %v3588
        %3611 = vmatprep.subr.bf16.mxu0 0
        %3612 = vmatpush1.bf16.msra.mxu0 %v3587
        %3613 = vmatprep.subr.bf16.mxu0 0
        %3614 = vmatpush1.bf16.msra.mxu0 %v3586
        %3615 = vmatprep.subr.bf16.mxu0 0
        %3616 = vmatpush1.bf16.msra.mxu0 %v3585
        %3617 = vmatprep.subr.bf16.mxu0 0
        %3618 = vmatpush2.bf16.msra.mxu0 0
        %3619 = vmatprep.subr.bf16.mxu0 0
        %3620 = vmatpush2.bf16.msra.mxu0 0
        %3621 = vmatprep.subr.bf16.mxu0 0
        %3622 = vmatpush2.bf16.msra.mxu0 0
        %3623 = vmatprep.subr.bf16.mxu0 0
        %3624 = vmatpush2.bf16.msra.mxu0 0
        %3625 = vmatprep.subr.bf16.mxu0 0
        %3626 = vmatpush2.bf16.msra.mxu0 0
        %3627 = vmatprep.subr.bf16.mxu0 0
        %3628 = vmatpush2.bf16.msra.mxu0 0
        %3629 = vmatprep.subr.bf16.mxu0 0
        %3630 = vmatpush2.bf16.msra.mxu0 0
        %3631 = vmatprep.subr.bf16.mxu0 0
        %3632 = vmatpush2.bf16.msra.mxu0 0
        %3633 = vmatprep.mubr.bf16.mxu0 0
        %3634 = vmatmul.mubr.bf16.gmra.mxu0 %v3537
        %v3635 = vpop.f32.mrf.mxu0
        %v3636 = vadd.f32 0.0, %v3635
        %v3637 = vpop.f32.mrf.mxu0
        %v3638 = vpop.f32.mrf.mxu0
        %v3639 = vadd.f32 0.0, %v3638
        %v3640 = vpop.f32.mrf.mxu0
        %3641 = vmatprep.mubr.bf16.mxu0 0
        %3642 = vmatmul.mubr.bf16.gmra.mxu0 %v3538
        %v3643 = vpop.f32.mrf.mxu0
        %v3644 = vadd.f32 0.0, %v3643
        %v3645 = vpop.f32.mrf.mxu0
        %v3646 = vpop.f32.mrf.mxu0
        %v3647 = vadd.f32 0.0, %v3646
        %v3648 = vpop.f32.mrf.mxu0
        %3649 = vmatprep.mubr.bf16.mxu0 0
        %3650 = vmatmul.mubr.bf16.gmra.mxu0 %v3539
        %v3651 = vpop.f32.mrf.mxu0
        %v3652 = vadd.f32 0.0, %v3651
        %v3653 = vpop.f32.mrf.mxu0
        %v3654 = vpop.f32.mrf.mxu0
        %v3655 = vadd.f32 0.0, %v3654
        %v3656 = vpop.f32.mrf.mxu0
        %3657 = vmatprep.mubr.bf16.mxu0 0
        %3658 = vmatmul.mubr.bf16.gmra.mxu0 %v3540
        %v3659 = vpop.f32.mrf.mxu0
        %v3660 = vadd.f32 0.0, %v3659
        %v3661 = vpop.f32.mrf.mxu0
        %v3662 = vpop.f32.mrf.mxu0
        %v3663 = vadd.f32 0.0, %v3662
        %v3664 = vpop.f32.mrf.mxu0
        %3665 = vmatprep.mubr.bf16.mxu0 0
        %3666 = vmatmul.mubr.bf16.gmra.mxu0 %v3541
        %v3667 = vpop.f32.mrf.mxu0
        %v3668 = vadd.f32 0.0, %v3667
        %v3669 = vpop.f32.mrf.mxu0
        %v3670 = vpop.f32.mrf.mxu0
        %v3671 = vadd.f32 0.0, %v3670
        %v3672 = vpop.f32.mrf.mxu0
        %3673 = vmatprep.mubr.bf16.mxu0 0
        %3674 = vmatmul.mubr.bf16.gmra.mxu0 %v3542
        %v3675 = vpop.f32.mrf.mxu0
        %v3676 = vadd.f32 0.0, %v3675
        %v3677 = vpop.f32.mrf.mxu0
        %v3678 = vpop.f32.mrf.mxu0
        %v3679 = vadd.f32 0.0, %v3678
        %v3680 = vpop.f32.mrf.mxu0
        %3681 = vmatprep.mubr.bf16.mxu0 0
        %3682 = vmatmul.mubr.bf16.gmra.mxu0 %v3543
        %v3683 = vpop.f32.mrf.mxu0
        %v3684 = vadd.f32 0.0, %v3683
        %v3685 = vpop.f32.mrf.mxu0
        %v3686 = vpop.f32.mrf.mxu0
        %v3687 = vadd.f32 0.0, %v3686
        %v3688 = vpop.f32.mrf.mxu0
        %3689 = vmatprep.mubr.bf16.mxu0 0
        %3690 = vmatmul.mubr.bf16.gmra.mxu0 %v3544
        %v3691 = vpop.f32.mrf.mxu0
        %v3692 = vadd.f32 0.0, %v3691
        %v3693 = vpop.f32.mrf.mxu0
        %v3694 = vpop.f32.mrf.mxu0
        %v3695 = vadd.f32 0.0, %v3694
        %v3696 = vpop.f32.mrf.mxu0
        %3697 = vdwg.mxu0
        %v3698 = vadd.f32 %v3272, %v3636
        %v3699 = vadd.f32 %v3273, %v3639
        %v3700 = vadd.f32 %v3274, %v3644
        %v3701 = vadd.f32 %v3275, %v3647
        %v3702 = vadd.f32 %v3276, %v3652
        %v3703 = vadd.f32 %v3277, %v3655
        %v3704 = vadd.f32 %v3278, %v3660
        %v3705 = vadd.f32 %v3279, %v3663
        %v3706 = vadd.f32 %v3280, %v3668
        %v3707 = vadd.f32 %v3281, %v3671
        %v3708 = vadd.f32 %v3282, %v3676
        %v3709 = vadd.f32 %v3283, %v3679
        %v3710 = vadd.f32 %v3284, %v3684
        %v3711 = vadd.f32 %v3285, %v3687
        %v3712 = vadd.f32 %v3286, %v3692
        %v3713 = vadd.f32 %v3287, %v3695
        %v3714 = vld [vmem:[%s3045] sm:$0xe]
        %v3715 = vld [vmem:[%s3045 + $0xc] sm:$0xe]
        %v3716 = vld [vmem:[%s3045 + $0x18] sm:$0xe]
        %v3717 = vld [vmem:[%s3045 + $0x24] sm:$0xe]
        %v3718 = vld [vmem:[%s3045 + $0x30] sm:$0xe]
        %v3719 = vld [vmem:[%s3045 + $0x3c] sm:$0xe]
        %v3720 = vld [vmem:[%s3045 + $0x48] sm:$0xe]
        %v3721 = vld [vmem:[%s3045 + $0x54] sm:$0xe]
        %v3746 = vrot.slane %v3714, 5
        %v3747 = vrot.slane %v3746, 4
        %v3748 = vrot.slane %v3289, 5
        %v3749 = vsel %vm1811, %v3747, %v3748
        %v3750 = vrot.slane %v3748, 4
        %v3751 = vrot.slane %v3290, 5
        %v3752 = vsel %vm1811, %v3750, %v3751
        %v3753 = vrot.slane %v3715, 5
        %v3754 = vrot.slane %v3753, 4
        %v3755 = vrot.slane %v3292, 5
        %v3756 = vsel %vm1811, %v3754, %v3755
        %v3757 = vrot.slane %v3755, 4
        %v3758 = vrot.slane %v3293, 5
        %v3759 = vsel %vm1811, %v3757, %v3758
        %v3760 = vrot.slane %v3716, 5
        %v3761 = vrot.slane %v3760, 4
        %v3762 = vrot.slane %v3295, 5
        %v3763 = vsel %vm1811, %v3761, %v3762
        %v3764 = vrot.slane %v3762, 4
        %v3765 = vrot.slane %v3296, 5
        %v3766 = vsel %vm1811, %v3764, %v3765
        %v3767 = vrot.slane %v3717, 5
        %v3768 = vrot.slane %v3767, 4
        %v3769 = vrot.slane %v3298, 5
        %v3770 = vsel %vm1811, %v3768, %v3769
        %v3771 = vrot.slane %v3769, 4
        %v3772 = vrot.slane %v3299, 5
        %v3773 = vsel %vm1811, %v3771, %v3772
        %v3774 = vrot.slane %v3718, 5
        %v3775 = vrot.slane %v3774, 4
        %v3776 = vrot.slane %v3301, 5
        %v3777 = vsel %vm1811, %v3775, %v3776
        %v3778 = vrot.slane %v3776, 4
        %v3779 = vrot.slane %v3302, 5
        %v3780 = vsel %vm1811, %v3778, %v3779
        %v3781 = vrot.slane %v3719, 5
        %v3782 = vrot.slane %v3781, 4
        %v3783 = vrot.slane %v3304, 5
        %v3784 = vsel %vm1811, %v3782, %v3783
        %v3785 = vrot.slane %v3783, 4
        %v3786 = vrot.slane %v3305, 5
        %v3787 = vsel %vm1811, %v3785, %v3786
        %v3788 = vrot.slane %v3720, 5
        %v3789 = vrot.slane %v3788, 4
        %v3790 = vrot.slane %v3307, 5
        %v3791 = vsel %vm1811, %v3789, %v3790
        %v3792 = vrot.slane %v3790, 4
        %v3793 = vrot.slane %v3308, 5
        %v3794 = vsel %vm1811, %v3792, %v3793
        %v3795 = vrot.slane %v3721, 5
        %v3796 = vrot.slane %v3795, 4
        %v3797 = vrot.slane %v3310, 5
        %v3798 = vsel %vm1811, %v3796, %v3797
        %v3799 = vrot.slane %v3797, 4
        %v3800 = vrot.slane %v3311, 5
        %v3801 = vsel %vm1811, %v3799, %v3800
        %s3802 = scalar_lea.vmem [#allocation11], 512
        %v3803 = vld [vmem:[%s3802] sm:$0xf]
        %v3804 = vld [vmem:[%s3802 + $0x4] sm:$0xf]
        %v3805 = vld [vmem:[%s3802 + $0x8] sm:$0xf]
        %v3806 = vld [vmem:[%s3802 + $0xc] sm:$0xf]
        %v3807 = vld [vmem:[%s3802 + $0x10] sm:$0xf]
        %v3808 = vld [vmem:[%s3802 + $0x14] sm:$0xf]
        %v3809 = vld [vmem:[%s3802 + $0x18] sm:$0xf]
        %v3810 = vld [vmem:[%s3802 + $0x1c] sm:$0xf]
        %v3811 = vld [vmem:[%s3802 + $0x20] sm:$0xf]
        %v3812 = vld [vmem:[%s3802 + $0x24] sm:$0xf]
        %v3813 = vld [vmem:[%s3802 + $0x28] sm:$0xf]
        %v3814 = vld [vmem:[%s3802 + $0x2c] sm:$0xf]
        %v3815 = vld [vmem:[%s3802 + $0x30] sm:$0xf]
        %v3816 = vld [vmem:[%s3802 + $0x34] sm:$0xf]
        %v3817 = vld [vmem:[%s3802 + $0x38] sm:$0xf]
        %v3818 = vld [vmem:[%s3802 + $0x3c] sm:$0xf]
        %v3819 = vunpack.c.l.b16 %v3749
        %v3820 = vunpack.c.l.b16 %v3752
        %v3821 = vunpack.c.l.b16 %v3756
        %v3822 = vunpack.c.l.b16 %v3759
        %v3823 = vunpack.c.l.b16 %v3763
        %v3824 = vunpack.c.l.b16 %v3766
        %v3825 = vunpack.c.l.b16 %v3770
        %v3826 = vunpack.c.l.b16 %v3773
        %v3827 = vunpack.c.l.b16 %v3777
        %v3828 = vunpack.c.l.b16 %v3780
        %v3829 = vunpack.c.l.b16 %v3784
        %v3830 = vunpack.c.l.b16 %v3787
        %v3831 = vunpack.c.l.b16 %v3791
        %v3832 = vunpack.c.l.b16 %v3794
        %v3833 = vunpack.c.l.b16 %v3798
        %v3834 = vunpack.c.l.b16 %v3801
        %v3835 = vpack.c.b16 %v3820, %v3819
        %v3836 = vpack.c.b16 %v3822, %v3821
        %v3837 = vpack.c.b16 %v3824, %v3823
        %v3838 = vpack.c.b16 %v3826, %v3825
        %v3839 = vpack.c.b16 %v3828, %v3827
        %v3840 = vpack.c.b16 %v3830, %v3829
        %v3841 = vpack.c.b16 %v3832, %v3831
        %v3842 = vpack.c.b16 %v3834, %v3833
        %v3867 = vunpack.c.l.b16 %v3803
        %v3868 = vunpack.c.l.b16 %v3804
        %v3869 = vunpack.c.l.b16 %v3805
        %v3870 = vunpack.c.l.b16 %v3806
        %v3871 = vunpack.c.l.b16 %v3807
        %v3872 = vunpack.c.l.b16 %v3808
        %v3873 = vunpack.c.l.b16 %v3809
        %v3874 = vunpack.c.l.b16 %v3810
        %v3875 = vunpack.c.l.b16 %v3811
        %v3876 = vunpack.c.l.b16 %v3812
        %v3877 = vunpack.c.l.b16 %v3813
        %v3878 = vunpack.c.l.b16 %v3814
        %v3879 = vunpack.c.l.b16 %v3815
        %v3880 = vunpack.c.l.b16 %v3816
        %v3881 = vunpack.c.l.b16 %v3817
        %v3882 = vunpack.c.l.b16 %v3818
        %v3883 = vpack.c.b16 %v3868, %v3867
        %v3884 = vpack.c.b16 %v3870, %v3869
        %v3885 = vpack.c.b16 %v3872, %v3871
        %v3886 = vpack.c.b16 %v3874, %v3873
        %v3887 = vpack.c.b16 %v3876, %v3875
        %v3888 = vpack.c.b16 %v3878, %v3877
        %v3889 = vpack.c.b16 %v3880, %v3879
        %v3890 = vpack.c.b16 %v3882, %v3881
        %3899 = vmatprep.subr.bf16.mxu0 0
        %3900 = vmatpush1.bf16.msra.mxu0 %v3890
        %3901 = vmatprep.subr.bf16.mxu0 0
        %3902 = vmatpush1.bf16.msra.mxu0 %v3889
        %3903 = vmatprep.subr.bf16.mxu0 0
        %3904 = vmatpush1.bf16.msra.mxu0 %v3888
        %3905 = vmatprep.subr.bf16.mxu0 0
        %3906 = vmatpush1.bf16.msra.mxu0 %v3887
        %3907 = vmatprep.subr.bf16.mxu0 0
        %3908 = vmatpush1.bf16.msra.mxu0 %v3886
        %3909 = vmatprep.subr.bf16.mxu0 0
        %3910 = vmatpush1.bf16.msra.mxu0 %v3885
        %3911 = vmatprep.subr.bf16.mxu0 0
        %3912 = vmatpush1.bf16.msra.mxu0 %v3884
        %3913 = vmatprep.subr.bf16.mxu0 0
        %3914 = vmatpush1.bf16.msra.mxu0 %v3883
        %3915 = vmatprep.subr.bf16.mxu0 0
        %3916 = vmatpush2.bf16.msra.mxu0 0
        %3917 = vmatprep.subr.bf16.mxu0 0
        %3918 = vmatpush2.bf16.msra.mxu0 0
        %3919 = vmatprep.subr.bf16.mxu0 0
        %3920 = vmatpush2.bf16.msra.mxu0 0
        %3921 = vmatprep.subr.bf16.mxu0 0
        %3922 = vmatpush2.bf16.msra.mxu0 0
        %3923 = vmatprep.subr.bf16.mxu0 0
        %3924 = vmatpush2.bf16.msra.mxu0 0
        %3925 = vmatprep.subr.bf16.mxu0 0
        %3926 = vmatpush2.bf16.msra.mxu0 0
        %3927 = vmatprep.subr.bf16.mxu0 0
        %3928 = vmatpush2.bf16.msra.mxu0 0
        %3929 = vmatprep.subr.bf16.mxu0 0
        %3930 = vmatpush2.bf16.msra.mxu0 0
        %3931 = vmatprep.mubr.bf16.mxu0 0
        %3932 = vmatmul.mubr.bf16.gmra.mxu0 %v3835
        %v3933 = vpop.f32.mrf.mxu0
        %v3934 = vadd.f32 0.0, %v3933
        %v3935 = vpop.f32.mrf.mxu0
        %v3936 = vpop.f32.mrf.mxu0
        %v3937 = vadd.f32 0.0, %v3936
        %v3938 = vpop.f32.mrf.mxu0
        %3939 = vmatprep.mubr.bf16.mxu0 0
        %3940 = vmatmul.mubr.bf16.gmra.mxu0 %v3836
        %v3941 = vpop.f32.mrf.mxu0
        %v3942 = vadd.f32 0.0, %v3941
        %v3943 = vpop.f32.mrf.mxu0
        %v3944 = vpop.f32.mrf.mxu0
        %v3945 = vadd.f32 0.0, %v3944
        %v3946 = vpop.f32.mrf.mxu0
        %3947 = vmatprep.mubr.bf16.mxu0 0
        %3948 = vmatmul.mubr.bf16.gmra.mxu0 %v3837
        %v3949 = vpop.f32.mrf.mxu0
        %v3950 = vadd.f32 0.0, %v3949
        %v3951 = vpop.f32.mrf.mxu0
        %v3952 = vpop.f32.mrf.mxu0
        %v3953 = vadd.f32 0.0, %v3952
        %v3954 = vpop.f32.mrf.mxu0
        %3955 = vmatprep.mubr.bf16.mxu0 0
        %3956 = vmatmul.mubr.bf16.gmra.mxu0 %v3838
        %v3957 = vpop.f32.mrf.mxu0
        %v3958 = vadd.f32 0.0, %v3957
        %v3959 = vpop.f32.mrf.mxu0
        %v3960 = vpop.f32.mrf.mxu0
        %v3961 = vadd.f32 0.0, %v3960
        %v3962 = vpop.f32.mrf.mxu0
        %3963 = vmatprep.mubr.bf16.mxu0 0
        %3964 = vmatmul.mubr.bf16.gmra.mxu0 %v3839
        %v3965 = vpop.f32.mrf.mxu0
        %v3966 = vadd.f32 0.0, %v3965
        %v3967 = vpop.f32.mrf.mxu0
        %v3968 = vpop.f32.mrf.mxu0
        %v3969 = vadd.f32 0.0, %v3968
        %v3970 = vpop.f32.mrf.mxu0
        %3971 = vmatprep.mubr.bf16.mxu0 0
        %3972 = vmatmul.mubr.bf16.gmra.mxu0 %v3840
        %v3973 = vpop.f32.mrf.mxu0
        %v3974 = vadd.f32 0.0, %v3973
        %v3975 = vpop.f32.mrf.mxu0
        %v3976 = vpop.f32.mrf.mxu0
        %v3977 = vadd.f32 0.0, %v3976
        %v3978 = vpop.f32.mrf.mxu0
        %3979 = vmatprep.mubr.bf16.mxu0 0
        %3980 = vmatmul.mubr.bf16.gmra.mxu0 %v3841
        %v3981 = vpop.f32.mrf.mxu0
        %v3982 = vadd.f32 0.0, %v3981
        %v3983 = vpop.f32.mrf.mxu0
        %v3984 = vpop.f32.mrf.mxu0
        %v3985 = vadd.f32 0.0, %v3984
        %v3986 = vpop.f32.mrf.mxu0
        %3987 = vmatprep.mubr.bf16.mxu0 0
        %3988 = vmatmul.mubr.bf16.gmra.mxu0 %v3842
        %v3989 = vpop.f32.mrf.mxu0
        %v3990 = vadd.f32 0.0, %v3989
        %v3991 = vpop.f32.mrf.mxu0
        %v3992 = vpop.f32.mrf.mxu0
        %v3993 = vadd.f32 0.0, %v3992
        %v3994 = vpop.f32.mrf.mxu0
        %3995 = vdwg.mxu0
        %v3996 = vadd.f32 %v3698, %v3934
        %v3997 = vadd.f32 %v3699, %v3937
        %v3998 = vadd.f32 %v3700, %v3942
        %v3999 = vadd.f32 %v3701, %v3945
        %v4000 = vadd.f32 %v3702, %v3950
        %v4001 = vadd.f32 %v3703, %v3953
        %v4002 = vadd.f32 %v3704, %v3958
        %v4003 = vadd.f32 %v3705, %v3961
        %v4004 = vadd.f32 %v3706, %v3966
        %v4005 = vadd.f32 %v3707, %v3969
        %v4006 = vadd.f32 %v3708, %v3974
        %v4007 = vadd.f32 %v3709, %v3977
        %v4008 = vadd.f32 %v3710, %v3982
        %v4009 = vadd.f32 %v3711, %v3985
        %v4010 = vadd.f32 %v3712, %v3990
        %v4011 = vadd.f32 %v3713, %v3993
        %v4012 = vld [vmem:[%s6] sm:$0x1]
        %v4014 = vlaneseq
        %v4015 = vshrl.u32 %v4014, 7
        %v4016 = vsub.s32 0, %v4015
        %v4017 = vrot.slane %v4012, %v4016
        %v4019 = vadd.f32 %v3996, %v4017
        %v4020 = vadd.f32 %v3997, %v4017
        %v4021 = vadd.f32 %v3998, %v4017
        %v4022 = vadd.f32 %v3999, %v4017
        %v4023 = vadd.f32 %v4000, %v4017
        %v4024 = vadd.f32 %v4001, %v4017
        %v4025 = vadd.f32 %v4002, %v4017
        %v4026 = vadd.f32 %v4003, %v4017
        %v4027 = vadd.f32 %v4004, %v4017
        %v4028 = vadd.f32 %v4005, %v4017
        %v4029 = vadd.f32 %v4006, %v4017
        %v4030 = vadd.f32 %v4007, %v4017
        %v4031 = vadd.f32 %v4008, %v4017
        %v4032 = vadd.f32 %v4009, %v4017
        %v4033 = vadd.f32 %v4010, %v4017
        %v4034 = vadd.f32 %v4011, %v4017
        %v4035 = vmax.f32 %v4019, 0.0
        %v4036 = vmax.f32 %v4020, 0.0
        %v4037 = vmax.f32 %v4021, 0.0
        %v4038 = vmax.f32 %v4022, 0.0
        %v4039 = vmax.f32 %v4023, 0.0
        %v4040 = vmax.f32 %v4024, 0.0
        %v4041 = vmax.f32 %v4025, 0.0
        %v4042 = vmax.f32 %v4026, 0.0
        %v4043 = vmax.f32 %v4027, 0.0
        %v4044 = vmax.f32 %v4028, 0.0
        %v4045 = vmax.f32 %v4029, 0.0
        %v4046 = vmax.f32 %v4030, 0.0
        %v4047 = vmax.f32 %v4031, 0.0
        %v4048 = vmax.f32 %v4032, 0.0
        %v4049 = vmax.f32 %v4033, 0.0
        %v4050 = vmax.f32 %v4034, 0.0
        %v4051 = vpack.c.bf16 %v4036, %v4035
        %v4052 = vpack.c.bf16 %v4038, %v4037
        %v4053 = vpack.c.bf16 %v4040, %v4039
        %v4054 = vpack.c.bf16 %v4042, %v4041
        %v4055 = vpack.c.bf16 %v4044, %v4043
        %v4056 = vpack.c.bf16 %v4046, %v4045
        %v4057 = vpack.c.bf16 %v4048, %v4047
        %v4058 = vpack.c.bf16 %v4050, %v4049
        %v4059 = vld [vmem:[#allocation12] sm:$0xf]
        %v4060 = vld [vmem:[#allocation12 + $0x4] sm:$0xf]
        %v4061 = vld [vmem:[#allocation12 + $0x8] sm:$0xf]
        %v4062 = vld [vmem:[#allocation12 + $0xc] sm:$0xf]
        %v4063 = vld [vmem:[#allocation12 + $0x10] sm:$0xf]
        %v4064 = vld [vmem:[#allocation12 + $0x14] sm:$0xf]
        %v4065 = vld [vmem:[#allocation12 + $0x18] sm:$0xf]
        %v4066 = vld [vmem:[#allocation12 + $0x1c] sm:$0xf]
        %v4067 = vld [vmem:[#allocation12 + $0x20] sm:$0xf]
        %v4068 = vld [vmem:[#allocation12 + $0x24] sm:$0xf]
        %v4069 = vld [vmem:[#allocation12 + $0x28] sm:$0xf]
        %v4070 = vld [vmem:[#allocation12 + $0x2c] sm:$0xf]
        %v4071 = vld [vmem:[#allocation12 + $0x30] sm:$0xf]
        %v4072 = vld [vmem:[#allocation12 + $0x34] sm:$0xf]
        %v4073 = vld [vmem:[#allocation12 + $0x38] sm:$0xf]
        %v4074 = vld [vmem:[#allocation12 + $0x3c] sm:$0xf]
        %v4075 = vld [vmem:[%s8] sm:$0x1]
        %v4077 = vlaneseq
        %v4078 = vshrl.u32 %v4077, 7
        %v4079 = vsub.s32 0, %v4078
        %v4080 = vrot.slane %v4075, %v4079
        %v4098 = vunpack.c.l.b16 %v4059
        %v4099 = vunpack.c.l.b16 %v4060
        %v4100 = vunpack.c.l.b16 %v4061
        %v4101 = vunpack.c.l.b16 %v4062
        %v4102 = vunpack.c.l.b16 %v4063
        %v4103 = vunpack.c.l.b16 %v4064
        %v4104 = vunpack.c.l.b16 %v4065
        %v4105 = vunpack.c.l.b16 %v4066
        %v4106 = vunpack.c.l.b16 %v4067
        %v4107 = vunpack.c.l.b16 %v4068
        %v4108 = vunpack.c.l.b16 %v4069
        %v4109 = vunpack.c.l.b16 %v4070
        %v4110 = vunpack.c.l.b16 %v4071
        %v4111 = vunpack.c.l.b16 %v4072
        %v4112 = vunpack.c.l.b16 %v4073
        %v4113 = vunpack.c.l.b16 %v4074
        %v4114 = vpack.c.b16 %v4099, %v4098
        %v4115 = vpack.c.b16 %v4101, %v4100
        %v4116 = vpack.c.b16 %v4103, %v4102
        %v4117 = vpack.c.b16 %v4105, %v4104
        %v4118 = vpack.c.b16 %v4107, %v4106
        %v4119 = vpack.c.b16 %v4109, %v4108
        %v4120 = vpack.c.b16 %v4111, %v4110
        %v4121 = vpack.c.b16 %v4113, %v4112
        %4130 = vmatprep.subr.bf16.mxu0 0
        %4131 = vmatpush1.bf16.msra.mxu0 %v4121
        %4132 = vmatprep.subr.bf16.mxu0 0
        %4133 = vmatpush1.bf16.msra.mxu0 %v4120
        %4134 = vmatprep.subr.bf16.mxu0 0
        %4135 = vmatpush1.bf16.msra.mxu0 %v4119
        %4136 = vmatprep.subr.bf16.mxu0 0
        %4137 = vmatpush1.bf16.msra.mxu0 %v4118
        %4138 = vmatprep.subr.bf16.mxu0 0
        %4139 = vmatpush1.bf16.msra.mxu0 %v4117
        %4140 = vmatprep.subr.bf16.mxu0 0
        %4141 = vmatpush1.bf16.msra.mxu0 %v4116
        %4142 = vmatprep.subr.bf16.mxu0 0
        %4143 = vmatpush1.bf16.msra.mxu0 %v4115
        %4144 = vmatprep.subr.bf16.mxu0 0
        %4145 = vmatpush1.bf16.msra.mxu0 %v4114
        %4146 = vmatprep.subr.bf16.mxu0 0
        %4147 = vmatpush2.bf16.msra.mxu0 0
        %4148 = vmatprep.subr.bf16.mxu0 0
        %4149 = vmatpush2.bf16.msra.mxu0 0
        %4150 = vmatprep.subr.bf16.mxu0 0
        %4151 = vmatpush2.bf16.msra.mxu0 0
        %4152 = vmatprep.subr.bf16.mxu0 0
        %4153 = vmatpush2.bf16.msra.mxu0 0
        %4154 = vmatprep.subr.bf16.mxu0 0
        %4155 = vmatpush2.bf16.msra.mxu0 0
        %4156 = vmatprep.subr.bf16.mxu0 0
        %4157 = vmatpush2.bf16.msra.mxu0 0
        %4158 = vmatprep.subr.bf16.mxu0 0
        %4159 = vmatpush2.bf16.msra.mxu0 0
        %4160 = vmatprep.subr.bf16.mxu0 0
        %4161 = vmatpush2.bf16.msra.mxu0 0
        %4162 = vmatprep.mubr.bf16.mxu0 0
        %4163 = vmatmul.mubr.bf16.gmra.mxu0 %v4051
        %v4164 = vpop.f32.mrf.mxu0
        %v4165 = vadd.f32 %v4080, %v4164
        %v4166 = vpop.f32.mrf.mxu0
        %v4167 = vpop.f32.mrf.mxu0
        %v4168 = vadd.f32 %v4080, %v4167
        %v4169 = vpop.f32.mrf.mxu0
        %4170 = vmatprep.mubr.bf16.mxu0 0
        %4171 = vmatmul.mubr.bf16.gmra.mxu0 %v4052
        %v4172 = vpop.f32.mrf.mxu0
        %v4173 = vadd.f32 %v4080, %v4172
        %v4174 = vpop.f32.mrf.mxu0
        %v4175 = vpop.f32.mrf.mxu0
        %v4176 = vadd.f32 %v4080, %v4175
        %v4177 = vpop.f32.mrf.mxu0
        %4178 = vmatprep.mubr.bf16.mxu0 0
        %4179 = vmatmul.mubr.bf16.gmra.mxu0 %v4053
        %v4180 = vpop.f32.mrf.mxu0
        %v4181 = vadd.f32 %v4080, %v4180
        %v4182 = vpop.f32.mrf.mxu0
        %v4183 = vpop.f32.mrf.mxu0
        %v4184 = vadd.f32 %v4080, %v4183
        %v4185 = vpop.f32.mrf.mxu0
        %4186 = vmatprep.mubr.bf16.mxu0 0
        %4187 = vmatmul.mubr.bf16.gmra.mxu0 %v4054
        %v4188 = vpop.f32.mrf.mxu0
        %v4189 = vadd.f32 %v4080, %v4188
        %v4190 = vpop.f32.mrf.mxu0
        %v4191 = vpop.f32.mrf.mxu0
        %v4192 = vadd.f32 %v4080, %v4191
        %v4193 = vpop.f32.mrf.mxu0
        %4194 = vmatprep.mubr.bf16.mxu0 0
        %4195 = vmatmul.mubr.bf16.gmra.mxu0 %v4055
        %v4196 = vpop.f32.mrf.mxu0
        %v4197 = vadd.f32 %v4080, %v4196
        %v4198 = vpop.f32.mrf.mxu0
        %v4199 = vpop.f32.mrf.mxu0
        %v4200 = vadd.f32 %v4080, %v4199
        %v4201 = vpop.f32.mrf.mxu0
        %4202 = vmatprep.mubr.bf16.mxu0 0
        %4203 = vmatmul.mubr.bf16.gmra.mxu0 %v4056
        %v4204 = vpop.f32.mrf.mxu0
        %v4205 = vadd.f32 %v4080, %v4204
        %v4206 = vpop.f32.mrf.mxu0
        %v4207 = vpop.f32.mrf.mxu0
        %v4208 = vadd.f32 %v4080, %v4207
        %v4209 = vpop.f32.mrf.mxu0
        %4210 = vmatprep.mubr.bf16.mxu0 0
        %4211 = vmatmul.mubr.bf16.gmra.mxu0 %v4057
        %v4212 = vpop.f32.mrf.mxu0
        %v4213 = vadd.f32 %v4080, %v4212
        %v4214 = vpop.f32.mrf.mxu0
        %v4215 = vpop.f32.mrf.mxu0
        %v4216 = vadd.f32 %v4080, %v4215
        %v4217 = vpop.f32.mrf.mxu0
        %4218 = vmatprep.mubr.bf16.mxu0 0
        %4219 = vmatmul.mubr.bf16.gmra.mxu0 %v4058
        %v4220 = vpop.f32.mrf.mxu0
        %v4221 = vadd.f32 %v4080, %v4220
        %v4222 = vpop.f32.mrf.mxu0
        %v4223 = vpop.f32.mrf.mxu0
        %v4224 = vadd.f32 %v4080, %v4223
        %v4225 = vpop.f32.mrf.mxu0
        %4226 = vdwg.mxu0
        %v4227 = vld [vmem:[%s448] sm:$0xf]
        %v4228 = vld [vmem:[%s448 + $0x4] sm:$0xf]
        %v4229 = vld [vmem:[%s448 + $0x8] sm:$0xf]
        %v4230 = vld [vmem:[%s448 + $0xc] sm:$0xf]
        %v4231 = vld [vmem:[%s448 + $0x10] sm:$0xf]
        %v4232 = vld [vmem:[%s448 + $0x14] sm:$0xf]
        %v4233 = vld [vmem:[%s448 + $0x18] sm:$0xf]
        %v4234 = vld [vmem:[%s448 + $0x1c] sm:$0xf]
        %v4235 = vld [vmem:[%s448 + $0x20] sm:$0xf]
        %v4236 = vld [vmem:[%s448 + $0x24] sm:$0xf]
        %v4237 = vld [vmem:[%s448 + $0x28] sm:$0xf]
        %v4238 = vld [vmem:[%s448 + $0x2c] sm:$0xf]
        %v4239 = vld [vmem:[%s448 + $0x30] sm:$0xf]
        %v4240 = vld [vmem:[%s448 + $0x34] sm:$0xf]
        %v4241 = vld [vmem:[%s448 + $0x38] sm:$0xf]
        %v4242 = vld [vmem:[%s448 + $0x3c] sm:$0xf]
        %v4243 = vunpack.c.l.bf16 %v4227
        %v4244 = vunpack.c.l.bf16 %v4228
        %v4245 = vunpack.c.l.bf16 %v4229
        %v4246 = vunpack.c.l.bf16 %v4230
        %v4247 = vunpack.c.l.bf16 %v4231
        %v4248 = vunpack.c.l.bf16 %v4232
        %v4249 = vunpack.c.l.bf16 %v4233
        %v4250 = vunpack.c.l.bf16 %v4234
        %v4251 = vunpack.c.l.bf16 %v4235
        %v4252 = vunpack.c.l.bf16 %v4236
        %v4253 = vunpack.c.l.bf16 %v4237
        %v4254 = vunpack.c.l.bf16 %v4238
        %v4255 = vunpack.c.l.bf16 %v4239
        %v4256 = vunpack.c.l.bf16 %v4240
        %v4257 = vunpack.c.l.bf16 %v4241
        %v4258 = vunpack.c.l.bf16 %v4242
        %v4259 = vadd.f32 %v4165, %v4243
        %v4260 = vadd.f32 %v4168, %v4244
        %v4261 = vadd.f32 %v4173, %v4245
        %v4262 = vadd.f32 %v4176, %v4246
        %v4263 = vadd.f32 %v4181, %v4247
        %v4264 = vadd.f32 %v4184, %v4248
        %v4265 = vadd.f32 %v4189, %v4249
        %v4266 = vadd.f32 %v4192, %v4250
        %v4267 = vadd.f32 %v4197, %v4251
        %v4268 = vadd.f32 %v4200, %v4252
        %v4269 = vadd.f32 %v4205, %v4253
        %v4270 = vadd.f32 %v4208, %v4254
        %v4271 = vadd.f32 %v4213, %v4255
        %v4272 = vadd.f32 %v4216, %v4256
        %v4273 = vadd.f32 %v4221, %v4257
        %v4274 = vadd.f32 %v4224, %v4258
        %v4275 = vmax.f32 %v4259, 0.0
        %v4276 = vmax.f32 %v4260, 0.0
        %v4277 = vmax.f32 %v4261, 0.0
        %v4278 = vmax.f32 %v4262, 0.0
        %v4279 = vmax.f32 %v4263, 0.0
        %v4280 = vmax.f32 %v4264, 0.0
        %v4281 = vmax.f32 %v4265, 0.0
        %v4282 = vmax.f32 %v4266, 0.0
        %v4283 = vmax.f32 %v4267, 0.0
        %v4284 = vmax.f32 %v4268, 0.0
        %v4285 = vmax.f32 %v4269, 0.0
        %v4286 = vmax.f32 %v4270, 0.0
        %v4287 = vmax.f32 %v4271, 0.0
        %v4288 = vmax.f32 %v4272, 0.0
        %v4289 = vmax.f32 %v4273, 0.0
        %v4290 = vmax.f32 %v4274, 0.0
        %v4291 = vpack.c.bf16 %v4276, %v4275
        %v4292 = vpack.c.bf16 %v4278, %v4277
        %v4293 = vpack.c.bf16 %v4280, %v4279
        %v4294 = vpack.c.bf16 %v4282, %v4281
        %v4295 = vpack.c.bf16 %v4284, %v4283
        %v4296 = vpack.c.bf16 %v4286, %v4285
        %v4297 = vpack.c.bf16 %v4288, %v4287
        %v4298 = vpack.c.bf16 %v4290, %v4289
        %v4307 = vunpack.c.l.b16 %v4291
        %v4308 = vunpack.c.h.b16 %v4291
        %v4309 = vunpack.c.l.b16 %v4292
        %v4310 = vunpack.c.h.b16 %v4292
        %v4311 = vunpack.c.l.b16 %v4293
        %v4312 = vunpack.c.h.b16 %v4293
        %v4313 = vunpack.c.l.b16 %v4294
        %v4314 = vunpack.c.h.b16 %v4294
        %v4315 = vunpack.c.l.b16 %v4295
        %v4316 = vunpack.c.h.b16 %v4295
        %v4317 = vunpack.c.l.b16 %v4296
        %v4318 = vunpack.c.h.b16 %v4296
        %v4319 = vunpack.c.l.b16 %v4297
        %v4320 = vunpack.c.h.b16 %v4297
        %v4321 = vunpack.c.l.b16 %v4298
        %v4322 = vunpack.c.h.b16 %v4298
        %v4323 = vpack.c.b16 %v4307, %v4307
        %v4324 = vpack.c.b16 %v4308, %v4308
        %v4325 = vpack.c.b16 %v4309, %v4309
        %v4326 = vpack.c.b16 %v4310, %v4310
        %v4327 = vpack.c.b16 %v4311, %v4311
        %v4328 = vpack.c.b16 %v4312, %v4312
        %v4329 = vpack.c.b16 %v4313, %v4313
        %v4330 = vpack.c.b16 %v4314, %v4314
        %v4331 = vpack.c.b16 %v4315, %v4315
        %v4332 = vpack.c.b16 %v4316, %v4316
        %v4333 = vpack.c.b16 %v4317, %v4317
        %v4334 = vpack.c.b16 %v4318, %v4318
        %v4335 = vpack.c.b16 %v4319, %v4319
        %v4336 = vpack.c.b16 %v4320, %v4320
        %v4337 = vpack.c.b16 %v4321, %v4321
        %v4338 = vpack.c.b16 %v4322, %v4322
        %4355 = vst [vmem:[%s522] sm:$0xf] %v4323
        %4356 = vst [vmem:[%s522 + $0x4] sm:$0xf] %v4324
        %4357 = vst [vmem:[%s522 + $0x8] sm:$0xf] %v4325
        %4358 = vst [vmem:[%s522 + $0xc] sm:$0xf] %v4326
        %4359 = vst [vmem:[%s522 + $0x10] sm:$0xf] %v4327
        %4360 = vst [vmem:[%s522 + $0x14] sm:$0xf] %v4328
        %4361 = vst [vmem:[%s522 + $0x18] sm:$0xf] %v4329
        %4362 = vst [vmem:[%s522 + $0x1c] sm:$0xf] %v4330
        %4363 = vst [vmem:[%s522 + $0x20] sm:$0xf] %v4331
        %4364 = vst [vmem:[%s522 + $0x24] sm:$0xf] %v4332
        %4365 = vst [vmem:[%s522 + $0x28] sm:$0xf] %v4333
        %4366 = vst [vmem:[%s522 + $0x2c] sm:$0xf] %v4334
        %4367 = vst [vmem:[%s522 + $0x30] sm:$0xf] %v4335
        %4368 = vst [vmem:[%s522 + $0x34] sm:$0xf] %v4336
        %4369 = vst [vmem:[%s522 + $0x38] sm:$0xf] %v4337
        %4370 = vst [vmem:[%s522 + $0x3c] sm:$0xf] %v4338
        %s4371 = sand.u32 %s279, 1
        %s4372 = scalar_lea.sflag [#allocation5], %s4371
        %s4373 = sand.u32 %s279, 1
        %s4374 = smul.addr %s4373, 64
        %s4375 = scalar_lea.vmem [#allocation14], %s4374
        // Predicated region
        $region81: #{tpu_custom_call.1} parent=55 // pred_check
          %p4376 = pneg %p289
        $region82: #{tpu_custom_call.1} parent=55 // pred_check_branch
          %4378 = sbr.rel (%p4376) target = $region84
        $region83: #{tpu_custom_call.1} parent=55 // pred_region
          %s4379 = smul.u32 8, %s36
          %s4381 = ssub.s32 1024, 1024
          %4382 = vsyncadd %s4372, %s4381
          %s4383 = smul.addr %s4379, 2
          %s4384 = smul.addr %s35, 32
          %s4385 = sadd.s32 %s4383, %s4384
          %s4386 = smul.addr %s4385, 64
          %s4387 = scalar_lea.hbm %s9, %s4386
          %s4388 = sshll.u32 %s4375, 4
          %s4389 = int_to_ptr.vmem [resolvable:$true] %s4388
          %4394 = dma.vmem_to_hbm [thread:$0]  %s4389, 1024, %s4387, %s4372, 64, 64, 4
        $region84: #{tpu_custom_call.1} parent=55 // pred_fallthru
          _
      $region56: #{tpu_custom_call.1} parent=5 // pred_fallthru
        _
      %p4395 = scmp.le.s32.totalorder 2, %s26
      // Predicated region
      $region85: #{tpu_custom_call.1} parent=5 // pred_check
        %p4396 = pneg %p4395
      $region86: #{tpu_custom_call.1} parent=5 // pred_check_branch
        %4398 = sbr.rel (%p4396) target = $region88
      $region87: #{tpu_custom_call.1} parent=5 // pred_region
        %s4399 = ssub.s32 %s26, 2
        // Predicated region
        $region89: #{tpu_custom_call.1} parent=87 // pred_check
          %p4400 = pneg %p295
        $region90: #{tpu_custom_call.1} parent=87 // pred_check_branch
          %4402 = sbr.rel (%p4400) target = $region92
        $region91: #{tpu_custom_call.1} parent=87 // pred_region
          %s4403 = sand.u32 %s280, 1
          %s4404 = scalar_lea.sflag [#allocation5], %s4403
          %s4405 = sand.u32 %s280, 1
          %s4406 = smul.addr %s4405, 64
          %s4407 = scalar_lea.vmem [#allocation14], %s4406
          %4408 = dma.done %s4404, 1024
        $region92: #{tpu_custom_call.1} parent=87 // pred_fallthru
          _
      $region88: #{tpu_custom_call.1} parent=5 // pred_fallthru
        _
    $region6: #{tpu_custom_call.1} parent=1 // loop_footer
      %s30 = sadd.s32 1, %s26
    $region7: #{tpu_custom_call.1} parent=1 // loop_footer_branch
      %25 = sbr.rel target = $region3
    $region8: #{tpu_custom_call.1} parent=1 // loop_exit
      _
    %4409 = vsyncpa [#allocation4], 1
    %s4410 = scalar_lea.sflag [#allocation4], 1
    %4411 = vsyncpa %s4410, 1
    %4412 = vsyncpa [#allocation7], 1
    %s4413 = scalar_lea.sflag [#allocation7], 1
    %4414 = vsyncpa %s4413, 1
    %4415 = vsyncpa [#allocation10], 1
    %4416 = vsyncpa [#allocation13], 1
    %4417 = vsyncpa [#allocation5], 1
    %s4418 = scalar_lea.sflag [#allocation5], 1
    %4419 = vsyncpa %s4418, 1

</llo_original>
